<compile_context>
chip_gen: v7x
topology: tpu7x:2x2x1
jax: 0.10.0
libtpu: 0.0.40
codegen_flags: <defaults>
</compile_context>

<pallas_src>
import jax
import jax.numpy as jnp
from jax import lax
from jax.experimental import pallas as pl
from jax.experimental.pallas import tpu as pltpu


# ----------------------------------------------------------------------------
# Fused kernel: interleaved LSTM recurrence (values in vregs) + linear head.
# ----------------------------------------------------------------------------
def _make_net_kernel(num_layers, T, B, H):
    def kernel(*refs):
        # ---- unpack refs ----------------------------------------------------
        x_ref = refs[0]                                   # (B, T, I) batch-first
        idx = 1
        layer_refs = []
        for _ in range(num_layers):
            layer_refs.append((refs[idx], refs[idx + 1], refs[idx + 2]))
            idx += 3
        wlin_ref, blin_ref = refs[idx], refs[idx + 1]     # (H, O), (1, O)
        out_ref, hn_ref, cn_ref = refs[idx + 2], refs[idx + 3], refs[idx + 4]
        y_ref = refs[idx + 5]                             # (B, T, H) scratch

        # ---- load every weight exactly once ---------------------------------
        wih = [r[...] for (r, _, _) in layer_refs]        # (I_l, 4H)
        whh = [r[...] for (_, r, _) in layer_refs]        # (H, 4H)
        bias = [r[...] for (_, _, r) in layer_refs]       # (1, 4H)  (b_ih+b_hh)
        xv = x_ref[...]                                   # (B, T, I) load once

        def lstm_cell(gates, c_prev):
            # Packed (B, 4H) gates, PyTorch order: i, f, g, o.
            i_g = jax.nn.sigmoid(gates[:, 0:H])
            f_g = jax.nn.sigmoid(gates[:, H:2 * H])
            g_g = jnp.tanh(gates[:, 2 * H:3 * H])
            o_g = jax.nn.sigmoid(gates[:, 3 * H:4 * H])
            c_new = f_g * c_prev + i_g * g_g
            h_new = o_g * jnp.tanh(c_new)
            return h_new, c_new

        h = [jnp.zeros((B, H), jnp.float32) for _ in range(num_layers)]
        c = [jnp.zeros((B, H), jnp.float32) for _ in range(num_layers)]

        # ---- interleaved, fully-unrolled recurrence --------------------------
        # One basic block; value-based deps let the scheduler overlap layer l
        # at step t with layer l-1 at step t+1 (no inter-layer barrier).
        for t in range(T):
            inp = xv[:, t, :]                             # (B, I_0)
            for l in range(num_layers):
                gates = (jnp.dot(inp, wih[l],
                                 preferred_element_type=jnp.float32)
                         + jnp.dot(h[l], whh[l],
                                   preferred_element_type=jnp.float32)
                         + bias[l])
                h[l], c[l] = lstm_cell(gates, c[l])
                inp = h[l]                                # feeds next layer
            y_ref[:, t, :] = h[num_layers - 1]            # VMEM scratch only
            # TODO(synk): inter-layer dropout omitted (inference-mode forward).

        # ---- final hidden/cell state ------------------------------------------
        for l in range(num_layers):
            hn_ref[l] = h[l]
            cn_ref[l] = c[l]

        # ---- linear head: ONE matmul over all (B*T) rows ----------------------
        y_flat = y_ref[...].reshape(B * T, H)             # tile-aligned merge
        lin = (jnp.dot(y_flat, wlin_ref[...],
                       preferred_element_type=jnp.float32)
               + blin_ref[...])                           # (B*T, O)
        for b in range(B):
            out_ref[b] = lin[b * T:(b + 1) * T]           # dense (T, O) store

    return kernel


def net_forward(x, params):
    """x: (B, T, input_size) batch-first float32.

    hidden=None (zero initial state) semantics, same as the PyTorch module's
    default call.  Returns (linear_out (B, T, O), (h_n, c_n)) with h_n/c_n of
    shape (L, B, H).
    """
    # TODO(synk): optional user-provided `hidden` initial state not plumbed in;
    # the module's default (None -> zeros) path is implemented.
    B, T, _ = x.shape
    lstm_params = params["lstm"]
    L = len(lstm_params)
    H = lstm_params[0][1].shape[0]
    w_lin_t, b_lin = params["linear"]
    O = w_lin_t.shape[1]

    flat_inputs = [x]
    for (w_ih_t, w_hh_t, b) in lstm_params:
        flat_inputs += [w_ih_t, w_hh_t, b]
    flat_inputs += [w_lin_t, b_lin]

    vmem_spec = pl.BlockSpec(memory_space=pltpu.MemorySpace.VMEM)

    out, h_n, c_n = pl.pallas_call(
        _make_net_kernel(L, T, B, H),
        out_shape=(jax.ShapeDtypeStruct((B, T, O), jnp.float32),
                   jax.ShapeDtypeStruct((L, B, H), jnp.float32),
                   jax.ShapeDtypeStruct((L, B, H), jnp.float32)),
        in_specs=[vmem_spec] * len(flat_inputs),
        out_specs=(vmem_spec, vmem_spec, vmem_spec),
        scratch_shapes=[
            pltpu.VMEM((B, T, H), jnp.float32),   # last layer's outputs
        ],
    )(*flat_inputs)
    return out, (h_n, c_n)


# ----------------------------------------------------------------------------
# Deterministic parameter init (PyTorch shapes, uniform(-k, k), k=1/sqrt(H)).
# Kernel consumes transposed weights and the summed bias (b_ih + b_hh).
# ----------------------------------------------------------------------------
def init_params(key, input_size, hidden_size, num_layers, output_size):
    k = 1.0 / jnp.sqrt(hidden_size)
    lstm_params = []
    for layer in range(num_layers):
        in_sz = input_size if layer == 0 else hidden_size
        key, k1, k2, k3, k4 = jax.random.split(key, 5)
        w_ih = jax.random.uniform(k1, (4 * hidden_size, in_sz), jnp.float32, -k, k)
        w_hh = jax.random.uniform(k2, (4 * hidden_size, hidden_size), jnp.float32, -k, k)
        b_ih = jax.random.uniform(k3, (4 * hidden_size,), jnp.float32, -k, k)
        b_hh = jax.random.uniform(k4, (4 * hidden_size,), jnp.float32, -k, k)
        lstm_params.append((w_ih.T, w_hh.T, (b_ih + b_hh)[None, :]))
    key, k5, k6 = jax.random.split(key, 3)
    w_lin = jax.random.uniform(k5, (output_size, hidden_size), jnp.float32, -k, k)
    b_lin = jax.random.uniform(k6, (output_size,), jnp.float32, -k, k)
    return {"lstm": lstm_params, "linear": (w_lin.T, b_lin[None, :])}


# ----------------------------------------------------------------------------
# Pure-JAX reference (correctness spot-check).
# ----------------------------------------------------------------------------
def ref_forward(x, params):
    layer_in = jnp.transpose(x, (1, 0, 2))
    h_list, c_list = [], []
    for (w_ih_t, w_hh_t, b) in params["lstm"]:
        T, B, _ = layer_in.shape
        H = w_hh_t.shape[0]

        def step(carry, x_t):
            h, c = carry
            gates = x_t @ w_ih_t + h @ w_hh_t + b
            i = jax.nn.sigmoid(gates[:, :H])
            f = jax.nn.sigmoid(gates[:, H:2 * H])
            g = jnp.tanh(gates[:, 2 * H:3 * H])
            o = jax.nn.sigmoid(gates[:, 3 * H:])
            c = f * c + i * g
            h = o * jnp.tanh(c)
            return (h, c), h

        (h, c), ys = lax.scan(step, (jnp.zeros((B, H)), jnp.zeros((B, H))), layer_in)
        h_list.append(h)
        c_list.append(c)
        layer_in = ys
    lstm_out = jnp.transpose(layer_in, (1, 0, 2))
    w_lin_t, b_lin = params["linear"]
    return lstm_out @ w_lin_t + b_lin, (jnp.stack(h_list), jnp.stack(c_list))


if __name__ == "__main__":
    # config: input_size=4, hidden_size=32, lstm_layers=2, output_size=1, dropout=0
    B, T, INPUT, HIDDEN, LAYERS, OUTPUT = 2, 8, 4, 32, 2, 1

    key = jax.random.PRNGKey(0)
    key, pkey, xkey = jax.random.split(key, 3)
    params = init_params(pkey, INPUT, HIDDEN, LAYERS, OUTPUT)
    x = jax.random.normal(xkey, (B, T, INPUT), jnp.float32)

    out, (h_n, c_n) = net_forward(x, params)
    out = jax.block_until_ready(out)
    h_n = jax.block_until_ready(h_n)
    c_n = jax.block_until_ready(c_n)

    ref_out, (ref_h, ref_c) = ref_forward(x, params)
    assert out.shape == (B, T, OUTPUT)
    assert h_n.shape == (LAYERS, B, HIDDEN) and c_n.shape == (LAYERS, B, HIDDEN)
    assert jnp.allclose(out, ref_out, atol=2e-5, rtol=1e-4)
    assert jnp.allclose(h_n, ref_h, atol=2e-5, rtol=1e-4)
    assert jnp.allclose(c_n, ref_c, atol=2e-5, rtol=1e-4)

    print("KERNEL_OK")
</pallas_src>

<mosaic_0001>
module attributes {stable_mosaic.version = 11 : i64} {
  func.func @kernel(%arg0: memref<2x8x4xf32, #tpu.memory_space<vmem>>, %arg1: memref<4x128xf32, #tpu.memory_space<vmem>>, %arg2: memref<32x128xf32, #tpu.memory_space<vmem>>, %arg3: memref<1x128xf32, #tpu.memory_space<vmem>>, %arg4: memref<32x128xf32, #tpu.memory_space<vmem>>, %arg5: memref<32x128xf32, #tpu.memory_space<vmem>>, %arg6: memref<1x128xf32, #tpu.memory_space<vmem>>, %arg7: memref<32x1xf32, #tpu.memory_space<vmem>>, %arg8: memref<1x1xf32, #tpu.memory_space<vmem>>, %arg9: memref<2x8x1xf32, #tpu.memory_space<vmem>>, %arg10: memref<2x2x32xf32, #tpu.memory_space<vmem>>, %arg11: memref<2x2x32xf32, #tpu.memory_space<vmem>>, %arg12: memref<2x8x32xf32, #tpu.memory_space<vmem>>) attributes {dimension_semantics = [], scalar_prefetch = 0 : i64, scratch_operands = 1 : i64, tpu.core_type = #tpu.core_type<tc>} {
    %c0 = arith.constant 0 : index
    %c0_0 = arith.constant 0 : index
    %0 = vector.load %arg1[%c0, %c0_0] : memref<4x128xf32, #tpu.memory_space<vmem>>, vector<4x128xf32>
    %c0_1 = arith.constant 0 : index
    %c0_2 = arith.constant 0 : index
    %1 = vector.load %arg4[%c0_1, %c0_2] : memref<32x128xf32, #tpu.memory_space<vmem>>, vector<32x128xf32>
    %c0_3 = arith.constant 0 : index
    %c0_4 = arith.constant 0 : index
    %2 = vector.load %arg2[%c0_3, %c0_4] : memref<32x128xf32, #tpu.memory_space<vmem>>, vector<32x128xf32>
    %c0_5 = arith.constant 0 : index
    %c0_6 = arith.constant 0 : index
    %3 = vector.load %arg5[%c0_5, %c0_6] : memref<32x128xf32, #tpu.memory_space<vmem>>, vector<32x128xf32>
    %c0_7 = arith.constant 0 : index
    %c0_8 = arith.constant 0 : index
    %4 = vector.load %arg3[%c0_7, %c0_8] : memref<1x128xf32, #tpu.memory_space<vmem>>, vector<1x128xf32>
    %c0_9 = arith.constant 0 : index
    %c0_10 = arith.constant 0 : index
    %5 = vector.load %arg6[%c0_9, %c0_10] : memref<1x128xf32, #tpu.memory_space<vmem>>, vector<1x128xf32>
    %c0_11 = arith.constant 0 : index
    %c0_12 = arith.constant 0 : index
    %c0_13 = arith.constant 0 : index
    %6 = vector.load %arg0[%c0_11, %c0_12, %c0_13] : memref<2x8x4xf32, #tpu.memory_space<vmem>>, vector<2x8x4xf32>
    %cst = arith.constant 0.000000e+00 : f32
    %7 = vector.broadcast %cst : f32 to vector<2x32xf32>
    %cst_14 = arith.constant 0.000000e+00 : f32
    %8 = vector.broadcast %cst_14 : f32 to vector<2x32xf32>
    %cst_15 = arith.constant 0.000000e+00 : f32
    %9 = vector.broadcast %cst_15 : f32 to vector<2x32xf32>
    %cst_16 = arith.constant 0.000000e+00 : f32
    %10 = vector.broadcast %cst_16 : f32 to vector<2x32xf32>
    %11 = vector.extract_strided_slice %6 {offsets = [0, 0, 0], sizes = [2, 1, 4], strides = [1, 1, 1]} : vector<2x8x4xf32> to vector<2x1x4xf32>
    %12 = vector.shape_cast %11 : vector<2x1x4xf32> to vector<2x4xf32>
    %cst_17 = arith.constant dense<0.000000e+00> : vector<2x128xf32>
    %13 = tpu.matmul %12, %0, %cst_17 {dimension_numbers = #tpu.dot_dimension_numbers<[1], [0], [0], [1], [0, 0, 1, 1], [], []>} : vector<2x4xf32>, vector<4x128xf32>, vector<2x128xf32> -> vector<2x128xf32>
    %cst_18 = arith.constant dense<0.000000e+00> : vector<2x128xf32>
    %14 = tpu.matmul %7, %2, %cst_18 {dimension_numbers = #tpu.dot_dimension_numbers<[1], [0], [0], [1], [0, 0, 1, 1], [], []>} : vector<2x32xf32>, vector<32x128xf32>, vector<2x128xf32> -> vector<2x128xf32>
    %15 = arith.addf %13, %14 : vector<2x128xf32>
    %16 = vector.broadcast %4 : vector<1x128xf32> to vector<2x128xf32>
    %17 = arith.addf %15, %16 : vector<2x128xf32>
    %18 = vector.extract_strided_slice %17 {offsets = [0, 0], sizes = [2, 32], strides = [1, 1]} : vector<2x128xf32> to vector<2x32xf32>
    %19 = arith.negf %18 : vector<2x32xf32>
    %20 = math.exp %19 : vector<2x32xf32>
    %cst_19 = arith.constant 1.000000e+00 : f32
    %21 = vector.broadcast %cst_19 : f32 to vector<2x32xf32>
    %22 = arith.addf %21, %20 : vector<2x32xf32>
    %23 = arith.divf %21, %22 : vector<2x32xf32>
    %24 = vector.extract_strided_slice %17 {offsets = [0, 32], sizes = [2, 32], strides = [1, 1]} : vector<2x128xf32> to vector<2x32xf32>
    %25 = arith.negf %24 : vector<2x32xf32>
    %26 = math.exp %25 : vector<2x32xf32>
    %cst_20 = arith.constant 1.000000e+00 : f32
    %27 = vector.broadcast %cst_20 : f32 to vector<2x32xf32>
    %28 = arith.addf %27, %26 : vector<2x32xf32>
    %29 = arith.divf %27, %28 : vector<2x32xf32>
    %30 = vector.extract_strided_slice %17 {offsets = [0, 64], sizes = [2, 32], strides = [1, 1]} : vector<2x128xf32> to vector<2x32xf32>
    %31 = math.tanh %30 : vector<2x32xf32>
    %32 = vector.extract_strided_slice %17 {offsets = [0, 96], sizes = [2, 32], strides = [1, 1]} : vector<2x128xf32> to vector<2x32xf32>
    %33 = arith.negf %32 : vector<2x32xf32>
    %34 = math.exp %33 : vector<2x32xf32>
    %cst_21 = arith.constant 1.000000e+00 : f32
    %35 = vector.broadcast %cst_21 : f32 to vector<2x32xf32>
    %36 = arith.addf %35, %34 : vector<2x32xf32>
    %37 = arith.divf %35, %36 : vector<2x32xf32>
    %38 = arith.mulf %29, %9 : vector<2x32xf32>
    %39 = arith.mulf %23, %31 : vector<2x32xf32>
    %40 = arith.addf %38, %39 : vector<2x32xf32>
    %41 = math.tanh %40 : vector<2x32xf32>
    %42 = arith.mulf %37, %41 : vector<2x32xf32>
    %cst_22 = arith.constant dense<0.000000e+00> : vector<2x128xf32>
    %43 = tpu.matmul %42, %1, %cst_22 {dimension_numbers = #tpu.dot_dimension_numbers<[1], [0], [0], [1], [0, 0, 1, 1], [], []>} : vector<2x32xf32>, vector<32x128xf32>, vector<2x128xf32> -> vector<2x128xf32>
    %cst_23 = arith.constant dense<0.000000e+00> : vector<2x128xf32>
    %44 = tpu.matmul %8, %3, %cst_23 {dimension_numbers = #tpu.dot_dimension_numbers<[1], [0], [0], [1], [0, 0, 1, 1], [], []>} : vector<2x32xf32>, vector<32x128xf32>, vector<2x128xf32> -> vector<2x128xf32>
    %45 = arith.addf %43, %44 : vector<2x128xf32>
    %46 = vector.broadcast %5 : vector<1x128xf32> to vector<2x128xf32>
    %47 = arith.addf %45, %46 : vector<2x128xf32>
    %48 = vector.extract_strided_slice %47 {offsets = [0, 0], sizes = [2, 32], strides = [1, 1]} : vector<2x128xf32> to vector<2x32xf32>
    %49 = arith.negf %48 : vector<2x32xf32>
    %50 = math.exp %49 : vector<2x32xf32>
    %cst_24 = arith.constant 1.000000e+00 : f32
    %51 = vector.broadcast %cst_24 : f32 to vector<2x32xf32>
    %52 = arith.addf %51, %50 : vector<2x32xf32>
    %53 = arith.divf %51, %52 : vector<2x32xf32>
    %54 = vector.extract_strided_slice %47 {offsets = [0, 32], sizes = [2, 32], strides = [1, 1]} : vector<2x128xf32> to vector<2x32xf32>
    %55 = arith.negf %54 : vector<2x32xf32>
    %56 = math.exp %55 : vector<2x32xf32>
    %cst_25 = arith.constant 1.000000e+00 : f32
    %57 = vector.broadcast %cst_25 : f32 to vector<2x32xf32>
    %58 = arith.addf %57, %56 : vector<2x32xf32>
    %59 = arith.divf %57, %58 : vector<2x32xf32>
    %60 = vector.extract_strided_slice %47 {offsets = [0, 64], sizes = [2, 32], strides = [1, 1]} : vector<2x128xf32> to vector<2x32xf32>
    %61 = math.tanh %60 : vector<2x32xf32>
    %62 = vector.extract_strided_slice %47 {offsets = [0, 96], sizes = [2, 32], strides = [1, 1]} : vector<2x128xf32> to vector<2x32xf32>
    %63 = arith.negf %62 : vector<2x32xf32>
    %64 = math.exp %63 : vector<2x32xf32>
    %cst_26 = arith.constant 1.000000e+00 : f32
    %65 = vector.broadcast %cst_26 : f32 to vector<2x32xf32>
    %66 = arith.addf %65, %64 : vector<2x32xf32>
    %67 = arith.divf %65, %66 : vector<2x32xf32>
    %68 = arith.mulf %59, %10 : vector<2x32xf32>
    %69 = arith.mulf %53, %61 : vector<2x32xf32>
    %70 = arith.addf %68, %69 : vector<2x32xf32>
    %71 = math.tanh %70 : vector<2x32xf32>
    %72 = arith.mulf %67, %71 : vector<2x32xf32>
    %c0_27 = arith.constant 0 : index
    %c0_28 = arith.constant 0 : index
    %c0_29 = arith.constant 0 : index
    %73 = vector.load %arg12[%c0_27, %c0_28, %c0_29] : memref<2x8x32xf32, #tpu.memory_space<vmem>>, vector<2x1x32xf32>
    %74 = vector.shape_cast %73 : vector<2x1x32xf32> to vector<2x32xf32>
    %75 = vector.shape_cast %72 : vector<2x32xf32> to vector<2x1x32xf32>
    tpu.vector_store %arg12[%c0_27, %c0_28, %c0_29], %75 {strides = array<i32>} : memref<2x8x32xf32, #tpu.memory_space<vmem>>, vector<2x1x32xf32>,
    %76 = vector.extract_strided_slice %6 {offsets = [0, 1, 0], sizes = [2, 1, 4], strides = [1, 1, 1]} : vector<2x8x4xf32> to vector<2x1x4xf32>
    %77 = vector.shape_cast %76 : vector<2x1x4xf32> to vector<2x4xf32>
    %cst_30 = arith.constant dense<0.000000e+00> : vector<2x128xf32>
    %78 = tpu.matmul %77, %0, %cst_30 {dimension_numbers = #tpu.dot_dimension_numbers<[1], [0], [0], [1], [0, 0, 1, 1], [], []>} : vector<2x4xf32>, vector<4x128xf32>, vector<2x128xf32> -> vector<2x128xf32>
    %cst_31 = arith.constant dense<0.000000e+00> : vector<2x128xf32>
    %79 = tpu.matmul %42, %2, %cst_31 {dimension_numbers = #tpu.dot_dimension_numbers<[1], [0], [0], [1], [0, 0, 1, 1], [], []>} : vector<2x32xf32>, vector<32x128xf32>, vector<2x128xf32> -> vector<2x128xf32>
    %80 = arith.addf %78, %79 : vector<2x128xf32>
    %81 = vector.broadcast %4 : vector<1x128xf32> to vector<2x128xf32>
    %82 = arith.addf %80, %81 : vector<2x128xf32>
    %83 = vector.extract_strided_slice %82 {offsets = [0, 0], sizes = [2, 32], strides = [1, 1]} : vector<2x128xf32> to vector<2x32xf32>
    %84 = arith.negf %83 : vector<2x32xf32>
    %85 = math.exp %84 : vector<2x32xf32>
    %cst_32 = arith.constant 1.000000e+00 : f32
    %86 = vector.broadcast %cst_32 : f32 to vector<2x32xf32>
    %87 = arith.addf %86, %85 : vector<2x32xf32>
    %88 = arith.divf %86, %87 : vector<2x32xf32>
    %89 = vector.extract_strided_slice %82 {offsets = [0, 32], sizes = [2, 32], strides = [1, 1]} : vector<2x128xf32> to vector<2x32xf32>
    %90 = arith.negf %89 : vector<2x32xf32>
    %91 = math.exp %90 : vector<2x32xf32>
    %cst_33 = arith.constant 1.000000e+00 : f32
    %92 = vector.broadcast %cst_33 : f32 to vector<2x32xf32>
    %93 = arith.addf %92, %91 : vector<2x32xf32>
    %94 = arith.divf %92, %93 : vector<2x32xf32>
    %95 = vector.extract_strided_slice %82 {offsets = [0, 64], sizes = [2, 32], strides = [1, 1]} : vector<2x128xf32> to vector<2x32xf32>
    %96 = math.tanh %95 : vector<2x32xf32>
    %97 = vector.extract_strided_slice %82 {offsets = [0, 96], sizes = [2, 32], strides = [1, 1]} : vector<2x128xf32> to vector<2x32xf32>
    %98 = arith.negf %97 : vector<2x32xf32>
    %99 = math.exp %98 : vector<2x32xf32>
    %cst_34 = arith.constant 1.000000e+00 : f32
    %100 = vector.broadcast %cst_34 : f32 to vector<2x32xf32>
    %101 = arith.addf %100, %99 : vector<2x32xf32>
    %102 = arith.divf %100, %101 : vector<2x32xf32>
    %103 = arith.mulf %94, %40 : vector<2x32xf32>
    %104 = arith.mulf %88, %96 : vector<2x32xf32>
    %105 = arith.addf %103, %104 : vector<2x32xf32>
    %106 = math.tanh %105 : vector<2x32xf32>
    %107 = arith.mulf %102, %106 : vector<2x32xf32>
    %cst_35 = arith.constant dense<0.000000e+00> : vector<2x128xf32>
    %108 = tpu.matmul %107, %1, %cst_35 {dimension_numbers = #tpu.dot_dimension_numbers<[1], [0], [0], [1], [0, 0, 1, 1], [], []>} : vector<2x32xf32>, vector<32x128xf32>, vector<2x128xf32> -> vector<2x128xf32>
    %cst_36 = arith.constant dense<0.000000e+00> : vector<2x128xf32>
    %109 = tpu.matmul %72, %3, %cst_36 {dimension_numbers = #tpu.dot_dimension_numbers<[1], [0], [0], [1], [0, 0, 1, 1], [], []>} : vector<2x32xf32>, vector<32x128xf32>, vector<2x128xf32> -> vector<2x128xf32>
    %110 = arith.addf %108, %109 : vector<2x128xf32>
    %111 = vector.broadcast %5 : vector<1x128xf32> to vector<2x128xf32>
    %112 = arith.addf %110, %111 : vector<2x128xf32>
    %113 = vector.extract_strided_slice %112 {offsets = [0, 0], sizes = [2, 32], strides = [1, 1]} : vector<2x128xf32> to vector<2x32xf32>
    %114 = arith.negf %113 : vector<2x32xf32>
    %115 = math.exp %114 : vector<2x32xf32>
    %cst_37 = arith.constant 1.000000e+00 : f32
    %116 = vector.broadcast %cst_37 : f32 to vector<2x32xf32>
    %117 = arith.addf %116, %115 : vector<2x32xf32>
    %118 = arith.divf %116, %117 : vector<2x32xf32>
    %119 = vector.extract_strided_slice %112 {offsets = [0, 32], sizes = [2, 32], strides = [1, 1]} : vector<2x128xf32> to vector<2x32xf32>
    %120 = arith.negf %119 : vector<2x32xf32>
    %121 = math.exp %120 : vector<2x32xf32>
    %cst_38 = arith.constant 1.000000e+00 : f32
    %122 = vector.broadcast %cst_38 : f32 to vector<2x32xf32>
    %123 = arith.addf %122, %121 : vector<2x32xf32>
    %124 = arith.divf %122, %123 : vector<2x32xf32>
    %125 = vector.extract_strided_slice %112 {offsets = [0, 64], sizes = [2, 32], strides = [1, 1]} : vector<2x128xf32> to vector<2x32xf32>
    %126 = math.tanh %125 : vector<2x32xf32>
    %127 = vector.extract_strided_slice %112 {offsets = [0, 96], sizes = [2, 32], strides = [1, 1]} : vector<2x128xf32> to vector<2x32xf32>
    %128 = arith.negf %127 : vector<2x32xf32>
    %129 = math.exp %128 : vector<2x32xf32>
    %cst_39 = arith.constant 1.000000e+00 : f32
    %130 = vector.broadcast %cst_39 : f32 to vector<2x32xf32>
    %131 = arith.addf %130, %129 : vector<2x32xf32>
    %132 = arith.divf %130, %131 : vector<2x32xf32>
    %133 = arith.mulf %124, %70 : vector<2x32xf32>
    %134 = arith.mulf %118, %126 : vector<2x32xf32>
    %135 = arith.addf %133, %134 : vector<2x32xf32>
    %136 = math.tanh %135 : vector<2x32xf32>
    %137 = arith.mulf %132, %136 : vector<2x32xf32>
    %c0_40 = arith.constant 0 : index
    %c1 = arith.constant 1 : index
    %c0_41 = arith.constant 0 : index
    %138 = vector.load %arg12[%c0_40, %c1, %c0_41] : memref<2x8x32xf32, #tpu.memory_space<vmem>>, vector<2x1x32xf32>
    %139 = vector.shape_cast %138 : vector<2x1x32xf32> to vector<2x32xf32>
    %140 = vector.shape_cast %137 : vector<2x32xf32> to vector<2x1x32xf32>
    tpu.vector_store %arg12[%c0_40, %c1, %c0_41], %140 {strides = array<i32>} : memref<2x8x32xf32, #tpu.memory_space<vmem>>, vector<2x1x32xf32>,
    %141 = vector.extract_strided_slice %6 {offsets = [0, 2, 0], sizes = [2, 1, 4], strides = [1, 1, 1]} : vector<2x8x4xf32> to vector<2x1x4xf32>
    %142 = vector.shape_cast %141 : vector<2x1x4xf32> to vector<2x4xf32>
    %cst_42 = arith.constant dense<0.000000e+00> : vector<2x128xf32>
    %143 = tpu.matmul %142, %0, %cst_42 {dimension_numbers = #tpu.dot_dimension_numbers<[1], [0], [0], [1], [0, 0, 1, 1], [], []>} : vector<2x4xf32>, vector<4x128xf32>, vector<2x128xf32> -> vector<2x128xf32>
    %cst_43 = arith.constant dense<0.000000e+00> : vector<2x128xf32>
    %144 = tpu.matmul %107, %2, %cst_43 {dimension_numbers = #tpu.dot_dimension_numbers<[1], [0], [0], [1], [0, 0, 1, 1], [], []>} : vector<2x32xf32>, vector<32x128xf32>, vector<2x128xf32> -> vector<2x128xf32>
    %145 = arith.addf %143, %144 : vector<2x128xf32>
    %146 = vector.broadcast %4 : vector<1x128xf32> to vector<2x128xf32>
    %147 = arith.addf %145, %146 : vector<2x128xf32>
    %148 = vector.extract_strided_slice %147 {offsets = [0, 0], sizes = [2, 32], strides = [1, 1]} : vector<2x128xf32> to vector<2x32xf32>
    %149 = arith.negf %148 : vector<2x32xf32>
    %150 = math.exp %149 : vector<2x32xf32>
    %cst_44 = arith.constant 1.000000e+00 : f32
    %151 = vector.broadcast %cst_44 : f32 to vector<2x32xf32>
    %152 = arith.addf %151, %150 : vector<2x32xf32>
    %153 = arith.divf %151, %152 : vector<2x32xf32>
    %154 = vector.extract_strided_slice %147 {offsets = [0, 32], sizes = [2, 32], strides = [1, 1]} : vector<2x128xf32> to vector<2x32xf32>
    %155 = arith.negf %154 : vector<2x32xf32>
    %156 = math.exp %155 : vector<2x32xf32>
    %cst_45 = arith.constant 1.000000e+00 : f32
    %157 = vector.broadcast %cst_45 : f32 to vector<2x32xf32>
    %158 = arith.addf %157, %156 : vector<2x32xf32>
    %159 = arith.divf %157, %158 : vector<2x32xf32>
    %160 = vector.extract_strided_slice %147 {offsets = [0, 64], sizes = [2, 32], strides = [1, 1]} : vector<2x128xf32> to vector<2x32xf32>
    %161 = math.tanh %160 : vector<2x32xf32>
    %162 = vector.extract_strided_slice %147 {offsets = [0, 96], sizes = [2, 32], strides = [1, 1]} : vector<2x128xf32> to vector<2x32xf32>
    %163 = arith.negf %162 : vector<2x32xf32>
    %164 = math.exp %163 : vector<2x32xf32>
    %cst_46 = arith.constant 1.000000e+00 : f32
    %165 = vector.broadcast %cst_46 : f32 to vector<2x32xf32>
    %166 = arith.addf %165, %164 : vector<2x32xf32>
    %167 = arith.divf %165, %166 : vector<2x32xf32>
    %168 = arith.mulf %159, %105 : vector<2x32xf32>
    %169 = arith.mulf %153, %161 : vector<2x32xf32>
    %170 = arith.addf %168, %169 : vector<2x32xf32>
    %171 = math.tanh %170 : vector<2x32xf32>
    %172 = arith.mulf %167, %171 : vector<2x32xf32>
    %cst_47 = arith.constant dense<0.000000e+00> : vector<2x128xf32>
    %173 = tpu.matmul %172, %1, %cst_47 {dimension_numbers = #tpu.dot_dimension_numbers<[1], [0], [0], [1], [0, 0, 1, 1], [], []>} : vector<2x32xf32>, vector<32x128xf32>, vector<2x128xf32> -> vector<2x128xf32>
    %cst_48 = arith.constant dense<0.000000e+00> : vector<2x128xf32>
    %174 = tpu.matmul %137, %3, %cst_48 {dimension_numbers = #tpu.dot_dimension_numbers<[1], [0], [0], [1], [0, 0, 1, 1], [], []>} : vector<2x32xf32>, vector<32x128xf32>, vector<2x128xf32> -> vector<2x128xf32>
    %175 = arith.addf %173, %174 : vector<2x128xf32>
    %176 = vector.broadcast %5 : vector<1x128xf32> to vector<2x128xf32>
    %177 = arith.addf %175, %176 : vector<2x128xf32>
    %178 = vector.extract_strided_slice %177 {offsets = [0, 0], sizes = [2, 32], strides = [1, 1]} : vector<2x128xf32> to vector<2x32xf32>
    %179 = arith.negf %178 : vector<2x32xf32>
    %180 = math.exp %179 : vector<2x32xf32>
    %cst_49 = arith.constant 1.000000e+00 : f32
    %181 = vector.broadcast %cst_49 : f32 to vector<2x32xf32>
    %182 = arith.addf %181, %180 : vector<2x32xf32>
    %183 = arith.divf %181, %182 : vector<2x32xf32>
    %184 = vector.extract_strided_slice %177 {offsets = [0, 32], sizes = [2, 32], strides = [1, 1]} : vector<2x128xf32> to vector<2x32xf32>
    %185 = arith.negf %184 : vector<2x32xf32>
    %186 = math.exp %185 : vector<2x32xf32>
    %cst_50 = arith.constant 1.000000e+00 : f32
    %187 = vector.broadcast %cst_50 : f32 to vector<2x32xf32>
    %188 = arith.addf %187, %186 : vector<2x32xf32>
    %189 = arith.divf %187, %188 : vector<2x32xf32>
    %190 = vector.extract_strided_slice %177 {offsets = [0, 64], sizes = [2, 32], strides = [1, 1]} : vector<2x128xf32> to vector<2x32xf32>
    %191 = math.tanh %190 : vector<2x32xf32>
    %192 = vector.extract_strided_slice %177 {offsets = [0, 96], sizes = [2, 32], strides = [1, 1]} : vector<2x128xf32> to vector<2x32xf32>
    %193 = arith.negf %192 : vector<2x32xf32>
    %194 = math.exp %193 : vector<2x32xf32>
    %cst_51 = arith.constant 1.000000e+00 : f32
    %195 = vector.broadcast %cst_51 : f32 to vector<2x32xf32>
    %196 = arith.addf %195, %194 : vector<2x32xf32>
    %197 = arith.divf %195, %196 : vector<2x32xf32>
    %198 = arith.mulf %189, %135 : vector<2x32xf32>
    %199 = arith.mulf %183, %191 : vector<2x32xf32>
    %200 = arith.addf %198, %199 : vector<2x32xf32>
    %201 = math.tanh %200 : vector<2x32xf32>
    %202 = arith.mulf %197, %201 : vector<2x32xf32>
    %c0_52 = arith.constant 0 : index
    %c2 = arith.constant 2 : index
    %c0_53 = arith.constant 0 : index
    %203 = vector.load %arg12[%c0_52, %c2, %c0_53] : memref<2x8x32xf32, #tpu.memory_space<vmem>>, vector<2x1x32xf32>
    %204 = vector.shape_cast %203 : vector<2x1x32xf32> to vector<2x32xf32>
    %205 = vector.shape_cast %202 : vector<2x32xf32> to vector<2x1x32xf32>
    tpu.vector_store %arg12[%c0_52, %c2, %c0_53], %205 {strides = array<i32>} : memref<2x8x32xf32, #tpu.memory_space<vmem>>, vector<2x1x32xf32>,
    %206 = vector.extract_strided_slice %6 {offsets = [0, 3, 0], sizes = [2, 1, 4], strides = [1, 1, 1]} : vector<2x8x4xf32> to vector<2x1x4xf32>
    %207 = vector.shape_cast %206 : vector<2x1x4xf32> to vector<2x4xf32>
    %cst_54 = arith.constant dense<0.000000e+00> : vector<2x128xf32>
    %208 = tpu.matmul %207, %0, %cst_54 {dimension_numbers = #tpu.dot_dimension_numbers<[1], [0], [0], [1], [0, 0, 1, 1], [], []>} : vector<2x4xf32>, vector<4x128xf32>, vector<2x128xf32> -> vector<2x128xf32>
    %cst_55 = arith.constant dense<0.000000e+00> : vector<2x128xf32>
    %209 = tpu.matmul %172, %2, %cst_55 {dimension_numbers = #tpu.dot_dimension_numbers<[1], [0], [0], [1], [0, 0, 1, 1], [], []>} : vector<2x32xf32>, vector<32x128xf32>, vector<2x128xf32> -> vector<2x128xf32>
    %210 = arith.addf %208, %209 : vector<2x128xf32>
    %211 = vector.broadcast %4 : vector<1x128xf32> to vector<2x128xf32>
    %212 = arith.addf %210, %211 : vector<2x128xf32>
    %213 = vector.extract_strided_slice %212 {offsets = [0, 0], sizes = [2, 32], strides = [1, 1]} : vector<2x128xf32> to vector<2x32xf32>
    %214 = arith.negf %213 : vector<2x32xf32>
    %215 = math.exp %214 : vector<2x32xf32>
    %cst_56 = arith.constant 1.000000e+00 : f32
    %216 = vector.broadcast %cst_56 : f32 to vector<2x32xf32>
    %217 = arith.addf %216, %215 : vector<2x32xf32>
    %218 = arith.divf %216, %217 : vector<2x32xf32>
    %219 = vector.extract_strided_slice %212 {offsets = [0, 32], sizes = [2, 32], strides = [1, 1]} : vector<2x128xf32> to vector<2x32xf32>
    %220 = arith.negf %219 : vector<2x32xf32>
    %221 = math.exp %220 : vector<2x32xf32>
    %cst_57 = arith.constant 1.000000e+00 : f32
    %222 = vector.broadcast %cst_57 : f32 to vector<2x32xf32>
    %223 = arith.addf %222, %221 : vector<2x32xf32>
    %224 = arith.divf %222, %223 : vector<2x32xf32>
    %225 = vector.extract_strided_slice %212 {offsets = [0, 64], sizes = [2, 32], strides = [1, 1]} : vector<2x128xf32> to vector<2x32xf32>
    %226 = math.tanh %225 : vector<2x32xf32>
    %227 = vector.extract_strided_slice %212 {offsets = [0, 96], sizes = [2, 32], strides = [1, 1]} : vector<2x128xf32> to vector<2x32xf32>
    %228 = arith.negf %227 : vector<2x32xf32>
    %229 = math.exp %228 : vector<2x32xf32>
    %cst_58 = arith.constant 1.000000e+00 : f32
    %230 = vector.broadcast %cst_58 : f32 to vector<2x32xf32>
    %231 = arith.addf %230, %229 : vector<2x32xf32>
    %232 = arith.divf %230, %231 : vector<2x32xf32>
    %233 = arith.mulf %224, %170 : vector<2x32xf32>
    %234 = arith.mulf %218, %226 : vector<2x32xf32>
    %235 = arith.addf %233, %234 : vector<2x32xf32>
    %236 = math.tanh %235 : vector<2x32xf32>
    %237 = arith.mulf %232, %236 : vector<2x32xf32>
    %cst_59 = arith.constant dense<0.000000e+00> : vector<2x128xf32>
    %238 = tpu.matmul %237, %1, %cst_59 {dimension_numbers = #tpu.dot_dimension_numbers<[1], [0], [0], [1], [0, 0, 1, 1], [], []>} : vector<2x32xf32>, vector<32x128xf32>, vector<2x128xf32> -> vector<2x128xf32>
    %cst_60 = arith.constant dense<0.000000e+00> : vector<2x128xf32>
    %239 = tpu.matmul %202, %3, %cst_60 {dimension_numbers = #tpu.dot_dimension_numbers<[1], [0], [0], [1], [0, 0, 1, 1], [], []>} : vector<2x32xf32>, vector<32x128xf32>, vector<2x128xf32> -> vector<2x128xf32>
    %240 = arith.addf %238, %239 : vector<2x128xf32>
    %241 = vector.broadcast %5 : vector<1x128xf32> to vector<2x128xf32>
    %242 = arith.addf %240, %241 : vector<2x128xf32>
    %243 = vector.extract_strided_slice %242 {offsets = [0, 0], sizes = [2, 32], strides = [1, 1]} : vector<2x128xf32> to vector<2x32xf32>
    %244 = arith.negf %243 : vector<2x32xf32>
    %245 = math.exp %244 : vector<2x32xf32>
    %cst_61 = arith.constant 1.000000e+00 : f32
    %246 = vector.broadcast %cst_61 : f32 to vector<2x32xf32>
    %247 = arith.addf %246, %245 : vector<2x32xf32>
    %248 = arith.divf %246, %247 : vector<2x32xf32>
    %249 = vector.extract_strided_slice %242 {offsets = [0, 32], sizes = [2, 32], strides = [1, 1]} : vector<2x128xf32> to vector<2x32xf32>
    %250 = arith.negf %249 : vector<2x32xf32>
    %251 = math.exp %250 : vector<2x32xf32>
    %cst_62 = arith.constant 1.000000e+00 : f32
    %252 = vector.broadcast %cst_62 : f32 to vector<2x32xf32>
    %253 = arith.addf %252, %251 : vector<2x32xf32>
    %254 = arith.divf %252, %253 : vector<2x32xf32>
    %255 = vector.extract_strided_slice %242 {offsets = [0, 64], sizes = [2, 32], strides = [1, 1]} : vector<2x128xf32> to vector<2x32xf32>
    %256 = math.tanh %255 : vector<2x32xf32>
    %257 = vector.extract_strided_slice %242 {offsets = [0, 96], sizes = [2, 32], strides = [1, 1]} : vector<2x128xf32> to vector<2x32xf32>
    %258 = arith.negf %257 : vector<2x32xf32>
    %259 = math.exp %258 : vector<2x32xf32>
    %cst_63 = arith.constant 1.000000e+00 : f32
    %260 = vector.broadcast %cst_63 : f32 to vector<2x32xf32>
    %261 = arith.addf %260, %259 : vector<2x32xf32>
    %262 = arith.divf %260, %261 : vector<2x32xf32>
    %263 = arith.mulf %254, %200 : vector<2x32xf32>
    %264 = arith.mulf %248, %256 : vector<2x32xf32>
    %265 = arith.addf %263, %264 : vector<2x32xf32>
    %266 = math.tanh %265 : vector<2x32xf32>
    %267 = arith.mulf %262, %266 : vector<2x32xf32>
    %c0_64 = arith.constant 0 : index
    %c3 = arith.constant 3 : index
    %c0_65 = arith.constant 0 : index
    %268 = vector.load %arg12[%c0_64, %c3, %c0_65] : memref<2x8x32xf32, #tpu.memory_space<vmem>>, vector<2x1x32xf32>
    %269 = vector.shape_cast %268 : vector<2x1x32xf32> to vector<2x32xf32>
    %270 = vector.shape_cast %267 : vector<2x32xf32> to vector<2x1x32xf32>
    tpu.vector_store %arg12[%c0_64, %c3, %c0_65], %270 {strides = array<i32>} : memref<2x8x32xf32, #tpu.memory_space<vmem>>, vector<2x1x32xf32>,
    %271 = vector.extract_strided_slice %6 {offsets = [0, 4, 0], sizes = [2, 1, 4], strides = [1, 1, 1]} : vector<2x8x4xf32> to vector<2x1x4xf32>
    %272 = vector.shape_cast %271 : vector<2x1x4xf32> to vector<2x4xf32>
    %cst_66 = arith.constant dense<0.000000e+00> : vector<2x128xf32>
    %273 = tpu.matmul %272, %0, %cst_66 {dimension_numbers = #tpu.dot_dimension_numbers<[1], [0], [0], [1], [0, 0, 1, 1], [], []>} : vector<2x4xf32>, vector<4x128xf32>, vector<2x128xf32> -> vector<2x128xf32>
    %cst_67 = arith.constant dense<0.000000e+00> : vector<2x128xf32>
    %274 = tpu.matmul %237, %2, %cst_67 {dimension_numbers = #tpu.dot_dimension_numbers<[1], [0], [0], [1], [0, 0, 1, 1], [], []>} : vector<2x32xf32>, vector<32x128xf32>, vector<2x128xf32> -> vector<2x128xf32>
    %275 = arith.addf %273, %274 : vector<2x128xf32>
    %276 = vector.broadcast %4 : vector<1x128xf32> to vector<2x128xf32>
    %277 = arith.addf %275, %276 : vector<2x128xf32>
    %278 = vector.extract_strided_slice %277 {offsets = [0, 0], sizes = [2, 32], strides = [1, 1]} : vector<2x128xf32> to vector<2x32xf32>
    %279 = arith.negf %278 : vector<2x32xf32>
    %280 = math.exp %279 : vector<2x32xf32>
    %cst_68 = arith.constant 1.000000e+00 : f32
    %281 = vector.broadcast %cst_68 : f32 to vector<2x32xf32>
    %282 = arith.addf %281, %280 : vector<2x32xf32>
    %283 = arith.divf %281, %282 : vector<2x32xf32>
    %284 = vector.extract_strided_slice %277 {offsets = [0, 32], sizes = [2, 32], strides = [1, 1]} : vector<2x128xf32> to vector<2x32xf32>
    %285 = arith.negf %284 : vector<2x32xf32>
    %286 = math.exp %285 : vector<2x32xf32>
    %cst_69 = arith.constant 1.000000e+00 : f32
    %287 = vector.broadcast %cst_69 : f32 to vector<2x32xf32>
    %288 = arith.addf %287, %286 : vector<2x32xf32>
    %289 = arith.divf %287, %288 : vector<2x32xf32>
    %290 = vector.extract_strided_slice %277 {offsets = [0, 64], sizes = [2, 32], strides = [1, 1]} : vector<2x128xf32> to vector<2x32xf32>
    %291 = math.tanh %290 : vector<2x32xf32>
    %292 = vector.extract_strided_slice %277 {offsets = [0, 96], sizes = [2, 32], strides = [1, 1]} : vector<2x128xf32> to vector<2x32xf32>
    %293 = arith.negf %292 : vector<2x32xf32>
    %294 = math.exp %293 : vector<2x32xf32>
    %cst_70 = arith.constant 1.000000e+00 : f32
    %295 = vector.broadcast %cst_70 : f32 to vector<2x32xf32>
    %296 = arith.addf %295, %294 : vector<2x32xf32>
    %297 = arith.divf %295, %296 : vector<2x32xf32>
    %298 = arith.mulf %289, %235 : vector<2x32xf32>
    %299 = arith.mulf %283, %291 : vector<2x32xf32>
    %300 = arith.addf %298, %299 : vector<2x32xf32>
    %301 = math.tanh %300 : vector<2x32xf32>
    %302 = arith.mulf %297, %301 : vector<2x32xf32>
    %cst_71 = arith.constant dense<0.000000e+00> : vector<2x128xf32>
    %303 = tpu.matmul %302, %1, %cst_71 {dimension_numbers = #tpu.dot_dimension_numbers<[1], [0], [0], [1], [0, 0, 1, 1], [], []>} : vector<2x32xf32>, vector<32x128xf32>, vector<2x128xf32> -> vector<2x128xf32>
    %cst_72 = arith.constant dense<0.000000e+00> : vector<2x128xf32>
    %304 = tpu.matmul %267, %3, %cst_72 {dimension_numbers = #tpu.dot_dimension_numbers<[1], [0], [0], [1], [0, 0, 1, 1], [], []>} : vector<2x32xf32>, vector<32x128xf32>, vector<2x128xf32> -> vector<2x128xf32>
    %305 = arith.addf %303, %304 : vector<2x128xf32>
    %306 = vector.broadcast %5 : vector<1x128xf32> to vector<2x128xf32>
    %307 = arith.addf %305, %306 : vector<2x128xf32>
    %308 = vector.extract_strided_slice %307 {offsets = [0, 0], sizes = [2, 32], strides = [1, 1]} : vector<2x128xf32> to vector<2x32xf32>
    %309 = arith.negf %308 : vector<2x32xf32>
    %310 = math.exp %309 : vector<2x32xf32>
    %cst_73 = arith.constant 1.000000e+00 : f32
    %311 = vector.broadcast %cst_73 : f32 to vector<2x32xf32>
    %312 = arith.addf %311, %310 : vector<2x32xf32>
    %313 = arith.divf %311, %312 : vector<2x32xf32>
    %314 = vector.extract_strided_slice %307 {offsets = [0, 32], sizes = [2, 32], strides = [1, 1]} : vector<2x128xf32> to vector<2x32xf32>
    %315 = arith.negf %314 : vector<2x32xf32>
    %316 = math.exp %315 : vector<2x32xf32>
    %cst_74 = arith.constant 1.000000e+00 : f32
    %317 = vector.broadcast %cst_74 : f32 to vector<2x32xf32>
    %318 = arith.addf %317, %316 : vector<2x32xf32>
    %319 = arith.divf %317, %318 : vector<2x32xf32>
    %320 = vector.extract_strided_slice %307 {offsets = [0, 64], sizes = [2, 32], strides = [1, 1]} : vector<2x128xf32> to vector<2x32xf32>
    %321 = math.tanh %320 : vector<2x32xf32>
    %322 = vector.extract_strided_slice %307 {offsets = [0, 96], sizes = [2, 32], strides = [1, 1]} : vector<2x128xf32> to vector<2x32xf32>
    %323 = arith.negf %322 : vector<2x32xf32>
    %324 = math.exp %323 : vector<2x32xf32>
    %cst_75 = arith.constant 1.000000e+00 : f32
    %325 = vector.broadcast %cst_75 : f32 to vector<2x32xf32>
    %326 = arith.addf %325, %324 : vector<2x32xf32>
    %327 = arith.divf %325, %326 : vector<2x32xf32>
    %328 = arith.mulf %319, %265 : vector<2x32xf32>
    %329 = arith.mulf %313, %321 : vector<2x32xf32>
    %330 = arith.addf %328, %329 : vector<2x32xf32>
    %331 = math.tanh %330 : vector<2x32xf32>
    %332 = arith.mulf %327, %331 : vector<2x32xf32>
    %c0_76 = arith.constant 0 : index
    %c4 = arith.constant 4 : index
    %c0_77 = arith.constant 0 : index
    %333 = vector.load %arg12[%c0_76, %c4, %c0_77] : memref<2x8x32xf32, #tpu.memory_space<vmem>>, vector<2x1x32xf32>
    %334 = vector.shape_cast %333 : vector<2x1x32xf32> to vector<2x32xf32>
    %335 = vector.shape_cast %332 : vector<2x32xf32> to vector<2x1x32xf32>
    tpu.vector_store %arg12[%c0_76, %c4, %c0_77], %335 {strides = array<i32>} : memref<2x8x32xf32, #tpu.memory_space<vmem>>, vector<2x1x32xf32>,
    %336 = vector.extract_strided_slice %6 {offsets = [0, 5, 0], sizes = [2, 1, 4], strides = [1, 1, 1]} : vector<2x8x4xf32> to vector<2x1x4xf32>
    %337 = vector.shape_cast %336 : vector<2x1x4xf32> to vector<2x4xf32>
    %cst_78 = arith.constant dense<0.000000e+00> : vector<2x128xf32>
    %338 = tpu.matmul %337, %0, %cst_78 {dimension_numbers = #tpu.dot_dimension_numbers<[1], [0], [0], [1], [0, 0, 1, 1], [], []>} : vector<2x4xf32>, vector<4x128xf32>, vector<2x128xf32> -> vector<2x128xf32>
    %cst_79 = arith.constant dense<0.000000e+00> : vector<2x128xf32>
    %339 = tpu.matmul %302, %2, %cst_79 {dimension_numbers = #tpu.dot_dimension_numbers<[1], [0], [0], [1], [0, 0, 1, 1], [], []>} : vector<2x32xf32>, vector<32x128xf32>, vector<2x128xf32> -> vector<2x128xf32>
    %340 = arith.addf %338, %339 : vector<2x128xf32>
    %341 = vector.broadcast %4 : vector<1x128xf32> to vector<2x128xf32>
    %342 = arith.addf %340, %341 : vector<2x128xf32>
    %343 = vector.extract_strided_slice %342 {offsets = [0, 0], sizes = [2, 32], strides = [1, 1]} : vector<2x128xf32> to vector<2x32xf32>
    %344 = arith.negf %343 : vector<2x32xf32>
    %345 = math.exp %344 : vector<2x32xf32>
    %cst_80 = arith.constant 1.000000e+00 : f32
    %346 = vector.broadcast %cst_80 : f32 to vector<2x32xf32>
    %347 = arith.addf %346, %345 : vector<2x32xf32>
    %348 = arith.divf %346, %347 : vector<2x32xf32>
    %349 = vector.extract_strided_slice %342 {offsets = [0, 32], sizes = [2, 32], strides = [1, 1]} : vector<2x128xf32> to vector<2x32xf32>
    %350 = arith.negf %349 : vector<2x32xf32>
    %351 = math.exp %350 : vector<2x32xf32>
    %cst_81 = arith.constant 1.000000e+00 : f32
    %352 = vector.broadcast %cst_81 : f32 to vector<2x32xf32>
    %353 = arith.addf %352, %351 : vector<2x32xf32>
    %354 = arith.divf %352, %353 : vector<2x32xf32>
    %355 = vector.extract_strided_slice %342 {offsets = [0, 64], sizes = [2, 32], strides = [1, 1]} : vector<2x128xf32> to vector<2x32xf32>
    %356 = math.tanh %355 : vector<2x32xf32>
    %357 = vector.extract_strided_slice %342 {offsets = [0, 96], sizes = [2, 32], strides = [1, 1]} : vector<2x128xf32> to vector<2x32xf32>
    %358 = arith.negf %357 : vector<2x32xf32>
    %359 = math.exp %358 : vector<2x32xf32>
    %cst_82 = arith.constant 1.000000e+00 : f32
    %360 = vector.broadcast %cst_82 : f32 to vector<2x32xf32>
    %361 = arith.addf %360, %359 : vector<2x32xf32>
    %362 = arith.divf %360, %361 : vector<2x32xf32>
    %363 = arith.mulf %354, %300 : vector<2x32xf32>
    %364 = arith.mulf %348, %356 : vector<2x32xf32>
    %365 = arith.addf %363, %364 : vector<2x32xf32>
    %366 = math.tanh %365 : vector<2x32xf32>
    %367 = arith.mulf %362, %366 : vector<2x32xf32>
    %cst_83 = arith.constant dense<0.000000e+00> : vector<2x128xf32>
    %368 = tpu.matmul %367, %1, %cst_83 {dimension_numbers = #tpu.dot_dimension_numbers<[1], [0], [0], [1], [0, 0, 1, 1], [], []>} : vector<2x32xf32>, vector<32x128xf32>, vector<2x128xf32> -> vector<2x128xf32>
    %cst_84 = arith.constant dense<0.000000e+00> : vector<2x128xf32>
    %369 = tpu.matmul %332, %3, %cst_84 {dimension_numbers = #tpu.dot_dimension_numbers<[1], [0], [0], [1], [0, 0, 1, 1], [], []>} : vector<2x32xf32>, vector<32x128xf32>, vector<2x128xf32> -> vector<2x128xf32>
    %370 = arith.addf %368, %369 : vector<2x128xf32>
    %371 = vector.broadcast %5 : vector<1x128xf32> to vector<2x128xf32>
    %372 = arith.addf %370, %371 : vector<2x128xf32>
    %373 = vector.extract_strided_slice %372 {offsets = [0, 0], sizes = [2, 32], strides = [1, 1]} : vector<2x128xf32> to vector<2x32xf32>
    %374 = arith.negf %373 : vector<2x32xf32>
    %375 = math.exp %374 : vector<2x32xf32>
    %cst_85 = arith.constant 1.000000e+00 : f32
    %376 = vector.broadcast %cst_85 : f32 to vector<2x32xf32>
    %377 = arith.addf %376, %375 : vector<2x32xf32>
    %378 = arith.divf %376, %377 : vector<2x32xf32>
    %379 = vector.extract_strided_slice %372 {offsets = [0, 32], sizes = [2, 32], strides = [1, 1]} : vector<2x128xf32> to vector<2x32xf32>
    %380 = arith.negf %379 : vector<2x32xf32>
    %381 = math.exp %380 : vector<2x32xf32>
    %cst_86 = arith.constant 1.000000e+00 : f32
    %382 = vector.broadcast %cst_86 : f32 to vector<2x32xf32>
    %383 = arith.addf %382, %381 : vector<2x32xf32>
    %384 = arith.divf %382, %383 : vector<2x32xf32>
    %385 = vector.extract_strided_slice %372 {offsets = [0, 64], sizes = [2, 32], strides = [1, 1]} : vector<2x128xf32> to vector<2x32xf32>
    %386 = math.tanh %385 : vector<2x32xf32>
    %387 = vector.extract_strided_slice %372 {offsets = [0, 96], sizes = [2, 32], strides = [1, 1]} : vector<2x128xf32> to vector<2x32xf32>
    %388 = arith.negf %387 : vector<2x32xf32>
    %389 = math.exp %388 : vector<2x32xf32>
    %cst_87 = arith.constant 1.000000e+00 : f32
    %390 = vector.broadcast %cst_87 : f32 to vector<2x32xf32>
    %391 = arith.addf %390, %389 : vector<2x32xf32>
    %392 = arith.divf %390, %391 : vector<2x32xf32>
    %393 = arith.mulf %384, %330 : vector<2x32xf32>
    %394 = arith.mulf %378, %386 : vector<2x32xf32>
    %395 = arith.addf %393, %394 : vector<2x32xf32>
    %396 = math.tanh %395 : vector<2x32xf32>
    %397 = arith.mulf %392, %396 : vector<2x32xf32>
    %c0_88 = arith.constant 0 : index
    %c5 = arith.constant 5 : index
    %c0_89 = arith.constant 0 : index
    %398 = vector.load %arg12[%c0_88, %c5, %c0_89] : memref<2x8x32xf32, #tpu.memory_space<vmem>>, vector<2x1x32xf32>
    %399 = vector.shape_cast %398 : vector<2x1x32xf32> to vector<2x32xf32>
    %400 = vector.shape_cast %397 : vector<2x32xf32> to vector<2x1x32xf32>
    tpu.vector_store %arg12[%c0_88, %c5, %c0_89], %400 {strides = array<i32>} : memref<2x8x32xf32, #tpu.memory_space<vmem>>, vector<2x1x32xf32>,
    %401 = vector.extract_strided_slice %6 {offsets = [0, 6, 0], sizes = [2, 1, 4], strides = [1, 1, 1]} : vector<2x8x4xf32> to vector<2x1x4xf32>
    %402 = vector.shape_cast %401 : vector<2x1x4xf32> to vector<2x4xf32>
    %cst_90 = arith.constant dense<0.000000e+00> : vector<2x128xf32>
    %403 = tpu.matmul %402, %0, %cst_90 {dimension_numbers = #tpu.dot_dimension_numbers<[1], [0], [0], [1], [0, 0, 1, 1], [], []>} : vector<2x4xf32>, vector<4x128xf32>, vector<2x128xf32> -> vector<2x128xf32>
    %cst_91 = arith.constant dense<0.000000e+00> : vector<2x128xf32>
    %404 = tpu.matmul %367, %2, %cst_91 {dimension_numbers = #tpu.dot_dimension_numbers<[1], [0], [0], [1], [0, 0, 1, 1], [], []>} : vector<2x32xf32>, vector<32x128xf32>, vector<2x128xf32> -> vector<2x128xf32>
    %405 = arith.addf %403, %404 : vector<2x128xf32>
    %406 = vector.broadcast %4 : vector<1x128xf32> to vector<2x128xf32>
    %407 = arith.addf %405, %406 : vector<2x128xf32>
    %408 = vector.extract_strided_slice %407 {offsets = [0, 0], sizes = [2, 32], strides = [1, 1]} : vector<2x128xf32> to vector<2x32xf32>
    %409 = arith.negf %408 : vector<2x32xf32>
    %410 = math.exp %409 : vector<2x32xf32>
    %cst_92 = arith.constant 1.000000e+00 : f32
    %411 = vector.broadcast %cst_92 : f32 to vector<2x32xf32>
    %412 = arith.addf %411, %410 : vector<2x32xf32>
    %413 = arith.divf %411, %412 : vector<2x32xf32>
    %414 = vector.extract_strided_slice %407 {offsets = [0, 32], sizes = [2, 32], strides = [1, 1]} : vector<2x128xf32> to vector<2x32xf32>
    %415 = arith.negf %414 : vector<2x32xf32>
    %416 = math.exp %415 : vector<2x32xf32>
    %cst_93 = arith.constant 1.000000e+00 : f32
    %417 = vector.broadcast %cst_93 : f32 to vector<2x32xf32>
    %418 = arith.addf %417, %416 : vector<2x32xf32>
    %419 = arith.divf %417, %418 : vector<2x32xf32>
    %420 = vector.extract_strided_slice %407 {offsets = [0, 64], sizes = [2, 32], strides = [1, 1]} : vector<2x128xf32> to vector<2x32xf32>
    %421 = math.tanh %420 : vector<2x32xf32>
    %422 = vector.extract_strided_slice %407 {offsets = [0, 96], sizes = [2, 32], strides = [1, 1]} : vector<2x128xf32> to vector<2x32xf32>
    %423 = arith.negf %422 : vector<2x32xf32>
    %424 = math.exp %423 : vector<2x32xf32>
    %cst_94 = arith.constant 1.000000e+00 : f32
    %425 = vector.broadcast %cst_94 : f32 to vector<2x32xf32>
    %426 = arith.addf %425, %424 : vector<2x32xf32>
    %427 = arith.divf %425, %426 : vector<2x32xf32>
    %428 = arith.mulf %419, %365 : vector<2x32xf32>
    %429 = arith.mulf %413, %421 : vector<2x32xf32>
    %430 = arith.addf %428, %429 : vector<2x32xf32>
    %431 = math.tanh %430 : vector<2x32xf32>
    %432 = arith.mulf %427, %431 : vector<2x32xf32>
    %cst_95 = arith.constant dense<0.000000e+00> : vector<2x128xf32>
    %433 = tpu.matmul %432, %1, %cst_95 {dimension_numbers = #tpu.dot_dimension_numbers<[1], [0], [0], [1], [0, 0, 1, 1], [], []>} : vector<2x32xf32>, vector<32x128xf32>, vector<2x128xf32> -> vector<2x128xf32>
    %cst_96 = arith.constant dense<0.000000e+00> : vector<2x128xf32>
    %434 = tpu.matmul %397, %3, %cst_96 {dimension_numbers = #tpu.dot_dimension_numbers<[1], [0], [0], [1], [0, 0, 1, 1], [], []>} : vector<2x32xf32>, vector<32x128xf32>, vector<2x128xf32> -> vector<2x128xf32>
    %435 = arith.addf %433, %434 : vector<2x128xf32>
    %436 = vector.broadcast %5 : vector<1x128xf32> to vector<2x128xf32>
    %437 = arith.addf %435, %436 : vector<2x128xf32>
    %438 = vector.extract_strided_slice %437 {offsets = [0, 0], sizes = [2, 32], strides = [1, 1]} : vector<2x128xf32> to vector<2x32xf32>
    %439 = arith.negf %438 : vector<2x32xf32>
    %440 = math.exp %439 : vector<2x32xf32>
    %cst_97 = arith.constant 1.000000e+00 : f32
    %441 = vector.broadcast %cst_97 : f32 to vector<2x32xf32>
    %442 = arith.addf %441, %440 : vector<2x32xf32>
    %443 = arith.divf %441, %442 : vector<2x32xf32>
    %444 = vector.extract_strided_slice %437 {offsets = [0, 32], sizes = [2, 32], strides = [1, 1]} : vector<2x128xf32> to vector<2x32xf32>
    %445 = arith.negf %444 : vector<2x32xf32>
    %446 = math.exp %445 : vector<2x32xf32>
    %cst_98 = arith.constant 1.000000e+00 : f32
    %447 = vector.broadcast %cst_98 : f32 to vector<2x32xf32>
    %448 = arith.addf %447, %446 : vector<2x32xf32>
    %449 = arith.divf %447, %448 : vector<2x32xf32>
    %450 = vector.extract_strided_slice %437 {offsets = [0, 64], sizes = [2, 32], strides = [1, 1]} : vector<2x128xf32> to vector<2x32xf32>
    %451 = math.tanh %450 : vector<2x32xf32>
    %452 = vector.extract_strided_slice %437 {offsets = [0, 96], sizes = [2, 32], strides = [1, 1]} : vector<2x128xf32> to vector<2x32xf32>
    %453 = arith.negf %452 : vector<2x32xf32>
    %454 = math.exp %453 : vector<2x32xf32>
    %cst_99 = arith.constant 1.000000e+00 : f32
    %455 = vector.broadcast %cst_99 : f32 to vector<2x32xf32>
    %456 = arith.addf %455, %454 : vector<2x32xf32>
    %457 = arith.divf %455, %456 : vector<2x32xf32>
    %458 = arith.mulf %449, %395 : vector<2x32xf32>
    %459 = arith.mulf %443, %451 : vector<2x32xf32>
    %460 = arith.addf %458, %459 : vector<2x32xf32>
    %461 = math.tanh %460 : vector<2x32xf32>
    %462 = arith.mulf %457, %461 : vector<2x32xf32>
    %c0_100 = arith.constant 0 : index
    %c6 = arith.constant 6 : index
    %c0_101 = arith.constant 0 : index
    %463 = vector.load %arg12[%c0_100, %c6, %c0_101] : memref<2x8x32xf32, #tpu.memory_space<vmem>>, vector<2x1x32xf32>
    %464 = vector.shape_cast %463 : vector<2x1x32xf32> to vector<2x32xf32>
    %465 = vector.shape_cast %462 : vector<2x32xf32> to vector<2x1x32xf32>
    tpu.vector_store %arg12[%c0_100, %c6, %c0_101], %465 {strides = array<i32>} : memref<2x8x32xf32, #tpu.memory_space<vmem>>, vector<2x1x32xf32>,
    %466 = vector.extract_strided_slice %6 {offsets = [0, 7, 0], sizes = [2, 1, 4], strides = [1, 1, 1]} : vector<2x8x4xf32> to vector<2x1x4xf32>
    %467 = vector.shape_cast %466 : vector<2x1x4xf32> to vector<2x4xf32>
    %cst_102 = arith.constant dense<0.000000e+00> : vector<2x128xf32>
    %468 = tpu.matmul %467, %0, %cst_102 {dimension_numbers = #tpu.dot_dimension_numbers<[1], [0], [0], [1], [0, 0, 1, 1], [], []>} : vector<2x4xf32>, vector<4x128xf32>, vector<2x128xf32> -> vector<2x128xf32>
    %cst_103 = arith.constant dense<0.000000e+00> : vector<2x128xf32>
    %469 = tpu.matmul %432, %2, %cst_103 {dimension_numbers = #tpu.dot_dimension_numbers<[1], [0], [0], [1], [0, 0, 1, 1], [], []>} : vector<2x32xf32>, vector<32x128xf32>, vector<2x128xf32> -> vector<2x128xf32>
    %470 = arith.addf %468, %469 : vector<2x128xf32>
    %471 = vector.broadcast %4 : vector<1x128xf32> to vector<2x128xf32>
    %472 = arith.addf %470, %471 : vector<2x128xf32>
    %473 = vector.extract_strided_slice %472 {offsets = [0, 0], sizes = [2, 32], strides = [1, 1]} : vector<2x128xf32> to vector<2x32xf32>
    %474 = arith.negf %473 : vector<2x32xf32>
    %475 = math.exp %474 : vector<2x32xf32>
    %cst_104 = arith.constant 1.000000e+00 : f32
    %476 = vector.broadcast %cst_104 : f32 to vector<2x32xf32>
    %477 = arith.addf %476, %475 : vector<2x32xf32>
    %478 = arith.divf %476, %477 : vector<2x32xf32>
    %479 = vector.extract_strided_slice %472 {offsets = [0, 32], sizes = [2, 32], strides = [1, 1]} : vector<2x128xf32> to vector<2x32xf32>
    %480 = arith.negf %479 : vector<2x32xf32>
    %481 = math.exp %480 : vector<2x32xf32>
    %cst_105 = arith.constant 1.000000e+00 : f32
    %482 = vector.broadcast %cst_105 : f32 to vector<2x32xf32>
    %483 = arith.addf %482, %481 : vector<2x32xf32>
    %484 = arith.divf %482, %483 : vector<2x32xf32>
    %485 = vector.extract_strided_slice %472 {offsets = [0, 64], sizes = [2, 32], strides = [1, 1]} : vector<2x128xf32> to vector<2x32xf32>
    %486 = math.tanh %485 : vector<2x32xf32>
    %487 = vector.extract_strided_slice %472 {offsets = [0, 96], sizes = [2, 32], strides = [1, 1]} : vector<2x128xf32> to vector<2x32xf32>
    %488 = arith.negf %487 : vector<2x32xf32>
    %489 = math.exp %488 : vector<2x32xf32>
    %cst_106 = arith.constant 1.000000e+00 : f32
    %490 = vector.broadcast %cst_106 : f32 to vector<2x32xf32>
    %491 = arith.addf %490, %489 : vector<2x32xf32>
    %492 = arith.divf %490, %491 : vector<2x32xf32>
    %493 = arith.mulf %484, %430 : vector<2x32xf32>
    %494 = arith.mulf %478, %486 : vector<2x32xf32>
    %495 = arith.addf %493, %494 : vector<2x32xf32>
    %496 = math.tanh %495 : vector<2x32xf32>
    %497 = arith.mulf %492, %496 : vector<2x32xf32>
    %cst_107 = arith.constant dense<0.000000e+00> : vector<2x128xf32>
    %498 = tpu.matmul %497, %1, %cst_107 {dimension_numbers = #tpu.dot_dimension_numbers<[1], [0], [0], [1], [0, 0, 1, 1], [], []>} : vector<2x32xf32>, vector<32x128xf32>, vector<2x128xf32> -> vector<2x128xf32>
    %cst_108 = arith.constant dense<0.000000e+00> : vector<2x128xf32>
    %499 = tpu.matmul %462, %3, %cst_108 {dimension_numbers = #tpu.dot_dimension_numbers<[1], [0], [0], [1], [0, 0, 1, 1], [], []>} : vector<2x32xf32>, vector<32x128xf32>, vector<2x128xf32> -> vector<2x128xf32>
    %500 = arith.addf %498, %499 : vector<2x128xf32>
    %501 = vector.broadcast %5 : vector<1x128xf32> to vector<2x128xf32>
    %502 = arith.addf %500, %501 : vector<2x128xf32>
    %503 = vector.extract_strided_slice %502 {offsets = [0, 0], sizes = [2, 32], strides = [1, 1]} : vector<2x128xf32> to vector<2x32xf32>
    %504 = arith.negf %503 : vector<2x32xf32>
    %505 = math.exp %504 : vector<2x32xf32>
    %cst_109 = arith.constant 1.000000e+00 : f32
    %506 = vector.broadcast %cst_109 : f32 to vector<2x32xf32>
    %507 = arith.addf %506, %505 : vector<2x32xf32>
    %508 = arith.divf %506, %507 : vector<2x32xf32>
    %509 = vector.extract_strided_slice %502 {offsets = [0, 32], sizes = [2, 32], strides = [1, 1]} : vector<2x128xf32> to vector<2x32xf32>
    %510 = arith.negf %509 : vector<2x32xf32>
    %511 = math.exp %510 : vector<2x32xf32>
    %cst_110 = arith.constant 1.000000e+00 : f32
    %512 = vector.broadcast %cst_110 : f32 to vector<2x32xf32>
    %513 = arith.addf %512, %511 : vector<2x32xf32>
    %514 = arith.divf %512, %513 : vector<2x32xf32>
    %515 = vector.extract_strided_slice %502 {offsets = [0, 64], sizes = [2, 32], strides = [1, 1]} : vector<2x128xf32> to vector<2x32xf32>
    %516 = math.tanh %515 : vector<2x32xf32>
    %517 = vector.extract_strided_slice %502 {offsets = [0, 96], sizes = [2, 32], strides = [1, 1]} : vector<2x128xf32> to vector<2x32xf32>
    %518 = arith.negf %517 : vector<2x32xf32>
    %519 = math.exp %518 : vector<2x32xf32>
    %cst_111 = arith.constant 1.000000e+00 : f32
    %520 = vector.broadcast %cst_111 : f32 to vector<2x32xf32>
    %521 = arith.addf %520, %519 : vector<2x32xf32>
    %522 = arith.divf %520, %521 : vector<2x32xf32>
    %523 = arith.mulf %514, %460 : vector<2x32xf32>
    %524 = arith.mulf %508, %516 : vector<2x32xf32>
    %525 = arith.addf %523, %524 : vector<2x32xf32>
    %526 = math.tanh %525 : vector<2x32xf32>
    %527 = arith.mulf %522, %526 : vector<2x32xf32>
    %c0_112 = arith.constant 0 : index
    %c7 = arith.constant 7 : index
    %c0_113 = arith.constant 0 : index
    %528 = vector.load %arg12[%c0_112, %c7, %c0_113] : memref<2x8x32xf32, #tpu.memory_space<vmem>>, vector<2x1x32xf32>
    %529 = vector.shape_cast %528 : vector<2x1x32xf32> to vector<2x32xf32>
    %530 = vector.shape_cast %527 : vector<2x32xf32> to vector<2x1x32xf32>
    tpu.vector_store %arg12[%c0_112, %c7, %c0_113], %530 {strides = array<i32>} : memref<2x8x32xf32, #tpu.memory_space<vmem>>, vector<2x1x32xf32>,
    %c0_114 = arith.constant 0 : index
    %c0_115 = arith.constant 0 : index
    %c0_116 = arith.constant 0 : index
    %531 = vector.load %arg10[%c0_114, %c0_115, %c0_116] : memref<2x2x32xf32, #tpu.memory_space<vmem>>, vector<1x2x32xf32>
    %532 = vector.shape_cast %531 : vector<1x2x32xf32> to vector<2x32xf32>
    %533 = vector.shape_cast %497 : vector<2x32xf32> to vector<1x2x32xf32>
    tpu.vector_store %arg10[%c0_114, %c0_115, %c0_116], %533 {strides = array<i32>} : memref<2x2x32xf32, #tpu.memory_space<vmem>>, vector<1x2x32xf32>,
    %c0_117 = arith.constant 0 : index
    %c0_118 = arith.constant 0 : index
    %c0_119 = arith.constant 0 : index
    %534 = vector.load %arg11[%c0_117, %c0_118, %c0_119] : memref<2x2x32xf32, #tpu.memory_space<vmem>>, vector<1x2x32xf32>
    %535 = vector.shape_cast %534 : vector<1x2x32xf32> to vector<2x32xf32>
    %536 = vector.shape_cast %495 : vector<2x32xf32> to vector<1x2x32xf32>
    tpu.vector_store %arg11[%c0_117, %c0_118, %c0_119], %536 {strides = array<i32>} : memref<2x2x32xf32, #tpu.memory_space<vmem>>, vector<1x2x32xf32>,
    %c1_120 = arith.constant 1 : index
    %c0_121 = arith.constant 0 : index
    %c0_122 = arith.constant 0 : index
    %537 = vector.load %arg10[%c1_120, %c0_121, %c0_122] : memref<2x2x32xf32, #tpu.memory_space<vmem>>, vector<1x2x32xf32>
    %538 = vector.shape_cast %537 : vector<1x2x32xf32> to vector<2x32xf32>
    %539 = vector.shape_cast %527 : vector<2x32xf32> to vector<1x2x32xf32>
    tpu.vector_store %arg10[%c1_120, %c0_121, %c0_122], %539 {strides = array<i32>} : memref<2x2x32xf32, #tpu.memory_space<vmem>>, vector<1x2x32xf32>,
    %c1_123 = arith.constant 1 : index
    %c0_124 = arith.constant 0 : index
    %c0_125 = arith.constant 0 : index
    %540 = vector.load %arg11[%c1_123, %c0_124, %c0_125] : memref<2x2x32xf32, #tpu.memory_space<vmem>>, vector<1x2x32xf32>
    %541 = vector.shape_cast %540 : vector<1x2x32xf32> to vector<2x32xf32>
    %542 = vector.shape_cast %525 : vector<2x32xf32> to vector<1x2x32xf32>
    tpu.vector_store %arg11[%c1_123, %c0_124, %c0_125], %542 {strides = array<i32>} : memref<2x2x32xf32, #tpu.memory_space<vmem>>, vector<1x2x32xf32>,
    %c0_126 = arith.constant 0 : index
    %c0_127 = arith.constant 0 : index
    %c0_128 = arith.constant 0 : index
    %543 = vector.load %arg12[%c0_126, %c0_127, %c0_128] : memref<2x8x32xf32, #tpu.memory_space<vmem>>, vector<2x8x32xf32>
    %544 = vector.shape_cast %543 : vector<2x8x32xf32> to vector<16x32xf32>
    %c0_129 = arith.constant 0 : index
    %c0_130 = arith.constant 0 : index
    %545 = vector.load %arg7[%c0_129, %c0_130] : memref<32x1xf32, #tpu.memory_space<vmem>>, vector<32x1xf32>
    %cst_131 = arith.constant dense<0.000000e+00> : vector<16x1xf32>
    %546 = tpu.matmul %544, %545, %cst_131 {dimension_numbers = #tpu.dot_dimension_numbers<[1], [0], [0], [1], [0, 0, 1, 1], [], []>} : vector<16x32xf32>, vector<32x1xf32>, vector<16x1xf32> -> vector<16x1xf32>
    %c0_132 = arith.constant 0 : index
    %c0_133 = arith.constant 0 : index
    %547 = vector.load %arg8[%c0_132, %c0_133] : memref<1x1xf32, #tpu.memory_space<vmem>>, vector<1x1xf32>
    %548 = vector.broadcast %547 : vector<1x1xf32> to vector<16x1xf32>
    %549 = arith.addf %546, %548 : vector<16x1xf32>
    %550 = vector.extract_strided_slice %549 {offsets = [0, 0], sizes = [8, 1], strides = [1, 1]} : vector<16x1xf32> to vector<8x1xf32>
    %c0_134 = arith.constant 0 : index
    %c0_135 = arith.constant 0 : index
    %c0_136 = arith.constant 0 : index
    %551 = vector.load %arg9[%c0_134, %c0_135, %c0_136] : memref<2x8x1xf32, #tpu.memory_space<vmem>>, vector<1x8x1xf32>
    %552 = vector.shape_cast %551 : vector<1x8x1xf32> to vector<8x1xf32>
    %553 = vector.shape_cast %550 : vector<8x1xf32> to vector<1x8x1xf32>
    tpu.vector_store %arg9[%c0_134, %c0_135, %c0_136], %553 {strides = array<i32>} : memref<2x8x1xf32, #tpu.memory_space<vmem>>, vector<1x8x1xf32>,
    %554 = vector.extract_strided_slice %549 {offsets = [8, 0], sizes = [8, 1], strides = [1, 1]} : vector<16x1xf32> to vector<8x1xf32>
    %c1_137 = arith.constant 1 : index
    %c0_138 = arith.constant 0 : index
    %c0_139 = arith.constant 0 : index
    %555 = vector.load %arg9[%c1_137, %c0_138, %c0_139] : memref<2x8x1xf32, #tpu.memory_space<vmem>>, vector<1x8x1xf32>
    %556 = vector.shape_cast %555 : vector<1x8x1xf32> to vector<8x1xf32>
    %557 = vector.shape_cast %554 : vector<8x1xf32> to vector<1x8x1xf32>
    tpu.vector_store %arg9[%c1_137, %c0_138, %c0_139], %557 {strides = array<i32>} : memref<2x8x1xf32, #tpu.memory_space<vmem>>, vector<1x8x1xf32>,
    return
  }
}

</mosaic_0001>

<llo_original>
// kernel: tpu_custom_call.1
$region0: #{tpu_custom_call.1}
  #allocation0 [shape = 'u32[]', space=smem, size = 0x4, offset = 0x4, fixed_abs, tag = 'smem constant byte address 0x4 - core index']
  #allocation1 [shape = 'u32[144,128]{1,0:T(1,128)}', space=vmem, size = 0x12000, scoped, tag = 'internal scratch']
  #allocation2 [shape = 'f32[2,8,32]{2,1,0:T(8,128)}', space=vmem, size = 0x2000, scoped, tag = 'scratch operand']
  #allocation3 [shape = 'f32[1,1]{1,0:T(1,128)S(1)}', space=vmem, size = 0x200, scoped, tag = 'scoped memory for tpu_custom_call.1']
  %s0 = inlined_call_operand.vmem [shape: f32[2,8,4], index: 0, kind: input, shape index: {}]
  %s1 = inlined_call_operand.hbm [shape: f32[4,128], index: 1, kind: input, shape index: {}]
  %s2 = inlined_call_operand.vmem [shape: f32[32,128], index: 2, kind: input, shape index: {}]
  %s3 = inlined_call_operand.vmem [shape: f32[1,128], index: 3, kind: input, shape index: {}]
  %s4 = inlined_call_operand.vmem [shape: f32[32,128], index: 4, kind: input, shape index: {}]
  %s5 = inlined_call_operand.hbm [shape: f32[32,128], index: 5, kind: input, shape index: {}]
  %s6 = inlined_call_operand.vmem [shape: f32[1,128], index: 6, kind: input, shape index: {}]
  %s7 = inlined_call_operand.vmem [shape: f32[32,1], index: 7, kind: input, shape index: {}]
  %s8 = inlined_call_operand.<no memory space> [shape: f32[1,1], index: 8, kind: input, shape index: {}]
  %s9 = inlined_call_operand.vmem [shape: f32[2,8,1], index: 9, kind: output, shape index: {0}]
  %s10 = inlined_call_operand.hbm [shape: f32[2,2,32], index: 10, kind: output, shape index: {1}]
  %s11 = inlined_call_operand.hbm [shape: f32[2,2,32], index: 11, kind: output, shape index: {2}]
  %12 = xla_tuple %s9, %s10, %s11
  %s13 = sld [smem:[#allocation0]]
  $region70: #{tpu_custom_call.1} parent=0
    _
  %s15 = ssub.s32 1, %s13
  %s16 = scalar_select 0, %s15, %s13
  %v17 = vstv %s8
  %18 = vst [vmem:[#allocation3] sm:$0x1] %v17
  $region1: #{tpu_custom_call.1} parent=0
    #allocation4 [shape = 'u8[2048]{0}', space=vmem, size = 0x800, scoped, tag = 'input window, operand 1, single buffered']
    #allocation5 [shape = 's32[1]{0}', space=sflag, size = 0x4, scoped, tag = 'scoped memory for tpu_custom_call.1']
    #allocation6 [shape = 's32[1]{0}', space=sflag, size = 0x4, scoped, tag = 'scoped memory for tpu_custom_call.1']
    #allocation7 [shape = 'u8[16384]{0}', space=vmem, size = 0x4000, scoped, tag = 'input window, operand 5, single buffered']
    #allocation8 [shape = 's32[1]{0}', space=sflag, size = 0x4, scoped, tag = 'scoped memory for tpu_custom_call.1']
    #allocation9 [shape = 'u8[2048]{0}', space=vmem, size = 0x800, scoped, tag = 'output window, operand 1, single buffered']
    #allocation10 [shape = 'u8[2048]{0}', space=vmem, size = 0x800, scoped, tag = 'output window, operand 2, single buffered']
    #allocation11 [shape = 's32[1]{0}', space=sflag, size = 0x4, scoped, tag = 'scoped memory for tpu_custom_call.1']
    %19 = vsyncpa [#allocation5], 0
    %20 = vsyncpa [#allocation8], 0
    %21 = vsyncpa [#allocation6], 0
    %22 = vsyncpa [#allocation11], 0
    // Predicated region
    $region2: #{tpu_custom_call.1} parent=1 // pred_check
      _
    $region3: #{tpu_custom_call.1} parent=1 // pred_check_branch
      %24 = sbr.rel (0) target = $region5
    $region4: #{tpu_custom_call.1} parent=1 // pred_region
      _
    $region5: #{tpu_custom_call.1} parent=1 // pred_fallthru
      _
    // Predicated region
    $region6: #{tpu_custom_call.1} parent=1 // pred_check
      _
    $region7: #{tpu_custom_call.1} parent=1 // pred_check_branch
      %26 = sbr.rel (0) target = $region9
    $region8: #{tpu_custom_call.1} parent=1 // pred_region
      %s28 = ssub.s32 64, 64
      %29 = vsyncadd [#allocation5], %s28
      %s31 = sshll.u32 [#allocation4], 4
      %s32 = int_to_ptr.vmem [resolvable:$true] %s31
      %34 = dma.hbm_to_vmem [thread:$0]  %s1, 64, %s32, [#allocation5]
    $region9: #{tpu_custom_call.1} parent=1 // pred_fallthru
      _
    // Predicated region
    $region10: #{tpu_custom_call.1} parent=1 // pred_check
      _
    $region11: #{tpu_custom_call.1} parent=1 // pred_check_branch
      %36 = sbr.rel (0) target = $region13
    $region12: #{tpu_custom_call.1} parent=1 // pred_region
      _
    $region13: #{tpu_custom_call.1} parent=1 // pred_fallthru
      _
    // Predicated region
    $region14: #{tpu_custom_call.1} parent=1 // pred_check
      _
    $region15: #{tpu_custom_call.1} parent=1 // pred_check_branch
      %38 = sbr.rel (0) target = $region17
    $region16: #{tpu_custom_call.1} parent=1 // pred_region
      _
    $region17: #{tpu_custom_call.1} parent=1 // pred_fallthru
      _
    // Predicated region
    $region18: #{tpu_custom_call.1} parent=1 // pred_check
      _
    $region19: #{tpu_custom_call.1} parent=1 // pred_check_branch
      %40 = sbr.rel (0) target = $region21
    $region20: #{tpu_custom_call.1} parent=1 // pred_region
      _
    $region21: #{tpu_custom_call.1} parent=1 // pred_fallthru
      _
    // Predicated region
    $region22: #{tpu_custom_call.1} parent=1 // pred_check
      _
    $region23: #{tpu_custom_call.1} parent=1 // pred_check_branch
      %42 = sbr.rel (0) target = $region25
    $region24: #{tpu_custom_call.1} parent=1 // pred_region
      %s44 = ssub.s32 512, 512
      %45 = vsyncadd [#allocation8], %s44
      %s46 = sshll.u32 [#allocation7], 4
      %s47 = int_to_ptr.vmem [resolvable:$true] %s46
      %52 = dma.hbm_to_vmem [thread:$0]  %s5, 512, %s47, [#allocation8], 128, 128, 8
    $region25: #{tpu_custom_call.1} parent=1 // pred_fallthru
      _
    // Predicated region
    $region26: #{tpu_custom_call.1} parent=1 // pred_check
      _
    $region27: #{tpu_custom_call.1} parent=1 // pred_check_branch
      %54 = sbr.rel (0) target = $region29
    $region28: #{tpu_custom_call.1} parent=1 // pred_region
      _
    $region29: #{tpu_custom_call.1} parent=1 // pred_fallthru
      _
    // Predicated region
    $region30: #{tpu_custom_call.1} parent=1 // pred_check
      _
    $region31: #{tpu_custom_call.1} parent=1 // pred_check_branch
      %56 = sbr.rel (0) target = $region33
    $region32: #{tpu_custom_call.1} parent=1 // pred_region
      _
    $region33: #{tpu_custom_call.1} parent=1 // pred_fallthru
      _
    // Predicated region
    $region34: #{tpu_custom_call.1} parent=1 // pred_check
      _
    $region35: #{tpu_custom_call.1} parent=1 // pred_check_branch
      %58 = sbr.rel (0) target = $region37
    $region36: #{tpu_custom_call.1} parent=1 // pred_region
      _
    $region37: #{tpu_custom_call.1} parent=1 // pred_fallthru
      _
    // Predicated region
    $region38: #{tpu_custom_call.1} parent=1 // pred_check
      _
    $region39: #{tpu_custom_call.1} parent=1 // pred_check_branch
      %60 = sbr.rel (0) target = $region41
    $region40: #{tpu_custom_call.1} parent=1 // pred_region
      %61 = dma.done [#allocation5], 64
    $region41: #{tpu_custom_call.1} parent=1 // pred_fallthru
      _
    // Predicated region
    $region42: #{tpu_custom_call.1} parent=1 // pred_check
      _
    $region43: #{tpu_custom_call.1} parent=1 // pred_check_branch
      %63 = sbr.rel (0) target = $region45
    $region44: #{tpu_custom_call.1} parent=1 // pred_region
      %64 = dma.done [#allocation8], 512
    $region45: #{tpu_custom_call.1} parent=1 // pred_fallthru
      _
    %v65 = vld [vmem:[#allocation4] sm:$0xf]
    %v66 = vld [vmem:[%s4] sm:$0xff]
    %v67 = vld [vmem:[%s4 + $0x8] sm:$0xff]
    %v68 = vld [vmem:[%s4 + $0x10] sm:$0xff]
    %v69 = vld [vmem:[%s4 + $0x18] sm:$0xff]
    %v70 = vld [vmem:[%s2] sm:$0xff]
    %v71 = vld [vmem:[%s2 + $0x8] sm:$0xff]
    %v72 = vld [vmem:[%s2 + $0x10] sm:$0xff]
    %v73 = vld [vmem:[%s2 + $0x18] sm:$0xff]
    %v74 = vld [vmem:[#allocation7] sm:$0xff]
    %v75 = vld [vmem:[#allocation7 + $0x8] sm:$0xff]
    %v76 = vld [vmem:[#allocation7 + $0x10] sm:$0xff]
    %v77 = vld [vmem:[#allocation7 + $0x18] sm:$0xff]
    %v78 = vld [vmem:[%s3] sm:$0x1]
    %v79 = vld [vmem:[%s6] sm:$0x1]
    %v80 = vld [vmem:[%s0] sm:$0xff]
    %v81 = vld [vmem:[%s0 + $0x8] sm:$0xff]
    %vm82 = vcmask 261120
    %v84 = vsel %vm82, 0.0, 0
    %86 = vmatprep.subr.mxu0 0.0
    %87 = vmatpush1.msra.mxu0 %v70
    %88 = vmatprep.subr.mxu0 0.0
    %89 = vmatpush1.msra.mxu0 %v71
    %90 = vmatprep.subr.mxu0 0.0
    %91 = vmatpush1.msra.mxu0 %v72
    %92 = vmatprep.subr.mxu0 0.0
    %93 = vmatpush1.msra.mxu0 %v73
    %94 = vmatprep.subr.mxu0 0.0
    %95 = vmatpush1.msra.mxu0 0.0
    %96 = vmatprep.subr.mxu0 0.0
    %97 = vmatpush1.msra.mxu0 0.0
    %98 = vmatprep.subr.mxu0 0.0
    %99 = vmatpush1.msra.mxu0 0.0
    %100 = vmatprep.subr.mxu0 0.0
    %101 = vmatpush1.msra.mxu0 0.0
    %102 = vmatprep.subr.mxu0 0.0
    %103 = vmatpush1.msra.mxu0 0.0
    %104 = vmatprep.subr.mxu0 0.0
    %105 = vmatpush1.msra.mxu0 0.0
    %106 = vmatprep.subr.mxu0 0.0
    %107 = vmatpush1.msra.mxu0 0.0
    %108 = vmatprep.subr.mxu0 0.0
    %109 = vmatpush1.msra.mxu0 0.0
    %110 = vmatprep.subr.mxu0 0.0
    %111 = vmatpush1.msra.mxu0 0.0
    %112 = vmatprep.subr.mxu0 0.0
    %113 = vmatpush1.msra.mxu0 0.0
    %114 = vmatprep.subr.mxu0 0.0
    %115 = vmatpush1.msra.mxu0 0.0
    %116 = vmatprep.subr.mxu0 0.0
    %117 = vmatpush1.msra.mxu0 0.0
    %118 = vmatprep.subr.mxu0 0.0
    %119 = vmatpush1.msra.mxu0 0.0
    %120 = vmatprep.subr.mxu0 0.0
    %121 = vmatpush1.msra.mxu0 0.0
    %122 = vmatprep.subr.mxu0 0.0
    %123 = vmatpush1.msra.mxu0 0.0
    %124 = vmatprep.subr.mxu0 0.0
    %125 = vmatpush1.msra.mxu0 0.0
    %126 = vmatprep.subr.mxu0 0.0
    %127 = vmatpush1.msra.mxu0 0.0
    %128 = vmatprep.subr.mxu0 0.0
    %129 = vmatpush1.msra.mxu0 0.0
    %130 = vmatprep.subr.mxu0 0.0
    %131 = vmatpush1.msra.mxu0 0.0
    %132 = vmatprep.subr.mxu0 0.0
    %133 = vmatpush1.msra.mxu0 0.0
    %134 = vmatprep.subr.mxu0 0.0
    %135 = vmatpush1.msra.mxu0 0.0
    %136 = vmatprep.subr.mxu0 0.0
    %137 = vmatpush1.msra.mxu0 0.0
    %138 = vmatprep.subr.mxu0 0.0
    %139 = vmatpush1.msra.mxu0 0.0
    %140 = vmatprep.subr.mxu0 0.0
    %141 = vmatpush1.msra.mxu0 0.0
    %142 = vmatprep.subr.mxu0 0.0
    %143 = vmatpush1.msra.mxu0 0.0
    %144 = vmatprep.subr.mxu0 0.0
    %145 = vmatpush1.msra.mxu0 0.0
    %146 = vmatprep.subr.mxu0 0.0
    %147 = vmatpush1.msra.mxu0 0.0
    %148 = vmatprep.subr.mxu0 0.0
    %149 = vmatpush1.msra.mxu0 0.0
    %150 = vmatprep.mubr.f32.mxu0 0.0
    %151 = vmatmul.mubr.f32.gmra.mrb[0].mxu0 %v84
    %v152 = vpop.f32.mrb[0].mxu0
    %v153 = vadd.f32 0.0, %v152
    %v154 = vpop.f32.mrb[0].mxu0
    %155 = vdwg.mxu0
    %v158 = vrot.slane %v81, 7
    %vm159 = vcmask 1041409
    %v160 = vsel %vm159, %v158, %v80
    %vm161 = vcmask 31744
    %v162 = vsel %vm161, %v160, 0
    %vm164 = vcmask 1043456
    %v166 = vsel %vm164, %v65, 0
    %168 = vmatprep.subr.mxu0 0.0
    %169 = vmatpush1.msra.mxu0 %v166
    %170 = vmatprep.subr.mxu0 0.0
    %171 = vmatpush1.msra.mxu0 0.0
    %172 = vmatprep.subr.mxu0 0.0
    %173 = vmatpush1.msra.mxu0 0.0
    %174 = vmatprep.subr.mxu0 0.0
    %175 = vmatpush1.msra.mxu0 0.0
    %176 = vmatprep.subr.mxu0 0.0
    %177 = vmatpush1.msra.mxu0 0.0
    %178 = vmatprep.subr.mxu0 0.0
    %179 = vmatpush1.msra.mxu0 0.0
    %180 = vmatprep.subr.mxu0 0.0
    %181 = vmatpush1.msra.mxu0 0.0
    %182 = vmatprep.subr.mxu0 0.0
    %183 = vmatpush1.msra.mxu0 0.0
    %184 = vmatprep.subr.mxu0 0.0
    %185 = vmatpush1.msra.mxu0 0.0
    %186 = vmatprep.subr.mxu0 0.0
    %187 = vmatpush1.msra.mxu0 0.0
    %188 = vmatprep.subr.mxu0 0.0
    %189 = vmatpush1.msra.mxu0 0.0
    %190 = vmatprep.subr.mxu0 0.0
    %191 = vmatpush1.msra.mxu0 0.0
    %192 = vmatprep.subr.mxu0 0.0
    %193 = vmatpush1.msra.mxu0 0.0
    %194 = vmatprep.subr.mxu0 0.0
    %195 = vmatpush1.msra.mxu0 0.0
    %196 = vmatprep.subr.mxu0 0.0
    %197 = vmatpush1.msra.mxu0 0.0
    %198 = vmatprep.subr.mxu0 0.0
    %199 = vmatpush1.msra.mxu0 0.0
    %200 = vmatprep.subr.mxu0 0.0
    %201 = vmatpush1.msra.mxu0 0.0
    %202 = vmatprep.subr.mxu0 0.0
    %203 = vmatpush1.msra.mxu0 0.0
    %204 = vmatprep.subr.mxu0 0.0
    %205 = vmatpush1.msra.mxu0 0.0
    %206 = vmatprep.subr.mxu0 0.0
    %207 = vmatpush1.msra.mxu0 0.0
    %208 = vmatprep.subr.mxu0 0.0
    %209 = vmatpush1.msra.mxu0 0.0
    %210 = vmatprep.subr.mxu0 0.0
    %211 = vmatpush1.msra.mxu0 0.0
    %212 = vmatprep.subr.mxu0 0.0
    %213 = vmatpush1.msra.mxu0 0.0
    %214 = vmatprep.subr.mxu0 0.0
    %215 = vmatpush1.msra.mxu0 0.0
    %216 = vmatprep.subr.mxu0 0.0
    %217 = vmatpush1.msra.mxu0 0.0
    %218 = vmatprep.subr.mxu0 0.0
    %219 = vmatpush1.msra.mxu0 0.0
    %220 = vmatprep.subr.mxu0 0.0
    %221 = vmatpush1.msra.mxu0 0.0
    %222 = vmatprep.subr.mxu0 0.0
    %223 = vmatpush1.msra.mxu0 0.0
    %224 = vmatprep.subr.mxu0 0.0
    %225 = vmatpush1.msra.mxu0 0.0
    %226 = vmatprep.subr.mxu0 0.0
    %227 = vmatpush1.msra.mxu0 0.0
    %228 = vmatprep.subr.mxu0 0.0
    %229 = vmatpush1.msra.mxu0 0.0
    %230 = vmatprep.subr.mxu0 0.0
    %231 = vmatpush1.msra.mxu0 0.0
    %232 = vmatprep.mubr.f32.mxu0 0.0
    %233 = vmatmul.mubr.f32.gmra.mrb[0].mxu0 %v162
    %v234 = vpop.f32.mrb[0].mxu0
    %v235 = vadd.f32 %v153, %v234
    %v236 = vpop.f32.mrb[0].mxu0
    %237 = vdwg.mxu0
    %v239 = vlaneseq
    %v240 = vshrl.u32 %v239, 7
    %v241 = vsub.s32 0, %v240
    %v242 = vrot.slane %v78, %v241
    %v244 = vadd.f32 %v235, %v242
    %v245 = vxor.u32 %v244, 2147483648
    %v246 = vmul.f32 %v245, 1.442695
    %v247 = vpow.pop %v246
    %v248 = vadd.f32 %v247, 1.0
    %v249 = vrcp.pop %v248
    %v250 = vmul.f32 1.0, %v249
    %v251 = vtanh.pop %v244
    %v252 = vmul.f32 %v250, 0.0
    %254 = vrot.lane.b32.xlu0 %v251, 64
    %v255 = vpop.permute.xlu0 %254
    %v257 = vmul.f32 %v250, %v255
    %259 = vrot.lane.b32.xlu0 %v257, 32
    %v260 = vpop.permute.xlu0 %259
    %v262 = vadd.f32 %v252, %v260
    %v263 = vtanh.pop %v262
    %265 = vrot.lane.b32.xlu0 %v263, 64
    %v266 = vpop.permute.xlu0 %265
    %v268 = vmul.f32 %v250, %v266
    %269 = vmatprep.subr.mxu0 0.0
    %270 = vmatpush1.msra.mxu0 %v74
    %271 = vmatprep.subr.mxu0 0.0
    %272 = vmatpush1.msra.mxu0 %v75
    %273 = vmatprep.subr.mxu0 0.0
    %274 = vmatpush1.msra.mxu0 %v76
    %275 = vmatprep.subr.mxu0 0.0
    %276 = vmatpush1.msra.mxu0 %v77
    %277 = vmatprep.subr.mxu0 0.0
    %278 = vmatpush1.msra.mxu0 0.0
    %279 = vmatprep.subr.mxu0 0.0
    %280 = vmatpush1.msra.mxu0 0.0
    %281 = vmatprep.subr.mxu0 0.0
    %282 = vmatpush1.msra.mxu0 0.0
    %283 = vmatprep.subr.mxu0 0.0
    %284 = vmatpush1.msra.mxu0 0.0
    %285 = vmatprep.subr.mxu0 0.0
    %286 = vmatpush1.msra.mxu0 0.0
    %287 = vmatprep.subr.mxu0 0.0
    %288 = vmatpush1.msra.mxu0 0.0
    %289 = vmatprep.subr.mxu0 0.0
    %290 = vmatpush1.msra.mxu0 0.0
    %291 = vmatprep.subr.mxu0 0.0
    %292 = vmatpush1.msra.mxu0 0.0
    %293 = vmatprep.subr.mxu0 0.0
    %294 = vmatpush1.msra.mxu0 0.0
    %295 = vmatprep.subr.mxu0 0.0
    %296 = vmatpush1.msra.mxu0 0.0
    %297 = vmatprep.subr.mxu0 0.0
    %298 = vmatpush1.msra.mxu0 0.0
    %299 = vmatprep.subr.mxu0 0.0
    %300 = vmatpush1.msra.mxu0 0.0
    %301 = vmatprep.subr.mxu0 0.0
    %302 = vmatpush1.msra.mxu0 0.0
    %303 = vmatprep.subr.mxu0 0.0
    %304 = vmatpush1.msra.mxu0 0.0
    %305 = vmatprep.subr.mxu0 0.0
    %306 = vmatpush1.msra.mxu0 0.0
    %307 = vmatprep.subr.mxu0 0.0
    %308 = vmatpush1.msra.mxu0 0.0
    %309 = vmatprep.subr.mxu0 0.0
    %310 = vmatpush1.msra.mxu0 0.0
    %311 = vmatprep.subr.mxu0 0.0
    %312 = vmatpush1.msra.mxu0 0.0
    %313 = vmatprep.subr.mxu0 0.0
    %314 = vmatpush1.msra.mxu0 0.0
    %315 = vmatprep.subr.mxu0 0.0
    %316 = vmatpush1.msra.mxu0 0.0
    %317 = vmatprep.subr.mxu0 0.0
    %318 = vmatpush1.msra.mxu0 0.0
    %319 = vmatprep.subr.mxu0 0.0
    %320 = vmatpush1.msra.mxu0 0.0
    %321 = vmatprep.subr.mxu0 0.0
    %322 = vmatpush1.msra.mxu0 0.0
    %323 = vmatprep.subr.mxu0 0.0
    %324 = vmatpush1.msra.mxu0 0.0
    %325 = vmatprep.subr.mxu0 0.0
    %326 = vmatpush1.msra.mxu0 0.0
    %327 = vmatprep.subr.mxu0 0.0
    %328 = vmatpush1.msra.mxu0 0.0
    %329 = vmatprep.subr.mxu0 0.0
    %330 = vmatpush1.msra.mxu0 0.0
    %331 = vmatprep.subr.mxu0 0.0
    %332 = vmatpush1.msra.mxu0 0.0
    %333 = vmatprep.mubr.f32.mxu0 0.0
    %334 = vmatmul.mubr.f32.gmra.mrb[0].mxu0 %v84
    %v335 = vpop.f32.mrb[0].mxu0
    %v336 = vadd.f32 0.0, %v335
    %v337 = vpop.f32.mrb[0].mxu0
    %338 = vdwg.mxu0
    %340 = vrot.lane.b32.xlu0 %v268, 32
    %v341 = vpop.permute.xlu0 %340
    %v342 = vsel %vm82, %v341, 0
    %344 = vmatprep.subr.mxu0 0.0
    %345 = vmatpush1.msra.mxu0 %v66
    %346 = vmatprep.subr.mxu0 0.0
    %347 = vmatpush1.msra.mxu0 %v67
    %348 = vmatprep.subr.mxu0 0.0
    %349 = vmatpush1.msra.mxu0 %v68
    %350 = vmatprep.subr.mxu0 0.0
    %351 = vmatpush1.msra.mxu0 %v69
    %352 = vmatprep.subr.mxu0 0.0
    %353 = vmatpush1.msra.mxu0 0.0
    %354 = vmatprep.subr.mxu0 0.0
    %355 = vmatpush1.msra.mxu0 0.0
    %356 = vmatprep.subr.mxu0 0.0
    %357 = vmatpush1.msra.mxu0 0.0
    %358 = vmatprep.subr.mxu0 0.0
    %359 = vmatpush1.msra.mxu0 0.0
    %360 = vmatprep.subr.mxu0 0.0
    %361 = vmatpush1.msra.mxu0 0.0
    %362 = vmatprep.subr.mxu0 0.0
    %363 = vmatpush1.msra.mxu0 0.0
    %364 = vmatprep.subr.mxu0 0.0
    %365 = vmatpush1.msra.mxu0 0.0
    %366 = vmatprep.subr.mxu0 0.0
    %367 = vmatpush1.msra.mxu0 0.0
    %368 = vmatprep.subr.mxu0 0.0
    %369 = vmatpush1.msra.mxu0 0.0
    %370 = vmatprep.subr.mxu0 0.0
    %371 = vmatpush1.msra.mxu0 0.0
    %372 = vmatprep.subr.mxu0 0.0
    %373 = vmatpush1.msra.mxu0 0.0
    %374 = vmatprep.subr.mxu0 0.0
    %375 = vmatpush1.msra.mxu0 0.0
    %376 = vmatprep.subr.mxu0 0.0
    %377 = vmatpush1.msra.mxu0 0.0
    %378 = vmatprep.subr.mxu0 0.0
    %379 = vmatpush1.msra.mxu0 0.0
    %380 = vmatprep.subr.mxu0 0.0
    %381 = vmatpush1.msra.mxu0 0.0
    %382 = vmatprep.subr.mxu0 0.0
    %383 = vmatpush1.msra.mxu0 0.0
    %384 = vmatprep.subr.mxu0 0.0
    %385 = vmatpush1.msra.mxu0 0.0
    %386 = vmatprep.subr.mxu0 0.0
    %387 = vmatpush1.msra.mxu0 0.0
    %388 = vmatprep.subr.mxu0 0.0
    %389 = vmatpush1.msra.mxu0 0.0
    %390 = vmatprep.subr.mxu0 0.0
    %391 = vmatpush1.msra.mxu0 0.0
    %392 = vmatprep.subr.mxu0 0.0
    %393 = vmatpush1.msra.mxu0 0.0
    %394 = vmatprep.subr.mxu0 0.0
    %395 = vmatpush1.msra.mxu0 0.0
    %396 = vmatprep.subr.mxu0 0.0
    %397 = vmatpush1.msra.mxu0 0.0
    %398 = vmatprep.subr.mxu0 0.0
    %399 = vmatpush1.msra.mxu0 0.0
    %400 = vmatprep.subr.mxu0 0.0
    %401 = vmatpush1.msra.mxu0 0.0
    %402 = vmatprep.subr.mxu0 0.0
    %403 = vmatpush1.msra.mxu0 0.0
    %404 = vmatprep.subr.mxu0 0.0
    %405 = vmatpush1.msra.mxu0 0.0
    %406 = vmatprep.subr.mxu0 0.0
    %407 = vmatpush1.msra.mxu0 0.0
    %408 = vmatprep.mubr.f32.mxu0 0.0
    %409 = vmatmul.mubr.f32.gmra.mrb[0].mxu0 %v342
    %v410 = vpop.f32.mrb[0].mxu0
    %v411 = vadd.f32 %v336, %v410
    %v412 = vpop.f32.mrb[0].mxu0
    %413 = vdwg.mxu0
    %v415 = vlaneseq
    %v416 = vshrl.u32 %v415, 7
    %v417 = vsub.s32 0, %v416
    %v418 = vrot.slane %v79, %v417
    %v420 = vadd.f32 %v411, %v418
    %v421 = vxor.u32 %v420, 2147483648
    %v422 = vmul.f32 %v421, 1.442695
    %v423 = vpow.pop %v422
    %v424 = vadd.f32 %v423, 1.0
    %v425 = vrcp.pop %v424
    %v426 = vmul.f32 1.0, %v425
    %v427 = vtanh.pop %v420
    %v428 = vmul.f32 %v426, 0.0
    %430 = vrot.lane.b32.xlu0 %v427, 64
    %v431 = vpop.permute.xlu0 %430
    %v433 = vmul.f32 %v426, %v431
    %435 = vrot.lane.b32.xlu0 %v433, 32
    %v436 = vpop.permute.xlu0 %435
    %v438 = vadd.f32 %v428, %v436
    %v439 = vtanh.pop %v438
    %441 = vrot.lane.b32.xlu0 %v439, 64
    %v442 = vpop.permute.xlu0 %441
    %v444 = vmul.f32 %v426, %v442
    %v447 = vunpack.c.l.s4 1966171168
    %v448 = vunpack.c.0.s8 %v447
    %v449 = vlaneseq
    %v450 = vshrl.u32 %v449, 7
    %v451 = vsub.s32 %v448, %v450
    %v452 = vrot.slane %v444, %v451
    %v453 = vcombine.high %v452, %v452
    %v455 = vunpack.c.l.s4 1966171168
    %v456 = vunpack.c.0.s8 %v455
    %v457 = vlaneseq
    %v458 = vshrl.u32 %v457, 7
    %v459 = vsub.s32 %v456, %v458
    %v460 = vrot.slane %v452, %v459
    %v462 = vunpack.c.l.s4 1966171168
    %v463 = vunpack.c.0.s8 %v462
    %v464 = vlaneseq
    %v465 = vshrl.u32 %v464, 7
    %v466 = vsub.s32 %v463, %v465
    %v467 = vrot.slane %v453, %v466
    %v468 = vlaneseq
    %v469 = vshrl.u32 %v468, 7
    %v470 = vsub.s32 0, %v469
    %v471 = vrot.slane %v460, %v470
    %v472 = vlaneseq
    %v473 = vshrl.u32 %v472, 7
    %v474 = vsub.s32 0, %v473
    %v475 = vrot.slane %v467, %v474
    %476 = vrot.lane.b32.xlu0 %v471, 32
    %v477 = vpop.permute.xlu0 %476
    %478 = vrot.lane.b32.xlu0 %v475, 32
    %v479 = vpop.permute.xlu0 %478
    %vm482 = vcmask 253952
    %483 = vst.msk [vmem:[#allocation2] sm:$0x1] %vm482, %v477
    %484 = vst.msk [vmem:[#allocation2 + $0x8] sm:$0x1] %vm482, %v479
    %485 = vmatprep.subr.mxu0 0.0
    %486 = vmatpush1.msra.mxu0 %v70
    %487 = vmatprep.subr.mxu0 0.0
    %488 = vmatpush1.msra.mxu0 %v71
    %489 = vmatprep.subr.mxu0 0.0
    %490 = vmatpush1.msra.mxu0 %v72
    %491 = vmatprep.subr.mxu0 0.0
    %492 = vmatpush1.msra.mxu0 %v73
    %493 = vmatprep.subr.mxu0 0.0
    %494 = vmatpush1.msra.mxu0 0.0
    %495 = vmatprep.subr.mxu0 0.0
    %496 = vmatpush1.msra.mxu0 0.0
    %497 = vmatprep.subr.mxu0 0.0
    %498 = vmatpush1.msra.mxu0 0.0
    %499 = vmatprep.subr.mxu0 0.0
    %500 = vmatpush1.msra.mxu0 0.0
    %501 = vmatprep.subr.mxu0 0.0
    %502 = vmatpush1.msra.mxu0 0.0
    %503 = vmatprep.subr.mxu0 0.0
    %504 = vmatpush1.msra.mxu0 0.0
    %505 = vmatprep.subr.mxu0 0.0
    %506 = vmatpush1.msra.mxu0 0.0
    %507 = vmatprep.subr.mxu0 0.0
    %508 = vmatpush1.msra.mxu0 0.0
    %509 = vmatprep.subr.mxu0 0.0
    %510 = vmatpush1.msra.mxu0 0.0
    %511 = vmatprep.subr.mxu0 0.0
    %512 = vmatpush1.msra.mxu0 0.0
    %513 = vmatprep.subr.mxu0 0.0
    %514 = vmatpush1.msra.mxu0 0.0
    %515 = vmatprep.subr.mxu0 0.0
    %516 = vmatpush1.msra.mxu0 0.0
    %517 = vmatprep.subr.mxu0 0.0
    %518 = vmatpush1.msra.mxu0 0.0
    %519 = vmatprep.subr.mxu0 0.0
    %520 = vmatpush1.msra.mxu0 0.0
    %521 = vmatprep.subr.mxu0 0.0
    %522 = vmatpush1.msra.mxu0 0.0
    %523 = vmatprep.subr.mxu0 0.0
    %524 = vmatpush1.msra.mxu0 0.0
    %525 = vmatprep.subr.mxu0 0.0
    %526 = vmatpush1.msra.mxu0 0.0
    %527 = vmatprep.subr.mxu0 0.0
    %528 = vmatpush1.msra.mxu0 0.0
    %529 = vmatprep.subr.mxu0 0.0
    %530 = vmatpush1.msra.mxu0 0.0
    %531 = vmatprep.subr.mxu0 0.0
    %532 = vmatpush1.msra.mxu0 0.0
    %533 = vmatprep.subr.mxu0 0.0
    %534 = vmatpush1.msra.mxu0 0.0
    %535 = vmatprep.subr.mxu0 0.0
    %536 = vmatpush1.msra.mxu0 0.0
    %537 = vmatprep.subr.mxu0 0.0
    %538 = vmatpush1.msra.mxu0 0.0
    %539 = vmatprep.subr.mxu0 0.0
    %540 = vmatpush1.msra.mxu0 0.0
    %541 = vmatprep.subr.mxu0 0.0
    %542 = vmatpush1.msra.mxu0 0.0
    %543 = vmatprep.subr.mxu0 0.0
    %544 = vmatpush1.msra.mxu0 0.0
    %545 = vmatprep.subr.mxu0 0.0
    %546 = vmatpush1.msra.mxu0 0.0
    %547 = vmatprep.subr.mxu0 0.0
    %548 = vmatpush1.msra.mxu0 0.0
    %549 = vmatprep.mubr.f32.mxu0 0.0
    %550 = vmatmul.mubr.f32.gmra.mrb[0].mxu0 %v342
    %v551 = vpop.f32.mrb[0].mxu0
    %v552 = vadd.f32 0.0, %v551
    %v553 = vpop.f32.mrb[0].mxu0
    %554 = vdwg.mxu0
    %v555 = vrot.slane %v80, 1
    %v556 = vsel %vm159, %v81, %v555
    %v557 = vsel %vm161, %v556, 0
    %559 = vmatprep.subr.mxu0 0.0
    %560 = vmatpush1.msra.mxu0 %v166
    %561 = vmatprep.subr.mxu0 0.0
    %562 = vmatpush1.msra.mxu0 0.0
    %563 = vmatprep.subr.mxu0 0.0
    %564 = vmatpush1.msra.mxu0 0.0
    %565 = vmatprep.subr.mxu0 0.0
    %566 = vmatpush1.msra.mxu0 0.0
    %567 = vmatprep.subr.mxu0 0.0
    %568 = vmatpush1.msra.mxu0 0.0
    %569 = vmatprep.subr.mxu0 0.0
    %570 = vmatpush1.msra.mxu0 0.0
    %571 = vmatprep.subr.mxu0 0.0
    %572 = vmatpush1.msra.mxu0 0.0
    %573 = vmatprep.subr.mxu0 0.0
    %574 = vmatpush1.msra.mxu0 0.0
    %575 = vmatprep.subr.mxu0 0.0
    %576 = vmatpush1.msra.mxu0 0.0
    %577 = vmatprep.subr.mxu0 0.0
    %578 = vmatpush1.msra.mxu0 0.0
    %579 = vmatprep.subr.mxu0 0.0
    %580 = vmatpush1.msra.mxu0 0.0
    %581 = vmatprep.subr.mxu0 0.0
    %582 = vmatpush1.msra.mxu0 0.0
    %583 = vmatprep.subr.mxu0 0.0
    %584 = vmatpush1.msra.mxu0 0.0
    %585 = vmatprep.subr.mxu0 0.0
    %586 = vmatpush1.msra.mxu0 0.0
    %587 = vmatprep.subr.mxu0 0.0
    %588 = vmatpush1.msra.mxu0 0.0
    %589 = vmatprep.subr.mxu0 0.0
    %590 = vmatpush1.msra.mxu0 0.0
    %591 = vmatprep.subr.mxu0 0.0
    %592 = vmatpush1.msra.mxu0 0.0
    %593 = vmatprep.subr.mxu0 0.0
    %594 = vmatpush1.msra.mxu0 0.0
    %595 = vmatprep.subr.mxu0 0.0
    %596 = vmatpush1.msra.mxu0 0.0
    %597 = vmatprep.subr.mxu0 0.0
    %598 = vmatpush1.msra.mxu0 0.0
    %599 = vmatprep.subr.mxu0 0.0
    %600 = vmatpush1.msra.mxu0 0.0
    %601 = vmatprep.subr.mxu0 0.0
    %602 = vmatpush1.msra.mxu0 0.0
    %603 = vmatprep.subr.mxu0 0.0
    %604 = vmatpush1.msra.mxu0 0.0
    %605 = vmatprep.subr.mxu0 0.0
    %606 = vmatpush1.msra.mxu0 0.0
    %607 = vmatprep.subr.mxu0 0.0
    %608 = vmatpush1.msra.mxu0 0.0
    %609 = vmatprep.subr.mxu0 0.0
    %610 = vmatpush1.msra.mxu0 0.0
    %611 = vmatprep.subr.mxu0 0.0
    %612 = vmatpush1.msra.mxu0 0.0
    %613 = vmatprep.subr.mxu0 0.0
    %614 = vmatpush1.msra.mxu0 0.0
    %615 = vmatprep.subr.mxu0 0.0
    %616 = vmatpush1.msra.mxu0 0.0
    %617 = vmatprep.subr.mxu0 0.0
    %618 = vmatpush1.msra.mxu0 0.0
    %619 = vmatprep.subr.mxu0 0.0
    %620 = vmatpush1.msra.mxu0 0.0
    %621 = vmatprep.subr.mxu0 0.0
    %622 = vmatpush1.msra.mxu0 0.0
    %623 = vmatprep.mubr.f32.mxu0 0.0
    %624 = vmatmul.mubr.f32.gmra.mrb[0].mxu0 %v557
    %v625 = vpop.f32.mrb[0].mxu0
    %v626 = vadd.f32 %v552, %v625
    %v627 = vpop.f32.mrb[0].mxu0
    %628 = vdwg.mxu0
    %v629 = vadd.f32 %v626, %v242
    %v630 = vxor.u32 %v629, 2147483648
    %v631 = vmul.f32 %v630, 1.442695
    %v632 = vpow.pop %v631
    %v633 = vadd.f32 %v632, 1.0
    %v634 = vrcp.pop %v633
    %v635 = vmul.f32 1.0, %v634
    %v636 = vtanh.pop %v629
    %v637 = vmul.f32 %v635, %v262
    %639 = vrot.lane.b32.xlu0 %v636, 64
    %v640 = vpop.permute.xlu0 %639
    %v642 = vmul.f32 %v635, %v640
    %644 = vrot.lane.b32.xlu0 %v642, 32
    %v645 = vpop.permute.xlu0 %644
    %v647 = vadd.f32 %v637, %v645
    %v648 = vtanh.pop %v647
    %650 = vrot.lane.b32.xlu0 %v648, 64
    %v651 = vpop.permute.xlu0 %650
    %v653 = vmul.f32 %v635, %v651
    %654 = vrot.lane.b32.xlu0 %v444, 32
    %v655 = vpop.permute.xlu0 %654
    %v656 = vsel %vm82, %v655, 0
    %658 = vmatprep.subr.mxu0 0.0
    %659 = vmatpush1.msra.mxu0 %v74
    %660 = vmatprep.subr.mxu0 0.0
    %661 = vmatpush1.msra.mxu0 %v75
    %662 = vmatprep.subr.mxu0 0.0
    %663 = vmatpush1.msra.mxu0 %v76
    %664 = vmatprep.subr.mxu0 0.0
    %665 = vmatpush1.msra.mxu0 %v77
    %666 = vmatprep.subr.mxu0 0.0
    %667 = vmatpush1.msra.mxu0 0.0
    %668 = vmatprep.subr.mxu0 0.0
    %669 = vmatpush1.msra.mxu0 0.0
    %670 = vmatprep.subr.mxu0 0.0
    %671 = vmatpush1.msra.mxu0 0.0
    %672 = vmatprep.subr.mxu0 0.0
    %673 = vmatpush1.msra.mxu0 0.0
    %674 = vmatprep.subr.mxu0 0.0
    %675 = vmatpush1.msra.mxu0 0.0
    %676 = vmatprep.subr.mxu0 0.0
    %677 = vmatpush1.msra.mxu0 0.0
    %678 = vmatprep.subr.mxu0 0.0
    %679 = vmatpush1.msra.mxu0 0.0
    %680 = vmatprep.subr.mxu0 0.0
    %681 = vmatpush1.msra.mxu0 0.0
    %682 = vmatprep.subr.mxu0 0.0
    %683 = vmatpush1.msra.mxu0 0.0
    %684 = vmatprep.subr.mxu0 0.0
    %685 = vmatpush1.msra.mxu0 0.0
    %686 = vmatprep.subr.mxu0 0.0
    %687 = vmatpush1.msra.mxu0 0.0
    %688 = vmatprep.subr.mxu0 0.0
    %689 = vmatpush1.msra.mxu0 0.0
    %690 = vmatprep.subr.mxu0 0.0
    %691 = vmatpush1.msra.mxu0 0.0
    %692 = vmatprep.subr.mxu0 0.0
    %693 = vmatpush1.msra.mxu0 0.0
    %694 = vmatprep.subr.mxu0 0.0
    %695 = vmatpush1.msra.mxu0 0.0
    %696 = vmatprep.subr.mxu0 0.0
    %697 = vmatpush1.msra.mxu0 0.0
    %698 = vmatprep.subr.mxu0 0.0
    %699 = vmatpush1.msra.mxu0 0.0
    %700 = vmatprep.subr.mxu0 0.0
    %701 = vmatpush1.msra.mxu0 0.0
    %702 = vmatprep.subr.mxu0 0.0
    %703 = vmatpush1.msra.mxu0 0.0
    %704 = vmatprep.subr.mxu0 0.0
    %705 = vmatpush1.msra.mxu0 0.0
    %706 = vmatprep.subr.mxu0 0.0
    %707 = vmatpush1.msra.mxu0 0.0
    %708 = vmatprep.subr.mxu0 0.0
    %709 = vmatpush1.msra.mxu0 0.0
    %710 = vmatprep.subr.mxu0 0.0
    %711 = vmatpush1.msra.mxu0 0.0
    %712 = vmatprep.subr.mxu0 0.0
    %713 = vmatpush1.msra.mxu0 0.0
    %714 = vmatprep.subr.mxu0 0.0
    %715 = vmatpush1.msra.mxu0 0.0
    %716 = vmatprep.subr.mxu0 0.0
    %717 = vmatpush1.msra.mxu0 0.0
    %718 = vmatprep.subr.mxu0 0.0
    %719 = vmatpush1.msra.mxu0 0.0
    %720 = vmatprep.subr.mxu0 0.0
    %721 = vmatpush1.msra.mxu0 0.0
    %722 = vmatprep.mubr.f32.mxu0 0.0
    %723 = vmatmul.mubr.f32.gmra.mrb[0].mxu0 %v656
    %v724 = vpop.f32.mrb[0].mxu0
    %v725 = vadd.f32 0.0, %v724
    %v726 = vpop.f32.mrb[0].mxu0
    %727 = vdwg.mxu0
    %729 = vrot.lane.b32.xlu0 %v653, 32
    %v730 = vpop.permute.xlu0 %729
    %v731 = vsel %vm82, %v730, 0
    %733 = vmatprep.subr.mxu0 0.0
    %734 = vmatpush1.msra.mxu0 %v66
    %735 = vmatprep.subr.mxu0 0.0
    %736 = vmatpush1.msra.mxu0 %v67
    %737 = vmatprep.subr.mxu0 0.0
    %738 = vmatpush1.msra.mxu0 %v68
    %739 = vmatprep.subr.mxu0 0.0
    %740 = vmatpush1.msra.mxu0 %v69
    %741 = vmatprep.subr.mxu0 0.0
    %742 = vmatpush1.msra.mxu0 0.0
    %743 = vmatprep.subr.mxu0 0.0
    %744 = vmatpush1.msra.mxu0 0.0
    %745 = vmatprep.subr.mxu0 0.0
    %746 = vmatpush1.msra.mxu0 0.0
    %747 = vmatprep.subr.mxu0 0.0
    %748 = vmatpush1.msra.mxu0 0.0
    %749 = vmatprep.subr.mxu0 0.0
    %750 = vmatpush1.msra.mxu0 0.0
    %751 = vmatprep.subr.mxu0 0.0
    %752 = vmatpush1.msra.mxu0 0.0
    %753 = vmatprep.subr.mxu0 0.0
    %754 = vmatpush1.msra.mxu0 0.0
    %755 = vmatprep.subr.mxu0 0.0
    %756 = vmatpush1.msra.mxu0 0.0
    %757 = vmatprep.subr.mxu0 0.0
    %758 = vmatpush1.msra.mxu0 0.0
    %759 = vmatprep.subr.mxu0 0.0
    %760 = vmatpush1.msra.mxu0 0.0
    %761 = vmatprep.subr.mxu0 0.0
    %762 = vmatpush1.msra.mxu0 0.0
    %763 = vmatprep.subr.mxu0 0.0
    %764 = vmatpush1.msra.mxu0 0.0
    %765 = vmatprep.subr.mxu0 0.0
    %766 = vmatpush1.msra.mxu0 0.0
    %767 = vmatprep.subr.mxu0 0.0
    %768 = vmatpush1.msra.mxu0 0.0
    %769 = vmatprep.subr.mxu0 0.0
    %770 = vmatpush1.msra.mxu0 0.0
    %771 = vmatprep.subr.mxu0 0.0
    %772 = vmatpush1.msra.mxu0 0.0
    %773 = vmatprep.subr.mxu0 0.0
    %774 = vmatpush1.msra.mxu0 0.0
    %775 = vmatprep.subr.mxu0 0.0
    %776 = vmatpush1.msra.mxu0 0.0
    %777 = vmatprep.subr.mxu0 0.0
    %778 = vmatpush1.msra.mxu0 0.0
    %779 = vmatprep.subr.mxu0 0.0
    %780 = vmatpush1.msra.mxu0 0.0
    %781 = vmatprep.subr.mxu0 0.0
    %782 = vmatpush1.msra.mxu0 0.0
    %783 = vmatprep.subr.mxu0 0.0
    %784 = vmatpush1.msra.mxu0 0.0
    %785 = vmatprep.subr.mxu0 0.0
    %786 = vmatpush1.msra.mxu0 0.0
    %787 = vmatprep.subr.mxu0 0.0
    %788 = vmatpush1.msra.mxu0 0.0
    %789 = vmatprep.subr.mxu0 0.0
    %790 = vmatpush1.msra.mxu0 0.0
    %791 = vmatprep.subr.mxu0 0.0
    %792 = vmatpush1.msra.mxu0 0.0
    %793 = vmatprep.subr.mxu0 0.0
    %794 = vmatpush1.msra.mxu0 0.0
    %795 = vmatprep.subr.mxu0 0.0
    %796 = vmatpush1.msra.mxu0 0.0
    %797 = vmatprep.mubr.f32.mxu0 0.0
    %798 = vmatmul.mubr.f32.gmra.mrb[0].mxu0 %v731
    %v799 = vpop.f32.mrb[0].mxu0
    %v800 = vadd.f32 %v725, %v799
    %v801 = vpop.f32.mrb[0].mxu0
    %802 = vdwg.mxu0
    %v803 = vadd.f32 %v800, %v418
    %v804 = vxor.u32 %v803, 2147483648
    %v805 = vmul.f32 %v804, 1.442695
    %v806 = vpow.pop %v805
    %v807 = vadd.f32 %v806, 1.0
    %v808 = vrcp.pop %v807
    %v809 = vmul.f32 1.0, %v808
    %v810 = vtanh.pop %v803
    %v811 = vmul.f32 %v809, %v438
    %813 = vrot.lane.b32.xlu0 %v810, 64
    %v814 = vpop.permute.xlu0 %813
    %v816 = vmul.f32 %v809, %v814
    %818 = vrot.lane.b32.xlu0 %v816, 32
    %v819 = vpop.permute.xlu0 %818
    %v821 = vadd.f32 %v811, %v819
    %v822 = vtanh.pop %v821
    %824 = vrot.lane.b32.xlu0 %v822, 64
    %v825 = vpop.permute.xlu0 %824
    %v827 = vmul.f32 %v809, %v825
    %v830 = vunpack.c.l.s4 1966171168
    %v831 = vunpack.c.0.s8 %v830
    %v832 = vlaneseq
    %v833 = vshrl.u32 %v832, 7
    %v834 = vsub.s32 %v831, %v833
    %v835 = vrot.slane %v827, %v834
    %v836 = vcombine.high %v835, %v835
    %v838 = vunpack.c.l.s4 1966171168
    %v839 = vunpack.c.0.s8 %v838
    %v840 = vlaneseq
    %v841 = vshrl.u32 %v840, 7
    %v842 = vsub.s32 %v839, %v841
    %v843 = vrot.slane %v835, %v842
    %v845 = vunpack.c.l.s4 1966171168
    %v846 = vunpack.c.0.s8 %v845
    %v847 = vlaneseq
    %v848 = vshrl.u32 %v847, 7
    %v849 = vsub.s32 %v846, %v848
    %v850 = vrot.slane %v836, %v849
    %v851 = vlaneseq
    %v852 = vshrl.u32 %v851, 7
    %v853 = vsub.s32 0, %v852
    %v854 = vrot.slane %v843, %v853
    %v855 = vlaneseq
    %v856 = vshrl.u32 %v855, 7
    %v857 = vsub.s32 0, %v856
    %v858 = vrot.slane %v850, %v857
    %859 = vrot.lane.b32.xlu0 %v854, 32
    %v860 = vpop.permute.xlu0 %859
    %861 = vrot.lane.b32.xlu0 %v858, 32
    %v862 = vpop.permute.xlu0 %861
    %865 = vst.msk [vmem:[#allocation2 + $0x1] sm:$0x1] %vm482, %v860
    %866 = vst.msk [vmem:[#allocation2 + $0x9] sm:$0x1] %vm482, %v862
    %867 = vmatprep.subr.mxu0 0.0
    %868 = vmatpush1.msra.mxu0 %v70
    %869 = vmatprep.subr.mxu0 0.0
    %870 = vmatpush1.msra.mxu0 %v71
    %871 = vmatprep.subr.mxu0 0.0
    %872 = vmatpush1.msra.mxu0 %v72
    %873 = vmatprep.subr.mxu0 0.0
    %874 = vmatpush1.msra.mxu0 %v73
    %875 = vmatprep.subr.mxu0 0.0
    %876 = vmatpush1.msra.mxu0 0.0
    %877 = vmatprep.subr.mxu0 0.0
    %878 = vmatpush1.msra.mxu0 0.0
    %879 = vmatprep.subr.mxu0 0.0
    %880 = vmatpush1.msra.mxu0 0.0
    %881 = vmatprep.subr.mxu0 0.0
    %882 = vmatpush1.msra.mxu0 0.0
    %883 = vmatprep.subr.mxu0 0.0
    %884 = vmatpush1.msra.mxu0 0.0
    %885 = vmatprep.subr.mxu0 0.0
    %886 = vmatpush1.msra.mxu0 0.0
    %887 = vmatprep.subr.mxu0 0.0
    %888 = vmatpush1.msra.mxu0 0.0
    %889 = vmatprep.subr.mxu0 0.0
    %890 = vmatpush1.msra.mxu0 0.0
    %891 = vmatprep.subr.mxu0 0.0
    %892 = vmatpush1.msra.mxu0 0.0
    %893 = vmatprep.subr.mxu0 0.0
    %894 = vmatpush1.msra.mxu0 0.0
    %895 = vmatprep.subr.mxu0 0.0
    %896 = vmatpush1.msra.mxu0 0.0
    %897 = vmatprep.subr.mxu0 0.0
    %898 = vmatpush1.msra.mxu0 0.0
    %899 = vmatprep.subr.mxu0 0.0
    %900 = vmatpush1.msra.mxu0 0.0
    %901 = vmatprep.subr.mxu0 0.0
    %902 = vmatpush1.msra.mxu0 0.0
    %903 = vmatprep.subr.mxu0 0.0
    %904 = vmatpush1.msra.mxu0 0.0
    %905 = vmatprep.subr.mxu0 0.0
    %906 = vmatpush1.msra.mxu0 0.0
    %907 = vmatprep.subr.mxu0 0.0
    %908 = vmatpush1.msra.mxu0 0.0
    %909 = vmatprep.subr.mxu0 0.0
    %910 = vmatpush1.msra.mxu0 0.0
    %911 = vmatprep.subr.mxu0 0.0
    %912 = vmatpush1.msra.mxu0 0.0
    %913 = vmatprep.subr.mxu0 0.0
    %914 = vmatpush1.msra.mxu0 0.0
    %915 = vmatprep.subr.mxu0 0.0
    %916 = vmatpush1.msra.mxu0 0.0
    %917 = vmatprep.subr.mxu0 0.0
    %918 = vmatpush1.msra.mxu0 0.0
    %919 = vmatprep.subr.mxu0 0.0
    %920 = vmatpush1.msra.mxu0 0.0
    %921 = vmatprep.subr.mxu0 0.0
    %922 = vmatpush1.msra.mxu0 0.0
    %923 = vmatprep.subr.mxu0 0.0
    %924 = vmatpush1.msra.mxu0 0.0
    %925 = vmatprep.subr.mxu0 0.0
    %926 = vmatpush1.msra.mxu0 0.0
    %927 = vmatprep.subr.mxu0 0.0
    %928 = vmatpush1.msra.mxu0 0.0
    %929 = vmatprep.subr.mxu0 0.0
    %930 = vmatpush1.msra.mxu0 0.0
    %931 = vmatprep.mubr.f32.mxu0 0.0
    %932 = vmatmul.mubr.f32.gmra.mrb[0].mxu0 %v731
    %v933 = vpop.f32.mrb[0].mxu0
    %v934 = vadd.f32 0.0, %v933
    %v935 = vpop.f32.mrb[0].mxu0
    %936 = vdwg.mxu0
    %v937 = vrot.slane %v80, 2
    %v938 = vrot.slane %v81, 1
    %v939 = vsel %vm159, %v938, %v937
    %v940 = vsel %vm161, %v939, 0
    %942 = vmatprep.subr.mxu0 0.0
    %943 = vmatpush1.msra.mxu0 %v166
    %944 = vmatprep.subr.mxu0 0.0
    %945 = vmatpush1.msra.mxu0 0.0
    %946 = vmatprep.subr.mxu0 0.0
    %947 = vmatpush1.msra.mxu0 0.0
    %948 = vmatprep.subr.mxu0 0.0
    %949 = vmatpush1.msra.mxu0 0.0
    %950 = vmatprep.subr.mxu0 0.0
    %951 = vmatpush1.msra.mxu0 0.0
    %952 = vmatprep.subr.mxu0 0.0
    %953 = vmatpush1.msra.mxu0 0.0
    %954 = vmatprep.subr.mxu0 0.0
    %955 = vmatpush1.msra.mxu0 0.0
    %956 = vmatprep.subr.mxu0 0.0
    %957 = vmatpush1.msra.mxu0 0.0
    %958 = vmatprep.subr.mxu0 0.0
    %959 = vmatpush1.msra.mxu0 0.0
    %960 = vmatprep.subr.mxu0 0.0
    %961 = vmatpush1.msra.mxu0 0.0
    %962 = vmatprep.subr.mxu0 0.0
    %963 = vmatpush1.msra.mxu0 0.0
    %964 = vmatprep.subr.mxu0 0.0
    %965 = vmatpush1.msra.mxu0 0.0
    %966 = vmatprep.subr.mxu0 0.0
    %967 = vmatpush1.msra.mxu0 0.0
    %968 = vmatprep.subr.mxu0 0.0
    %969 = vmatpush1.msra.mxu0 0.0
    %970 = vmatprep.subr.mxu0 0.0
    %971 = vmatpush1.msra.mxu0 0.0
    %972 = vmatprep.subr.mxu0 0.0
    %973 = vmatpush1.msra.mxu0 0.0
    %974 = vmatprep.subr.mxu0 0.0
    %975 = vmatpush1.msra.mxu0 0.0
    %976 = vmatprep.subr.mxu0 0.0
    %977 = vmatpush1.msra.mxu0 0.0
    %978 = vmatprep.subr.mxu0 0.0
    %979 = vmatpush1.msra.mxu0 0.0
    %980 = vmatprep.subr.mxu0 0.0
    %981 = vmatpush1.msra.mxu0 0.0
    %982 = vmatprep.subr.mxu0 0.0
    %983 = vmatpush1.msra.mxu0 0.0
    %984 = vmatprep.subr.mxu0 0.0
    %985 = vmatpush1.msra.mxu0 0.0
    %986 = vmatprep.subr.mxu0 0.0
    %987 = vmatpush1.msra.mxu0 0.0
    %988 = vmatprep.subr.mxu0 0.0
    %989 = vmatpush1.msra.mxu0 0.0
    %990 = vmatprep.subr.mxu0 0.0
    %991 = vmatpush1.msra.mxu0 0.0
    %992 = vmatprep.subr.mxu0 0.0
    %993 = vmatpush1.msra.mxu0 0.0
    %994 = vmatprep.subr.mxu0 0.0
    %995 = vmatpush1.msra.mxu0 0.0
    %996 = vmatprep.subr.mxu0 0.0
    %997 = vmatpush1.msra.mxu0 0.0
    %998 = vmatprep.subr.mxu0 0.0
    %999 = vmatpush1.msra.mxu0 0.0
    %1000 = vmatprep.subr.mxu0 0.0
    %1001 = vmatpush1.msra.mxu0 0.0
    %1002 = vmatprep.subr.mxu0 0.0
    %1003 = vmatpush1.msra.mxu0 0.0
    %1004 = vmatprep.subr.mxu0 0.0
    %1005 = vmatpush1.msra.mxu0 0.0
    %1006 = vmatprep.mubr.f32.mxu0 0.0
    %1007 = vmatmul.mubr.f32.gmra.mrb[0].mxu0 %v940
    %v1008 = vpop.f32.mrb[0].mxu0
    %v1009 = vadd.f32 %v934, %v1008
    %v1010 = vpop.f32.mrb[0].mxu0
    %1011 = vdwg.mxu0
    %v1012 = vadd.f32 %v1009, %v242
    %v1013 = vxor.u32 %v1012, 2147483648
    %v1014 = vmul.f32 %v1013, 1.442695
    %v1015 = vpow.pop %v1014
    %v1016 = vadd.f32 %v1015, 1.0
    %v1017 = vrcp.pop %v1016
    %v1018 = vmul.f32 1.0, %v1017
    %v1019 = vtanh.pop %v1012
    %v1020 = vmul.f32 %v1018, %v647
    %1022 = vrot.lane.b32.xlu0 %v1019, 64
    %v1023 = vpop.permute.xlu0 %1022
    %v1025 = vmul.f32 %v1018, %v1023
    %1027 = vrot.lane.b32.xlu0 %v1025, 32
    %v1028 = vpop.permute.xlu0 %1027
    %v1030 = vadd.f32 %v1020, %v1028
    %v1031 = vtanh.pop %v1030
    %1033 = vrot.lane.b32.xlu0 %v1031, 64
    %v1034 = vpop.permute.xlu0 %1033
    %v1036 = vmul.f32 %v1018, %v1034
    %1037 = vrot.lane.b32.xlu0 %v827, 32
    %v1038 = vpop.permute.xlu0 %1037
    %v1039 = vsel %vm82, %v1038, 0
    %1041 = vmatprep.subr.mxu0 0.0
    %1042 = vmatpush1.msra.mxu0 %v74
    %1043 = vmatprep.subr.mxu0 0.0
    %1044 = vmatpush1.msra.mxu0 %v75
    %1045 = vmatprep.subr.mxu0 0.0
    %1046 = vmatpush1.msra.mxu0 %v76
    %1047 = vmatprep.subr.mxu0 0.0
    %1048 = vmatpush1.msra.mxu0 %v77
    %1049 = vmatprep.subr.mxu0 0.0
    %1050 = vmatpush1.msra.mxu0 0.0
    %1051 = vmatprep.subr.mxu0 0.0
    %1052 = vmatpush1.msra.mxu0 0.0
    %1053 = vmatprep.subr.mxu0 0.0
    %1054 = vmatpush1.msra.mxu0 0.0
    %1055 = vmatprep.subr.mxu0 0.0
    %1056 = vmatpush1.msra.mxu0 0.0
    %1057 = vmatprep.subr.mxu0 0.0
    %1058 = vmatpush1.msra.mxu0 0.0
    %1059 = vmatprep.subr.mxu0 0.0
    %1060 = vmatpush1.msra.mxu0 0.0
    %1061 = vmatprep.subr.mxu0 0.0
    %1062 = vmatpush1.msra.mxu0 0.0
    %1063 = vmatprep.subr.mxu0 0.0
    %1064 = vmatpush1.msra.mxu0 0.0
    %1065 = vmatprep.subr.mxu0 0.0
    %1066 = vmatpush1.msra.mxu0 0.0
    %1067 = vmatprep.subr.mxu0 0.0
    %1068 = vmatpush1.msra.mxu0 0.0
    %1069 = vmatprep.subr.mxu0 0.0
    %1070 = vmatpush1.msra.mxu0 0.0
    %1071 = vmatprep.subr.mxu0 0.0
    %1072 = vmatpush1.msra.mxu0 0.0
    %1073 = vmatprep.subr.mxu0 0.0
    %1074 = vmatpush1.msra.mxu0 0.0
    %1075 = vmatprep.subr.mxu0 0.0
    %1076 = vmatpush1.msra.mxu0 0.0
    %1077 = vmatprep.subr.mxu0 0.0
    %1078 = vmatpush1.msra.mxu0 0.0
    %1079 = vmatprep.subr.mxu0 0.0
    %1080 = vmatpush1.msra.mxu0 0.0
    %1081 = vmatprep.subr.mxu0 0.0
    %1082 = vmatpush1.msra.mxu0 0.0
    %1083 = vmatprep.subr.mxu0 0.0
    %1084 = vmatpush1.msra.mxu0 0.0
    %1085 = vmatprep.subr.mxu0 0.0
    %1086 = vmatpush1.msra.mxu0 0.0
    %1087 = vmatprep.subr.mxu0 0.0
    %1088 = vmatpush1.msra.mxu0 0.0
    %1089 = vmatprep.subr.mxu0 0.0
    %1090 = vmatpush1.msra.mxu0 0.0
    %1091 = vmatprep.subr.mxu0 0.0
    %1092 = vmatpush1.msra.mxu0 0.0
    %1093 = vmatprep.subr.mxu0 0.0
    %1094 = vmatpush1.msra.mxu0 0.0
    %1095 = vmatprep.subr.mxu0 0.0
    %1096 = vmatpush1.msra.mxu0 0.0
    %1097 = vmatprep.subr.mxu0 0.0
    %1098 = vmatpush1.msra.mxu0 0.0
    %1099 = vmatprep.subr.mxu0 0.0
    %1100 = vmatpush1.msra.mxu0 0.0
    %1101 = vmatprep.subr.mxu0 0.0
    %1102 = vmatpush1.msra.mxu0 0.0
    %1103 = vmatprep.subr.mxu0 0.0
    %1104 = vmatpush1.msra.mxu0 0.0
    %1105 = vmatprep.mubr.f32.mxu0 0.0
    %1106 = vmatmul.mubr.f32.gmra.mrb[0].mxu0 %v1039
    %v1107 = vpop.f32.mrb[0].mxu0
    %v1108 = vadd.f32 0.0, %v1107
    %v1109 = vpop.f32.mrb[0].mxu0
    %1110 = vdwg.mxu0
    %1112 = vrot.lane.b32.xlu0 %v1036, 32
    %v1113 = vpop.permute.xlu0 %1112
    %v1114 = vsel %vm82, %v1113, 0
    %1116 = vmatprep.subr.mxu0 0.0
    %1117 = vmatpush1.msra.mxu0 %v66
    %1118 = vmatprep.subr.mxu0 0.0
    %1119 = vmatpush1.msra.mxu0 %v67
    %1120 = vmatprep.subr.mxu0 0.0
    %1121 = vmatpush1.msra.mxu0 %v68
    %1122 = vmatprep.subr.mxu0 0.0
    %1123 = vmatpush1.msra.mxu0 %v69
    %1124 = vmatprep.subr.mxu0 0.0
    %1125 = vmatpush1.msra.mxu0 0.0
    %1126 = vmatprep.subr.mxu0 0.0
    %1127 = vmatpush1.msra.mxu0 0.0
    %1128 = vmatprep.subr.mxu0 0.0
    %1129 = vmatpush1.msra.mxu0 0.0
    %1130 = vmatprep.subr.mxu0 0.0
    %1131 = vmatpush1.msra.mxu0 0.0
    %1132 = vmatprep.subr.mxu0 0.0
    %1133 = vmatpush1.msra.mxu0 0.0
    %1134 = vmatprep.subr.mxu0 0.0
    %1135 = vmatpush1.msra.mxu0 0.0
    %1136 = vmatprep.subr.mxu0 0.0
    %1137 = vmatpush1.msra.mxu0 0.0
    %1138 = vmatprep.subr.mxu0 0.0
    %1139 = vmatpush1.msra.mxu0 0.0
    %1140 = vmatprep.subr.mxu0 0.0
    %1141 = vmatpush1.msra.mxu0 0.0
    %1142 = vmatprep.subr.mxu0 0.0
    %1143 = vmatpush1.msra.mxu0 0.0
    %1144 = vmatprep.subr.mxu0 0.0
    %1145 = vmatpush1.msra.mxu0 0.0
    %1146 = vmatprep.subr.mxu0 0.0
    %1147 = vmatpush1.msra.mxu0 0.0
    %1148 = vmatprep.subr.mxu0 0.0
    %1149 = vmatpush1.msra.mxu0 0.0
    %1150 = vmatprep.subr.mxu0 0.0
    %1151 = vmatpush1.msra.mxu0 0.0
    %1152 = vmatprep.subr.mxu0 0.0
    %1153 = vmatpush1.msra.mxu0 0.0
    %1154 = vmatprep.subr.mxu0 0.0
    %1155 = vmatpush1.msra.mxu0 0.0
    %1156 = vmatprep.subr.mxu0 0.0
    %1157 = vmatpush1.msra.mxu0 0.0
    %1158 = vmatprep.subr.mxu0 0.0
    %1159 = vmatpush1.msra.mxu0 0.0
    %1160 = vmatprep.subr.mxu0 0.0
    %1161 = vmatpush1.msra.mxu0 0.0
    %1162 = vmatprep.subr.mxu0 0.0
    %1163 = vmatpush1.msra.mxu0 0.0
    %1164 = vmatprep.subr.mxu0 0.0
    %1165 = vmatpush1.msra.mxu0 0.0
    %1166 = vmatprep.subr.mxu0 0.0
    %1167 = vmatpush1.msra.mxu0 0.0
    %1168 = vmatprep.subr.mxu0 0.0
    %1169 = vmatpush1.msra.mxu0 0.0
    %1170 = vmatprep.subr.mxu0 0.0
    %1171 = vmatpush1.msra.mxu0 0.0
    %1172 = vmatprep.subr.mxu0 0.0
    %1173 = vmatpush1.msra.mxu0 0.0
    %1174 = vmatprep.subr.mxu0 0.0
    %1175 = vmatpush1.msra.mxu0 0.0
    %1176 = vmatprep.subr.mxu0 0.0
    %1177 = vmatpush1.msra.mxu0 0.0
    %1178 = vmatprep.subr.mxu0 0.0
    %1179 = vmatpush1.msra.mxu0 0.0
    %1180 = vmatprep.mubr.f32.mxu0 0.0
    %1181 = vmatmul.mubr.f32.gmra.mrb[0].mxu0 %v1114
    %v1182 = vpop.f32.mrb[0].mxu0
    %v1183 = vadd.f32 %v1108, %v1182
    %v1184 = vpop.f32.mrb[0].mxu0
    %1185 = vdwg.mxu0
    %v1186 = vadd.f32 %v1183, %v418
    %v1187 = vxor.u32 %v1186, 2147483648
    %v1188 = vmul.f32 %v1187, 1.442695
    %v1189 = vpow.pop %v1188
    %v1190 = vadd.f32 %v1189, 1.0
    %v1191 = vrcp.pop %v1190
    %v1192 = vmul.f32 1.0, %v1191
    %v1193 = vtanh.pop %v1186
    %v1194 = vmul.f32 %v1192, %v821
    %1196 = vrot.lane.b32.xlu0 %v1193, 64
    %v1197 = vpop.permute.xlu0 %1196
    %v1199 = vmul.f32 %v1192, %v1197
    %1201 = vrot.lane.b32.xlu0 %v1199, 32
    %v1202 = vpop.permute.xlu0 %1201
    %v1204 = vadd.f32 %v1194, %v1202
    %v1205 = vtanh.pop %v1204
    %1207 = vrot.lane.b32.xlu0 %v1205, 64
    %v1208 = vpop.permute.xlu0 %1207
    %v1210 = vmul.f32 %v1192, %v1208
    %v1213 = vunpack.c.l.s4 1966171168
    %v1214 = vunpack.c.0.s8 %v1213
    %v1215 = vlaneseq
    %v1216 = vshrl.u32 %v1215, 7
    %v1217 = vsub.s32 %v1214, %v1216
    %v1218 = vrot.slane %v1210, %v1217
    %v1219 = vcombine.high %v1218, %v1218
    %v1221 = vunpack.c.l.s4 1966171168
    %v1222 = vunpack.c.0.s8 %v1221
    %v1223 = vlaneseq
    %v1224 = vshrl.u32 %v1223, 7
    %v1225 = vsub.s32 %v1222, %v1224
    %v1226 = vrot.slane %v1218, %v1225
    %v1228 = vunpack.c.l.s4 1966171168
    %v1229 = vunpack.c.0.s8 %v1228
    %v1230 = vlaneseq
    %v1231 = vshrl.u32 %v1230, 7
    %v1232 = vsub.s32 %v1229, %v1231
    %v1233 = vrot.slane %v1219, %v1232
    %v1234 = vlaneseq
    %v1235 = vshrl.u32 %v1234, 7
    %v1236 = vsub.s32 0, %v1235
    %v1237 = vrot.slane %v1226, %v1236
    %v1238 = vlaneseq
    %v1239 = vshrl.u32 %v1238, 7
    %v1240 = vsub.s32 0, %v1239
    %v1241 = vrot.slane %v1233, %v1240
    %1242 = vrot.lane.b32.xlu0 %v1237, 32
    %v1243 = vpop.permute.xlu0 %1242
    %1244 = vrot.lane.b32.xlu0 %v1241, 32
    %v1245 = vpop.permute.xlu0 %1244
    %1248 = vst.msk [vmem:[#allocation2 + $0x2] sm:$0x1] %vm482, %v1243
    %1249 = vst.msk [vmem:[#allocation2 + $0xa] sm:$0x1] %vm482, %v1245
    %1250 = vmatprep.subr.mxu0 0.0
    %1251 = vmatpush1.msra.mxu0 %v70
    %1252 = vmatprep.subr.mxu0 0.0
    %1253 = vmatpush1.msra.mxu0 %v71
    %1254 = vmatprep.subr.mxu0 0.0
    %1255 = vmatpush1.msra.mxu0 %v72
    %1256 = vmatprep.subr.mxu0 0.0
    %1257 = vmatpush1.msra.mxu0 %v73
    %1258 = vmatprep.subr.mxu0 0.0
    %1259 = vmatpush1.msra.mxu0 0.0
    %1260 = vmatprep.subr.mxu0 0.0
    %1261 = vmatpush1.msra.mxu0 0.0
    %1262 = vmatprep.subr.mxu0 0.0
    %1263 = vmatpush1.msra.mxu0 0.0
    %1264 = vmatprep.subr.mxu0 0.0
    %1265 = vmatpush1.msra.mxu0 0.0
    %1266 = vmatprep.subr.mxu0 0.0
    %1267 = vmatpush1.msra.mxu0 0.0
    %1268 = vmatprep.subr.mxu0 0.0
    %1269 = vmatpush1.msra.mxu0 0.0
    %1270 = vmatprep.subr.mxu0 0.0
    %1271 = vmatpush1.msra.mxu0 0.0
    %1272 = vmatprep.subr.mxu0 0.0
    %1273 = vmatpush1.msra.mxu0 0.0
    %1274 = vmatprep.subr.mxu0 0.0
    %1275 = vmatpush1.msra.mxu0 0.0
    %1276 = vmatprep.subr.mxu0 0.0
    %1277 = vmatpush1.msra.mxu0 0.0
    %1278 = vmatprep.subr.mxu0 0.0
    %1279 = vmatpush1.msra.mxu0 0.0
    %1280 = vmatprep.subr.mxu0 0.0
    %1281 = vmatpush1.msra.mxu0 0.0
    %1282 = vmatprep.subr.mxu0 0.0
    %1283 = vmatpush1.msra.mxu0 0.0
    %1284 = vmatprep.subr.mxu0 0.0
    %1285 = vmatpush1.msra.mxu0 0.0
    %1286 = vmatprep.subr.mxu0 0.0
    %1287 = vmatpush1.msra.mxu0 0.0
    %1288 = vmatprep.subr.mxu0 0.0
    %1289 = vmatpush1.msra.mxu0 0.0
    %1290 = vmatprep.subr.mxu0 0.0
    %1291 = vmatpush1.msra.mxu0 0.0
    %1292 = vmatprep.subr.mxu0 0.0
    %1293 = vmatpush1.msra.mxu0 0.0
    %1294 = vmatprep.subr.mxu0 0.0
    %1295 = vmatpush1.msra.mxu0 0.0
    %1296 = vmatprep.subr.mxu0 0.0
    %1297 = vmatpush1.msra.mxu0 0.0
    %1298 = vmatprep.subr.mxu0 0.0
    %1299 = vmatpush1.msra.mxu0 0.0
    %1300 = vmatprep.subr.mxu0 0.0
    %1301 = vmatpush1.msra.mxu0 0.0
    %1302 = vmatprep.subr.mxu0 0.0
    %1303 = vmatpush1.msra.mxu0 0.0
    %1304 = vmatprep.subr.mxu0 0.0
    %1305 = vmatpush1.msra.mxu0 0.0
    %1306 = vmatprep.subr.mxu0 0.0
    %1307 = vmatpush1.msra.mxu0 0.0
    %1308 = vmatprep.subr.mxu0 0.0
    %1309 = vmatpush1.msra.mxu0 0.0
    %1310 = vmatprep.subr.mxu0 0.0
    %1311 = vmatpush1.msra.mxu0 0.0
    %1312 = vmatprep.subr.mxu0 0.0
    %1313 = vmatpush1.msra.mxu0 0.0
    %1314 = vmatprep.mubr.f32.mxu0 0.0
    %1315 = vmatmul.mubr.f32.gmra.mrb[0].mxu0 %v1114
    %v1316 = vpop.f32.mrb[0].mxu0
    %v1317 = vadd.f32 0.0, %v1316
    %v1318 = vpop.f32.mrb[0].mxu0
    %1319 = vdwg.mxu0
    %v1320 = vrot.slane %v80, 3
    %v1321 = vrot.slane %v81, 2
    %v1322 = vsel %vm159, %v1321, %v1320
    %v1323 = vsel %vm161, %v1322, 0
    %1325 = vmatprep.subr.mxu0 0.0
    %1326 = vmatpush1.msra.mxu0 %v166
    %1327 = vmatprep.subr.mxu0 0.0
    %1328 = vmatpush1.msra.mxu0 0.0
    %1329 = vmatprep.subr.mxu0 0.0
    %1330 = vmatpush1.msra.mxu0 0.0
    %1331 = vmatprep.subr.mxu0 0.0
    %1332 = vmatpush1.msra.mxu0 0.0
    %1333 = vmatprep.subr.mxu0 0.0
    %1334 = vmatpush1.msra.mxu0 0.0
    %1335 = vmatprep.subr.mxu0 0.0
    %1336 = vmatpush1.msra.mxu0 0.0
    %1337 = vmatprep.subr.mxu0 0.0
    %1338 = vmatpush1.msra.mxu0 0.0
    %1339 = vmatprep.subr.mxu0 0.0
    %1340 = vmatpush1.msra.mxu0 0.0
    %1341 = vmatprep.subr.mxu0 0.0
    %1342 = vmatpush1.msra.mxu0 0.0
    %1343 = vmatprep.subr.mxu0 0.0
    %1344 = vmatpush1.msra.mxu0 0.0
    %1345 = vmatprep.subr.mxu0 0.0
    %1346 = vmatpush1.msra.mxu0 0.0
    %1347 = vmatprep.subr.mxu0 0.0
    %1348 = vmatpush1.msra.mxu0 0.0
    %1349 = vmatprep.subr.mxu0 0.0
    %1350 = vmatpush1.msra.mxu0 0.0
    %1351 = vmatprep.subr.mxu0 0.0
    %1352 = vmatpush1.msra.mxu0 0.0
    %1353 = vmatprep.subr.mxu0 0.0
    %1354 = vmatpush1.msra.mxu0 0.0
    %1355 = vmatprep.subr.mxu0 0.0
    %1356 = vmatpush1.msra.mxu0 0.0
    %1357 = vmatprep.subr.mxu0 0.0
    %1358 = vmatpush1.msra.mxu0 0.0
    %1359 = vmatprep.subr.mxu0 0.0
    %1360 = vmatpush1.msra.mxu0 0.0
    %1361 = vmatprep.subr.mxu0 0.0
    %1362 = vmatpush1.msra.mxu0 0.0
    %1363 = vmatprep.subr.mxu0 0.0
    %1364 = vmatpush1.msra.mxu0 0.0
    %1365 = vmatprep.subr.mxu0 0.0
    %1366 = vmatpush1.msra.mxu0 0.0
    %1367 = vmatprep.subr.mxu0 0.0
    %1368 = vmatpush1.msra.mxu0 0.0
    %1369 = vmatprep.subr.mxu0 0.0
    %1370 = vmatpush1.msra.mxu0 0.0
    %1371 = vmatprep.subr.mxu0 0.0
    %1372 = vmatpush1.msra.mxu0 0.0
    %1373 = vmatprep.subr.mxu0 0.0
    %1374 = vmatpush1.msra.mxu0 0.0
    %1375 = vmatprep.subr.mxu0 0.0
    %1376 = vmatpush1.msra.mxu0 0.0
    %1377 = vmatprep.subr.mxu0 0.0
    %1378 = vmatpush1.msra.mxu0 0.0
    %1379 = vmatprep.subr.mxu0 0.0
    %1380 = vmatpush1.msra.mxu0 0.0
    %1381 = vmatprep.subr.mxu0 0.0
    %1382 = vmatpush1.msra.mxu0 0.0
    %1383 = vmatprep.subr.mxu0 0.0
    %1384 = vmatpush1.msra.mxu0 0.0
    %1385 = vmatprep.subr.mxu0 0.0
    %1386 = vmatpush1.msra.mxu0 0.0
    %1387 = vmatprep.subr.mxu0 0.0
    %1388 = vmatpush1.msra.mxu0 0.0
    %1389 = vmatprep.mubr.f32.mxu0 0.0
    %1390 = vmatmul.mubr.f32.gmra.mrb[0].mxu0 %v1323
    %v1391 = vpop.f32.mrb[0].mxu0
    %v1392 = vadd.f32 %v1317, %v1391
    %v1393 = vpop.f32.mrb[0].mxu0
    %1394 = vdwg.mxu0
    %v1395 = vadd.f32 %v1392, %v242
    %v1396 = vxor.u32 %v1395, 2147483648
    %v1397 = vmul.f32 %v1396, 1.442695
    %v1398 = vpow.pop %v1397
    %v1399 = vadd.f32 %v1398, 1.0
    %v1400 = vrcp.pop %v1399
    %v1401 = vmul.f32 1.0, %v1400
    %v1402 = vtanh.pop %v1395
    %v1403 = vmul.f32 %v1401, %v1030
    %1405 = vrot.lane.b32.xlu0 %v1402, 64
    %v1406 = vpop.permute.xlu0 %1405
    %v1408 = vmul.f32 %v1401, %v1406
    %1410 = vrot.lane.b32.xlu0 %v1408, 32
    %v1411 = vpop.permute.xlu0 %1410
    %v1413 = vadd.f32 %v1403, %v1411
    %v1414 = vtanh.pop %v1413
    %1416 = vrot.lane.b32.xlu0 %v1414, 64
    %v1417 = vpop.permute.xlu0 %1416
    %v1419 = vmul.f32 %v1401, %v1417
    %1420 = vrot.lane.b32.xlu0 %v1210, 32
    %v1421 = vpop.permute.xlu0 %1420
    %v1422 = vsel %vm82, %v1421, 0
    %1424 = vmatprep.subr.mxu0 0.0
    %1425 = vmatpush1.msra.mxu0 %v74
    %1426 = vmatprep.subr.mxu0 0.0
    %1427 = vmatpush1.msra.mxu0 %v75
    %1428 = vmatprep.subr.mxu0 0.0
    %1429 = vmatpush1.msra.mxu0 %v76
    %1430 = vmatprep.subr.mxu0 0.0
    %1431 = vmatpush1.msra.mxu0 %v77
    %1432 = vmatprep.subr.mxu0 0.0
    %1433 = vmatpush1.msra.mxu0 0.0
    %1434 = vmatprep.subr.mxu0 0.0
    %1435 = vmatpush1.msra.mxu0 0.0
    %1436 = vmatprep.subr.mxu0 0.0
    %1437 = vmatpush1.msra.mxu0 0.0
    %1438 = vmatprep.subr.mxu0 0.0
    %1439 = vmatpush1.msra.mxu0 0.0
    %1440 = vmatprep.subr.mxu0 0.0
    %1441 = vmatpush1.msra.mxu0 0.0
    %1442 = vmatprep.subr.mxu0 0.0
    %1443 = vmatpush1.msra.mxu0 0.0
    %1444 = vmatprep.subr.mxu0 0.0
    %1445 = vmatpush1.msra.mxu0 0.0
    %1446 = vmatprep.subr.mxu0 0.0
    %1447 = vmatpush1.msra.mxu0 0.0
    %1448 = vmatprep.subr.mxu0 0.0
    %1449 = vmatpush1.msra.mxu0 0.0
    %1450 = vmatprep.subr.mxu0 0.0
    %1451 = vmatpush1.msra.mxu0 0.0
    %1452 = vmatprep.subr.mxu0 0.0
    %1453 = vmatpush1.msra.mxu0 0.0
    %1454 = vmatprep.subr.mxu0 0.0
    %1455 = vmatpush1.msra.mxu0 0.0
    %1456 = vmatprep.subr.mxu0 0.0
    %1457 = vmatpush1.msra.mxu0 0.0
    %1458 = vmatprep.subr.mxu0 0.0
    %1459 = vmatpush1.msra.mxu0 0.0
    %1460 = vmatprep.subr.mxu0 0.0
    %1461 = vmatpush1.msra.mxu0 0.0
    %1462 = vmatprep.subr.mxu0 0.0
    %1463 = vmatpush1.msra.mxu0 0.0
    %1464 = vmatprep.subr.mxu0 0.0
    %1465 = vmatpush1.msra.mxu0 0.0
    %1466 = vmatprep.subr.mxu0 0.0
    %1467 = vmatpush1.msra.mxu0 0.0
    %1468 = vmatprep.subr.mxu0 0.0
    %1469 = vmatpush1.msra.mxu0 0.0
    %1470 = vmatprep.subr.mxu0 0.0
    %1471 = vmatpush1.msra.mxu0 0.0
    %1472 = vmatprep.subr.mxu0 0.0
    %1473 = vmatpush1.msra.mxu0 0.0
    %1474 = vmatprep.subr.mxu0 0.0
    %1475 = vmatpush1.msra.mxu0 0.0
    %1476 = vmatprep.subr.mxu0 0.0
    %1477 = vmatpush1.msra.mxu0 0.0
    %1478 = vmatprep.subr.mxu0 0.0
    %1479 = vmatpush1.msra.mxu0 0.0
    %1480 = vmatprep.subr.mxu0 0.0
    %1481 = vmatpush1.msra.mxu0 0.0
    %1482 = vmatprep.subr.mxu0 0.0
    %1483 = vmatpush1.msra.mxu0 0.0
    %1484 = vmatprep.subr.mxu0 0.0
    %1485 = vmatpush1.msra.mxu0 0.0
    %1486 = vmatprep.subr.mxu0 0.0
    %1487 = vmatpush1.msra.mxu0 0.0
    %1488 = vmatprep.mubr.f32.mxu0 0.0
    %1489 = vmatmul.mubr.f32.gmra.mrb[0].mxu0 %v1422
    %v1490 = vpop.f32.mrb[0].mxu0
    %v1491 = vadd.f32 0.0, %v1490
    %v1492 = vpop.f32.mrb[0].mxu0
    %1493 = vdwg.mxu0
    %1495 = vrot.lane.b32.xlu0 %v1419, 32
    %v1496 = vpop.permute.xlu0 %1495
    %v1497 = vsel %vm82, %v1496, 0
    %1499 = vmatprep.subr.mxu0 0.0
    %1500 = vmatpush1.msra.mxu0 %v66
    %1501 = vmatprep.subr.mxu0 0.0
    %1502 = vmatpush1.msra.mxu0 %v67
    %1503 = vmatprep.subr.mxu0 0.0
    %1504 = vmatpush1.msra.mxu0 %v68
    %1505 = vmatprep.subr.mxu0 0.0
    %1506 = vmatpush1.msra.mxu0 %v69
    %1507 = vmatprep.subr.mxu0 0.0
    %1508 = vmatpush1.msra.mxu0 0.0
    %1509 = vmatprep.subr.mxu0 0.0
    %1510 = vmatpush1.msra.mxu0 0.0
    %1511 = vmatprep.subr.mxu0 0.0
    %1512 = vmatpush1.msra.mxu0 0.0
    %1513 = vmatprep.subr.mxu0 0.0
    %1514 = vmatpush1.msra.mxu0 0.0
    %1515 = vmatprep.subr.mxu0 0.0
    %1516 = vmatpush1.msra.mxu0 0.0
    %1517 = vmatprep.subr.mxu0 0.0
    %1518 = vmatpush1.msra.mxu0 0.0
    %1519 = vmatprep.subr.mxu0 0.0
    %1520 = vmatpush1.msra.mxu0 0.0
    %1521 = vmatprep.subr.mxu0 0.0
    %1522 = vmatpush1.msra.mxu0 0.0
    %1523 = vmatprep.subr.mxu0 0.0
    %1524 = vmatpush1.msra.mxu0 0.0
    %1525 = vmatprep.subr.mxu0 0.0
    %1526 = vmatpush1.msra.mxu0 0.0
    %1527 = vmatprep.subr.mxu0 0.0
    %1528 = vmatpush1.msra.mxu0 0.0
    %1529 = vmatprep.subr.mxu0 0.0
    %1530 = vmatpush1.msra.mxu0 0.0
    %1531 = vmatprep.subr.mxu0 0.0
    %1532 = vmatpush1.msra.mxu0 0.0
    %1533 = vmatprep.subr.mxu0 0.0
    %1534 = vmatpush1.msra.mxu0 0.0
    %1535 = vmatprep.subr.mxu0 0.0
    %1536 = vmatpush1.msra.mxu0 0.0
    %1537 = vmatprep.subr.mxu0 0.0
    %1538 = vmatpush1.msra.mxu0 0.0
    %1539 = vmatprep.subr.mxu0 0.0
    %1540 = vmatpush1.msra.mxu0 0.0
    %1541 = vmatprep.subr.mxu0 0.0
    %1542 = vmatpush1.msra.mxu0 0.0
    %1543 = vmatprep.subr.mxu0 0.0
    %1544 = vmatpush1.msra.mxu0 0.0
    %1545 = vmatprep.subr.mxu0 0.0
    %1546 = vmatpush1.msra.mxu0 0.0
    %1547 = vmatprep.subr.mxu0 0.0
    %1548 = vmatpush1.msra.mxu0 0.0
    %1549 = vmatprep.subr.mxu0 0.0
    %1550 = vmatpush1.msra.mxu0 0.0
    %1551 = vmatprep.subr.mxu0 0.0
    %1552 = vmatpush1.msra.mxu0 0.0
    %1553 = vmatprep.subr.mxu0 0.0
    %1554 = vmatpush1.msra.mxu0 0.0
    %1555 = vmatprep.subr.mxu0 0.0
    %1556 = vmatpush1.msra.mxu0 0.0
    %1557 = vmatprep.subr.mxu0 0.0
    %1558 = vmatpush1.msra.mxu0 0.0
    %1559 = vmatprep.subr.mxu0 0.0
    %1560 = vmatpush1.msra.mxu0 0.0
    %1561 = vmatprep.subr.mxu0 0.0
    %1562 = vmatpush1.msra.mxu0 0.0
    %1563 = vmatprep.mubr.f32.mxu0 0.0
    %1564 = vmatmul.mubr.f32.gmra.mrb[0].mxu0 %v1497
    %v1565 = vpop.f32.mrb[0].mxu0
    %v1566 = vadd.f32 %v1491, %v1565
    %v1567 = vpop.f32.mrb[0].mxu0
    %1568 = vdwg.mxu0
    %v1569 = vadd.f32 %v1566, %v418
    %v1570 = vxor.u32 %v1569, 2147483648
    %v1571 = vmul.f32 %v1570, 1.442695
    %v1572 = vpow.pop %v1571
    %v1573 = vadd.f32 %v1572, 1.0
    %v1574 = vrcp.pop %v1573
    %v1575 = vmul.f32 1.0, %v1574
    %v1576 = vtanh.pop %v1569
    %v1577 = vmul.f32 %v1575, %v1204
    %1579 = vrot.lane.b32.xlu0 %v1576, 64
    %v1580 = vpop.permute.xlu0 %1579
    %v1582 = vmul.f32 %v1575, %v1580
    %1584 = vrot.lane.b32.xlu0 %v1582, 32
    %v1585 = vpop.permute.xlu0 %1584
    %v1587 = vadd.f32 %v1577, %v1585
    %v1588 = vtanh.pop %v1587
    %1590 = vrot.lane.b32.xlu0 %v1588, 64
    %v1591 = vpop.permute.xlu0 %1590
    %v1593 = vmul.f32 %v1575, %v1591
    %v1596 = vunpack.c.l.s4 1966171168
    %v1597 = vunpack.c.0.s8 %v1596
    %v1598 = vlaneseq
    %v1599 = vshrl.u32 %v1598, 7
    %v1600 = vsub.s32 %v1597, %v1599
    %v1601 = vrot.slane %v1593, %v1600
    %v1602 = vcombine.high %v1601, %v1601
    %v1604 = vunpack.c.l.s4 1966171168
    %v1605 = vunpack.c.0.s8 %v1604
    %v1606 = vlaneseq
    %v1607 = vshrl.u32 %v1606, 7
    %v1608 = vsub.s32 %v1605, %v1607
    %v1609 = vrot.slane %v1601, %v1608
    %v1611 = vunpack.c.l.s4 1966171168
    %v1612 = vunpack.c.0.s8 %v1611
    %v1613 = vlaneseq
    %v1614 = vshrl.u32 %v1613, 7
    %v1615 = vsub.s32 %v1612, %v1614
    %v1616 = vrot.slane %v1602, %v1615
    %v1617 = vlaneseq
    %v1618 = vshrl.u32 %v1617, 7
    %v1619 = vsub.s32 0, %v1618
    %v1620 = vrot.slane %v1609, %v1619
    %v1621 = vlaneseq
    %v1622 = vshrl.u32 %v1621, 7
    %v1623 = vsub.s32 0, %v1622
    %v1624 = vrot.slane %v1616, %v1623
    %1625 = vrot.lane.b32.xlu0 %v1620, 32
    %v1626 = vpop.permute.xlu0 %1625
    %1627 = vrot.lane.b32.xlu0 %v1624, 32
    %v1628 = vpop.permute.xlu0 %1627
    %1631 = vst.msk [vmem:[#allocation2 + $0x3] sm:$0x1] %vm482, %v1626
    %1632 = vst.msk [vmem:[#allocation2 + $0xb] sm:$0x1] %vm482, %v1628
    %1633 = vmatprep.subr.mxu0 0.0
    %1634 = vmatpush1.msra.mxu0 %v70
    %1635 = vmatprep.subr.mxu0 0.0
    %1636 = vmatpush1.msra.mxu0 %v71
    %1637 = vmatprep.subr.mxu0 0.0
    %1638 = vmatpush1.msra.mxu0 %v72
    %1639 = vmatprep.subr.mxu0 0.0
    %1640 = vmatpush1.msra.mxu0 %v73
    %1641 = vmatprep.subr.mxu0 0.0
    %1642 = vmatpush1.msra.mxu0 0.0
    %1643 = vmatprep.subr.mxu0 0.0
    %1644 = vmatpush1.msra.mxu0 0.0
    %1645 = vmatprep.subr.mxu0 0.0
    %1646 = vmatpush1.msra.mxu0 0.0
    %1647 = vmatprep.subr.mxu0 0.0
    %1648 = vmatpush1.msra.mxu0 0.0
    %1649 = vmatprep.subr.mxu0 0.0
    %1650 = vmatpush1.msra.mxu0 0.0
    %1651 = vmatprep.subr.mxu0 0.0
    %1652 = vmatpush1.msra.mxu0 0.0
    %1653 = vmatprep.subr.mxu0 0.0
    %1654 = vmatpush1.msra.mxu0 0.0
    %1655 = vmatprep.subr.mxu0 0.0
    %1656 = vmatpush1.msra.mxu0 0.0
    %1657 = vmatprep.subr.mxu0 0.0
    %1658 = vmatpush1.msra.mxu0 0.0
    %1659 = vmatprep.subr.mxu0 0.0
    %1660 = vmatpush1.msra.mxu0 0.0
    %1661 = vmatprep.subr.mxu0 0.0
    %1662 = vmatpush1.msra.mxu0 0.0
    %1663 = vmatprep.subr.mxu0 0.0
    %1664 = vmatpush1.msra.mxu0 0.0
    %1665 = vmatprep.subr.mxu0 0.0
    %1666 = vmatpush1.msra.mxu0 0.0
    %1667 = vmatprep.subr.mxu0 0.0
    %1668 = vmatpush1.msra.mxu0 0.0
    %1669 = vmatprep.subr.mxu0 0.0
    %1670 = vmatpush1.msra.mxu0 0.0
    %1671 = vmatprep.subr.mxu0 0.0
    %1672 = vmatpush1.msra.mxu0 0.0
    %1673 = vmatprep.subr.mxu0 0.0
    %1674 = vmatpush1.msra.mxu0 0.0
    %1675 = vmatprep.subr.mxu0 0.0
    %1676 = vmatpush1.msra.mxu0 0.0
    %1677 = vmatprep.subr.mxu0 0.0
    %1678 = vmatpush1.msra.mxu0 0.0
    %1679 = vmatprep.subr.mxu0 0.0
    %1680 = vmatpush1.msra.mxu0 0.0
    %1681 = vmatprep.subr.mxu0 0.0
    %1682 = vmatpush1.msra.mxu0 0.0
    %1683 = vmatprep.subr.mxu0 0.0
    %1684 = vmatpush1.msra.mxu0 0.0
    %1685 = vmatprep.subr.mxu0 0.0
    %1686 = vmatpush1.msra.mxu0 0.0
    %1687 = vmatprep.subr.mxu0 0.0
    %1688 = vmatpush1.msra.mxu0 0.0
    %1689 = vmatprep.subr.mxu0 0.0
    %1690 = vmatpush1.msra.mxu0 0.0
    %1691 = vmatprep.subr.mxu0 0.0
    %1692 = vmatpush1.msra.mxu0 0.0
    %1693 = vmatprep.subr.mxu0 0.0
    %1694 = vmatpush1.msra.mxu0 0.0
    %1695 = vmatprep.subr.mxu0 0.0
    %1696 = vmatpush1.msra.mxu0 0.0
    %1697 = vmatprep.mubr.f32.mxu0 0.0
    %1698 = vmatmul.mubr.f32.gmra.mrb[0].mxu0 %v1497
    %v1699 = vpop.f32.mrb[0].mxu0
    %v1700 = vadd.f32 0.0, %v1699
    %v1701 = vpop.f32.mrb[0].mxu0
    %1702 = vdwg.mxu0
    %v1703 = vrot.slane %v80, 4
    %v1704 = vrot.slane %v81, 3
    %v1705 = vsel %vm159, %v1704, %v1703
    %v1706 = vsel %vm161, %v1705, 0
    %1708 = vmatprep.subr.mxu0 0.0
    %1709 = vmatpush1.msra.mxu0 %v166
    %1710 = vmatprep.subr.mxu0 0.0
    %1711 = vmatpush1.msra.mxu0 0.0
    %1712 = vmatprep.subr.mxu0 0.0
    %1713 = vmatpush1.msra.mxu0 0.0
    %1714 = vmatprep.subr.mxu0 0.0
    %1715 = vmatpush1.msra.mxu0 0.0
    %1716 = vmatprep.subr.mxu0 0.0
    %1717 = vmatpush1.msra.mxu0 0.0
    %1718 = vmatprep.subr.mxu0 0.0
    %1719 = vmatpush1.msra.mxu0 0.0
    %1720 = vmatprep.subr.mxu0 0.0
    %1721 = vmatpush1.msra.mxu0 0.0
    %1722 = vmatprep.subr.mxu0 0.0
    %1723 = vmatpush1.msra.mxu0 0.0
    %1724 = vmatprep.subr.mxu0 0.0
    %1725 = vmatpush1.msra.mxu0 0.0
    %1726 = vmatprep.subr.mxu0 0.0
    %1727 = vmatpush1.msra.mxu0 0.0
    %1728 = vmatprep.subr.mxu0 0.0
    %1729 = vmatpush1.msra.mxu0 0.0
    %1730 = vmatprep.subr.mxu0 0.0
    %1731 = vmatpush1.msra.mxu0 0.0
    %1732 = vmatprep.subr.mxu0 0.0
    %1733 = vmatpush1.msra.mxu0 0.0
    %1734 = vmatprep.subr.mxu0 0.0
    %1735 = vmatpush1.msra.mxu0 0.0
    %1736 = vmatprep.subr.mxu0 0.0
    %1737 = vmatpush1.msra.mxu0 0.0
    %1738 = vmatprep.subr.mxu0 0.0
    %1739 = vmatpush1.msra.mxu0 0.0
    %1740 = vmatprep.subr.mxu0 0.0
    %1741 = vmatpush1.msra.mxu0 0.0
    %1742 = vmatprep.subr.mxu0 0.0
    %1743 = vmatpush1.msra.mxu0 0.0
    %1744 = vmatprep.subr.mxu0 0.0
    %1745 = vmatpush1.msra.mxu0 0.0
    %1746 = vmatprep.subr.mxu0 0.0
    %1747 = vmatpush1.msra.mxu0 0.0
    %1748 = vmatprep.subr.mxu0 0.0
    %1749 = vmatpush1.msra.mxu0 0.0
    %1750 = vmatprep.subr.mxu0 0.0
    %1751 = vmatpush1.msra.mxu0 0.0
    %1752 = vmatprep.subr.mxu0 0.0
    %1753 = vmatpush1.msra.mxu0 0.0
    %1754 = vmatprep.subr.mxu0 0.0
    %1755 = vmatpush1.msra.mxu0 0.0
    %1756 = vmatprep.subr.mxu0 0.0
    %1757 = vmatpush1.msra.mxu0 0.0
    %1758 = vmatprep.subr.mxu0 0.0
    %1759 = vmatpush1.msra.mxu0 0.0
    %1760 = vmatprep.subr.mxu0 0.0
    %1761 = vmatpush1.msra.mxu0 0.0
    %1762 = vmatprep.subr.mxu0 0.0
    %1763 = vmatpush1.msra.mxu0 0.0
    %1764 = vmatprep.subr.mxu0 0.0
    %1765 = vmatpush1.msra.mxu0 0.0
    %1766 = vmatprep.subr.mxu0 0.0
    %1767 = vmatpush1.msra.mxu0 0.0
    %1768 = vmatprep.subr.mxu0 0.0
    %1769 = vmatpush1.msra.mxu0 0.0
    %1770 = vmatprep.subr.mxu0 0.0
    %1771 = vmatpush1.msra.mxu0 0.0
    %1772 = vmatprep.mubr.f32.mxu0 0.0
    %1773 = vmatmul.mubr.f32.gmra.mrb[0].mxu0 %v1706
    %v1774 = vpop.f32.mrb[0].mxu0
    %v1775 = vadd.f32 %v1700, %v1774
    %v1776 = vpop.f32.mrb[0].mxu0
    %1777 = vdwg.mxu0
    %v1778 = vadd.f32 %v1775, %v242
    %v1779 = vxor.u32 %v1778, 2147483648
    %v1780 = vmul.f32 %v1779, 1.442695
    %v1781 = vpow.pop %v1780
    %v1782 = vadd.f32 %v1781, 1.0
    %v1783 = vrcp.pop %v1782
    %v1784 = vmul.f32 1.0, %v1783
    %v1785 = vtanh.pop %v1778
    %v1786 = vmul.f32 %v1784, %v1413
    %1788 = vrot.lane.b32.xlu0 %v1785, 64
    %v1789 = vpop.permute.xlu0 %1788
    %v1791 = vmul.f32 %v1784, %v1789
    %1793 = vrot.lane.b32.xlu0 %v1791, 32
    %v1794 = vpop.permute.xlu0 %1793
    %v1796 = vadd.f32 %v1786, %v1794
    %v1797 = vtanh.pop %v1796
    %1799 = vrot.lane.b32.xlu0 %v1797, 64
    %v1800 = vpop.permute.xlu0 %1799
    %v1802 = vmul.f32 %v1784, %v1800
    %1803 = vrot.lane.b32.xlu0 %v1593, 32
    %v1804 = vpop.permute.xlu0 %1803
    %v1805 = vsel %vm82, %v1804, 0
    %1807 = vmatprep.subr.mxu0 0.0
    %1808 = vmatpush1.msra.mxu0 %v74
    %1809 = vmatprep.subr.mxu0 0.0
    %1810 = vmatpush1.msra.mxu0 %v75
    %1811 = vmatprep.subr.mxu0 0.0
    %1812 = vmatpush1.msra.mxu0 %v76
    %1813 = vmatprep.subr.mxu0 0.0
    %1814 = vmatpush1.msra.mxu0 %v77
    %1815 = vmatprep.subr.mxu0 0.0
    %1816 = vmatpush1.msra.mxu0 0.0
    %1817 = vmatprep.subr.mxu0 0.0
    %1818 = vmatpush1.msra.mxu0 0.0
    %1819 = vmatprep.subr.mxu0 0.0
    %1820 = vmatpush1.msra.mxu0 0.0
    %1821 = vmatprep.subr.mxu0 0.0
    %1822 = vmatpush1.msra.mxu0 0.0
    %1823 = vmatprep.subr.mxu0 0.0
    %1824 = vmatpush1.msra.mxu0 0.0
    %1825 = vmatprep.subr.mxu0 0.0
    %1826 = vmatpush1.msra.mxu0 0.0
    %1827 = vmatprep.subr.mxu0 0.0
    %1828 = vmatpush1.msra.mxu0 0.0
    %1829 = vmatprep.subr.mxu0 0.0
    %1830 = vmatpush1.msra.mxu0 0.0
    %1831 = vmatprep.subr.mxu0 0.0
    %1832 = vmatpush1.msra.mxu0 0.0
    %1833 = vmatprep.subr.mxu0 0.0
    %1834 = vmatpush1.msra.mxu0 0.0
    %1835 = vmatprep.subr.mxu0 0.0
    %1836 = vmatpush1.msra.mxu0 0.0
    %1837 = vmatprep.subr.mxu0 0.0
    %1838 = vmatpush1.msra.mxu0 0.0
    %1839 = vmatprep.subr.mxu0 0.0
    %1840 = vmatpush1.msra.mxu0 0.0
    %1841 = vmatprep.subr.mxu0 0.0
    %1842 = vmatpush1.msra.mxu0 0.0
    %1843 = vmatprep.subr.mxu0 0.0
    %1844 = vmatpush1.msra.mxu0 0.0
    %1845 = vmatprep.subr.mxu0 0.0
    %1846 = vmatpush1.msra.mxu0 0.0
    %1847 = vmatprep.subr.mxu0 0.0
    %1848 = vmatpush1.msra.mxu0 0.0
    %1849 = vmatprep.subr.mxu0 0.0
    %1850 = vmatpush1.msra.mxu0 0.0
    %1851 = vmatprep.subr.mxu0 0.0
    %1852 = vmatpush1.msra.mxu0 0.0
    %1853 = vmatprep.subr.mxu0 0.0
    %1854 = vmatpush1.msra.mxu0 0.0
    %1855 = vmatprep.subr.mxu0 0.0
    %1856 = vmatpush1.msra.mxu0 0.0
    %1857 = vmatprep.subr.mxu0 0.0
    %1858 = vmatpush1.msra.mxu0 0.0
    %1859 = vmatprep.subr.mxu0 0.0
    %1860 = vmatpush1.msra.mxu0 0.0
    %1861 = vmatprep.subr.mxu0 0.0
    %1862 = vmatpush1.msra.mxu0 0.0
    %1863 = vmatprep.subr.mxu0 0.0
    %1864 = vmatpush1.msra.mxu0 0.0
    %1865 = vmatprep.subr.mxu0 0.0
    %1866 = vmatpush1.msra.mxu0 0.0
    %1867 = vmatprep.subr.mxu0 0.0
    %1868 = vmatpush1.msra.mxu0 0.0
    %1869 = vmatprep.subr.mxu0 0.0
    %1870 = vmatpush1.msra.mxu0 0.0
    %1871 = vmatprep.mubr.f32.mxu0 0.0
    %1872 = vmatmul.mubr.f32.gmra.mrb[0].mxu0 %v1805
    %v1873 = vpop.f32.mrb[0].mxu0
    %v1874 = vadd.f32 0.0, %v1873
    %v1875 = vpop.f32.mrb[0].mxu0
    %1876 = vdwg.mxu0
    %1878 = vrot.lane.b32.xlu0 %v1802, 32
    %v1879 = vpop.permute.xlu0 %1878
    %v1880 = vsel %vm82, %v1879, 0
    %1882 = vmatprep.subr.mxu0 0.0
    %1883 = vmatpush1.msra.mxu0 %v66
    %1884 = vmatprep.subr.mxu0 0.0
    %1885 = vmatpush1.msra.mxu0 %v67
    %1886 = vmatprep.subr.mxu0 0.0
    %1887 = vmatpush1.msra.mxu0 %v68
    %1888 = vmatprep.subr.mxu0 0.0
    %1889 = vmatpush1.msra.mxu0 %v69
    %1890 = vmatprep.subr.mxu0 0.0
    %1891 = vmatpush1.msra.mxu0 0.0
    %1892 = vmatprep.subr.mxu0 0.0
    %1893 = vmatpush1.msra.mxu0 0.0
    %1894 = vmatprep.subr.mxu0 0.0
    %1895 = vmatpush1.msra.mxu0 0.0
    %1896 = vmatprep.subr.mxu0 0.0
    %1897 = vmatpush1.msra.mxu0 0.0
    %1898 = vmatprep.subr.mxu0 0.0
    %1899 = vmatpush1.msra.mxu0 0.0
    %1900 = vmatprep.subr.mxu0 0.0
    %1901 = vmatpush1.msra.mxu0 0.0
    %1902 = vmatprep.subr.mxu0 0.0
    %1903 = vmatpush1.msra.mxu0 0.0
    %1904 = vmatprep.subr.mxu0 0.0
    %1905 = vmatpush1.msra.mxu0 0.0
    %1906 = vmatprep.subr.mxu0 0.0
    %1907 = vmatpush1.msra.mxu0 0.0
    %1908 = vmatprep.subr.mxu0 0.0
    %1909 = vmatpush1.msra.mxu0 0.0
    %1910 = vmatprep.subr.mxu0 0.0
    %1911 = vmatpush1.msra.mxu0 0.0
    %1912 = vmatprep.subr.mxu0 0.0
    %1913 = vmatpush1.msra.mxu0 0.0
    %1914 = vmatprep.subr.mxu0 0.0
    %1915 = vmatpush1.msra.mxu0 0.0
    %1916 = vmatprep.subr.mxu0 0.0
    %1917 = vmatpush1.msra.mxu0 0.0
    %1918 = vmatprep.subr.mxu0 0.0
    %1919 = vmatpush1.msra.mxu0 0.0
    %1920 = vmatprep.subr.mxu0 0.0
    %1921 = vmatpush1.msra.mxu0 0.0
    %1922 = vmatprep.subr.mxu0 0.0
    %1923 = vmatpush1.msra.mxu0 0.0
    %1924 = vmatprep.subr.mxu0 0.0
    %1925 = vmatpush1.msra.mxu0 0.0
    %1926 = vmatprep.subr.mxu0 0.0
    %1927 = vmatpush1.msra.mxu0 0.0
    %1928 = vmatprep.subr.mxu0 0.0
    %1929 = vmatpush1.msra.mxu0 0.0
    %1930 = vmatprep.subr.mxu0 0.0
    %1931 = vmatpush1.msra.mxu0 0.0
    %1932 = vmatprep.subr.mxu0 0.0
    %1933 = vmatpush1.msra.mxu0 0.0
    %1934 = vmatprep.subr.mxu0 0.0
    %1935 = vmatpush1.msra.mxu0 0.0
    %1936 = vmatprep.subr.mxu0 0.0
    %1937 = vmatpush1.msra.mxu0 0.0
    %1938 = vmatprep.subr.mxu0 0.0
    %1939 = vmatpush1.msra.mxu0 0.0
    %1940 = vmatprep.subr.mxu0 0.0
    %1941 = vmatpush1.msra.mxu0 0.0
    %1942 = vmatprep.subr.mxu0 0.0
    %1943 = vmatpush1.msra.mxu0 0.0
    %1944 = vmatprep.subr.mxu0 0.0
    %1945 = vmatpush1.msra.mxu0 0.0
    %1946 = vmatprep.mubr.f32.mxu0 0.0
    %1947 = vmatmul.mubr.f32.gmra.mrb[0].mxu0 %v1880
    %v1948 = vpop.f32.mrb[0].mxu0
    %v1949 = vadd.f32 %v1874, %v1948
    %v1950 = vpop.f32.mrb[0].mxu0
    %1951 = vdwg.mxu0
    %v1952 = vadd.f32 %v1949, %v418
    %v1953 = vxor.u32 %v1952, 2147483648
    %v1954 = vmul.f32 %v1953, 1.442695
    %v1955 = vpow.pop %v1954
    %v1956 = vadd.f32 %v1955, 1.0
    %v1957 = vrcp.pop %v1956
    %v1958 = vmul.f32 1.0, %v1957
    %v1959 = vtanh.pop %v1952
    %v1960 = vmul.f32 %v1958, %v1587
    %1962 = vrot.lane.b32.xlu0 %v1959, 64
    %v1963 = vpop.permute.xlu0 %1962
    %v1965 = vmul.f32 %v1958, %v1963
    %1967 = vrot.lane.b32.xlu0 %v1965, 32
    %v1968 = vpop.permute.xlu0 %1967
    %v1970 = vadd.f32 %v1960, %v1968
    %v1971 = vtanh.pop %v1970
    %1973 = vrot.lane.b32.xlu0 %v1971, 64
    %v1974 = vpop.permute.xlu0 %1973
    %v1976 = vmul.f32 %v1958, %v1974
    %v1979 = vunpack.c.l.s4 1966171168
    %v1980 = vunpack.c.0.s8 %v1979
    %v1981 = vlaneseq
    %v1982 = vshrl.u32 %v1981, 7
    %v1983 = vsub.s32 %v1980, %v1982
    %v1984 = vrot.slane %v1976, %v1983
    %v1985 = vcombine.high %v1984, %v1984
    %v1987 = vunpack.c.l.s4 1966171168
    %v1988 = vunpack.c.0.s8 %v1987
    %v1989 = vlaneseq
    %v1990 = vshrl.u32 %v1989, 7
    %v1991 = vsub.s32 %v1988, %v1990
    %v1992 = vrot.slane %v1984, %v1991
    %v1994 = vunpack.c.l.s4 1966171168
    %v1995 = vunpack.c.0.s8 %v1994
    %v1996 = vlaneseq
    %v1997 = vshrl.u32 %v1996, 7
    %v1998 = vsub.s32 %v1995, %v1997
    %v1999 = vrot.slane %v1985, %v1998
    %v2000 = vlaneseq
    %v2001 = vshrl.u32 %v2000, 7
    %v2002 = vsub.s32 0, %v2001
    %v2003 = vrot.slane %v1992, %v2002
    %v2004 = vlaneseq
    %v2005 = vshrl.u32 %v2004, 7
    %v2006 = vsub.s32 0, %v2005
    %v2007 = vrot.slane %v1999, %v2006
    %2008 = vrot.lane.b32.xlu0 %v2003, 32
    %v2009 = vpop.permute.xlu0 %2008
    %2010 = vrot.lane.b32.xlu0 %v2007, 32
    %v2011 = vpop.permute.xlu0 %2010
    %2014 = vst.msk [vmem:[#allocation2 + $0x4] sm:$0x1] %vm482, %v2009
    %2015 = vst.msk [vmem:[#allocation2 + $0xc] sm:$0x1] %vm482, %v2011
    %2016 = vmatprep.subr.mxu0 0.0
    %2017 = vmatpush1.msra.mxu0 %v70
    %2018 = vmatprep.subr.mxu0 0.0
    %2019 = vmatpush1.msra.mxu0 %v71
    %2020 = vmatprep.subr.mxu0 0.0
    %2021 = vmatpush1.msra.mxu0 %v72
    %2022 = vmatprep.subr.mxu0 0.0
    %2023 = vmatpush1.msra.mxu0 %v73
    %2024 = vmatprep.subr.mxu0 0.0
    %2025 = vmatpush1.msra.mxu0 0.0
    %2026 = vmatprep.subr.mxu0 0.0
    %2027 = vmatpush1.msra.mxu0 0.0
    %2028 = vmatprep.subr.mxu0 0.0
    %2029 = vmatpush1.msra.mxu0 0.0
    %2030 = vmatprep.subr.mxu0 0.0
    %2031 = vmatpush1.msra.mxu0 0.0
    %2032 = vmatprep.subr.mxu0 0.0
    %2033 = vmatpush1.msra.mxu0 0.0
    %2034 = vmatprep.subr.mxu0 0.0
    %2035 = vmatpush1.msra.mxu0 0.0
    %2036 = vmatprep.subr.mxu0 0.0
    %2037 = vmatpush1.msra.mxu0 0.0
    %2038 = vmatprep.subr.mxu0 0.0
    %2039 = vmatpush1.msra.mxu0 0.0
    %2040 = vmatprep.subr.mxu0 0.0
    %2041 = vmatpush1.msra.mxu0 0.0
    %2042 = vmatprep.subr.mxu0 0.0
    %2043 = vmatpush1.msra.mxu0 0.0
    %2044 = vmatprep.subr.mxu0 0.0
    %2045 = vmatpush1.msra.mxu0 0.0
    %2046 = vmatprep.subr.mxu0 0.0
    %2047 = vmatpush1.msra.mxu0 0.0
    %2048 = vmatprep.subr.mxu0 0.0
    %2049 = vmatpush1.msra.mxu0 0.0
    %2050 = vmatprep.subr.mxu0 0.0
    %2051 = vmatpush1.msra.mxu0 0.0
    %2052 = vmatprep.subr.mxu0 0.0
    %2053 = vmatpush1.msra.mxu0 0.0
    %2054 = vmatprep.subr.mxu0 0.0
    %2055 = vmatpush1.msra.mxu0 0.0
    %2056 = vmatprep.subr.mxu0 0.0
    %2057 = vmatpush1.msra.mxu0 0.0
    %2058 = vmatprep.subr.mxu0 0.0
    %2059 = vmatpush1.msra.mxu0 0.0
    %2060 = vmatprep.subr.mxu0 0.0
    %2061 = vmatpush1.msra.mxu0 0.0
    %2062 = vmatprep.subr.mxu0 0.0
    %2063 = vmatpush1.msra.mxu0 0.0
    %2064 = vmatprep.subr.mxu0 0.0
    %2065 = vmatpush1.msra.mxu0 0.0
    %2066 = vmatprep.subr.mxu0 0.0
    %2067 = vmatpush1.msra.mxu0 0.0
    %2068 = vmatprep.subr.mxu0 0.0
    %2069 = vmatpush1.msra.mxu0 0.0
    %2070 = vmatprep.subr.mxu0 0.0
    %2071 = vmatpush1.msra.mxu0 0.0
    %2072 = vmatprep.subr.mxu0 0.0
    %2073 = vmatpush1.msra.mxu0 0.0
    %2074 = vmatprep.subr.mxu0 0.0
    %2075 = vmatpush1.msra.mxu0 0.0
    %2076 = vmatprep.subr.mxu0 0.0
    %2077 = vmatpush1.msra.mxu0 0.0
    %2078 = vmatprep.subr.mxu0 0.0
    %2079 = vmatpush1.msra.mxu0 0.0
    %2080 = vmatprep.mubr.f32.mxu0 0.0
    %2081 = vmatmul.mubr.f32.gmra.mrb[0].mxu0 %v1880
    %v2082 = vpop.f32.mrb[0].mxu0
    %v2083 = vadd.f32 0.0, %v2082
    %v2084 = vpop.f32.mrb[0].mxu0
    %2085 = vdwg.mxu0
    %v2086 = vrot.slane %v80, 5
    %v2087 = vrot.slane %v81, 4
    %v2088 = vsel %vm159, %v2087, %v2086
    %v2089 = vsel %vm161, %v2088, 0
    %2091 = vmatprep.subr.mxu0 0.0
    %2092 = vmatpush1.msra.mxu0 %v166
    %2093 = vmatprep.subr.mxu0 0.0
    %2094 = vmatpush1.msra.mxu0 0.0
    %2095 = vmatprep.subr.mxu0 0.0
    %2096 = vmatpush1.msra.mxu0 0.0
    %2097 = vmatprep.subr.mxu0 0.0
    %2098 = vmatpush1.msra.mxu0 0.0
    %2099 = vmatprep.subr.mxu0 0.0
    %2100 = vmatpush1.msra.mxu0 0.0
    %2101 = vmatprep.subr.mxu0 0.0
    %2102 = vmatpush1.msra.mxu0 0.0
    %2103 = vmatprep.subr.mxu0 0.0
    %2104 = vmatpush1.msra.mxu0 0.0
    %2105 = vmatprep.subr.mxu0 0.0
    %2106 = vmatpush1.msra.mxu0 0.0
    %2107 = vmatprep.subr.mxu0 0.0
    %2108 = vmatpush1.msra.mxu0 0.0
    %2109 = vmatprep.subr.mxu0 0.0
    %2110 = vmatpush1.msra.mxu0 0.0
    %2111 = vmatprep.subr.mxu0 0.0
    %2112 = vmatpush1.msra.mxu0 0.0
    %2113 = vmatprep.subr.mxu0 0.0
    %2114 = vmatpush1.msra.mxu0 0.0
    %2115 = vmatprep.subr.mxu0 0.0
    %2116 = vmatpush1.msra.mxu0 0.0
    %2117 = vmatprep.subr.mxu0 0.0
    %2118 = vmatpush1.msra.mxu0 0.0
    %2119 = vmatprep.subr.mxu0 0.0
    %2120 = vmatpush1.msra.mxu0 0.0
    %2121 = vmatprep.subr.mxu0 0.0
    %2122 = vmatpush1.msra.mxu0 0.0
    %2123 = vmatprep.subr.mxu0 0.0
    %2124 = vmatpush1.msra.mxu0 0.0
    %2125 = vmatprep.subr.mxu0 0.0
    %2126 = vmatpush1.msra.mxu0 0.0
    %2127 = vmatprep.subr.mxu0 0.0
    %2128 = vmatpush1.msra.mxu0 0.0
    %2129 = vmatprep.subr.mxu0 0.0
    %2130 = vmatpush1.msra.mxu0 0.0
    %2131 = vmatprep.subr.mxu0 0.0
    %2132 = vmatpush1.msra.mxu0 0.0
    %2133 = vmatprep.subr.mxu0 0.0
    %2134 = vmatpush1.msra.mxu0 0.0
    %2135 = vmatprep.subr.mxu0 0.0
    %2136 = vmatpush1.msra.mxu0 0.0
    %2137 = vmatprep.subr.mxu0 0.0
    %2138 = vmatpush1.msra.mxu0 0.0
    %2139 = vmatprep.subr.mxu0 0.0
    %2140 = vmatpush1.msra.mxu0 0.0
    %2141 = vmatprep.subr.mxu0 0.0
    %2142 = vmatpush1.msra.mxu0 0.0
    %2143 = vmatprep.subr.mxu0 0.0
    %2144 = vmatpush1.msra.mxu0 0.0
    %2145 = vmatprep.subr.mxu0 0.0
    %2146 = vmatpush1.msra.mxu0 0.0
    %2147 = vmatprep.subr.mxu0 0.0
    %2148 = vmatpush1.msra.mxu0 0.0
    %2149 = vmatprep.subr.mxu0 0.0
    %2150 = vmatpush1.msra.mxu0 0.0
    %2151 = vmatprep.subr.mxu0 0.0
    %2152 = vmatpush1.msra.mxu0 0.0
    %2153 = vmatprep.subr.mxu0 0.0
    %2154 = vmatpush1.msra.mxu0 0.0
    %2155 = vmatprep.mubr.f32.mxu0 0.0
    %2156 = vmatmul.mubr.f32.gmra.mrb[0].mxu0 %v2089
    %v2157 = vpop.f32.mrb[0].mxu0
    %v2158 = vadd.f32 %v2083, %v2157
    %v2159 = vpop.f32.mrb[0].mxu0
    %2160 = vdwg.mxu0
    %v2161 = vadd.f32 %v2158, %v242
    %v2162 = vxor.u32 %v2161, 2147483648
    %v2163 = vmul.f32 %v2162, 1.442695
    %v2164 = vpow.pop %v2163
    %v2165 = vadd.f32 %v2164, 1.0
    %v2166 = vrcp.pop %v2165
    %v2167 = vmul.f32 1.0, %v2166
    %v2168 = vtanh.pop %v2161
    %v2169 = vmul.f32 %v2167, %v1796
    %2171 = vrot.lane.b32.xlu0 %v2168, 64
    %v2172 = vpop.permute.xlu0 %2171
    %v2174 = vmul.f32 %v2167, %v2172
    %2176 = vrot.lane.b32.xlu0 %v2174, 32
    %v2177 = vpop.permute.xlu0 %2176
    %v2179 = vadd.f32 %v2169, %v2177
    %v2180 = vtanh.pop %v2179
    %2182 = vrot.lane.b32.xlu0 %v2180, 64
    %v2183 = vpop.permute.xlu0 %2182
    %v2185 = vmul.f32 %v2167, %v2183
    %2186 = vrot.lane.b32.xlu0 %v1976, 32
    %v2187 = vpop.permute.xlu0 %2186
    %v2188 = vsel %vm82, %v2187, 0
    %2190 = vmatprep.subr.mxu0 0.0
    %2191 = vmatpush1.msra.mxu0 %v74
    %2192 = vmatprep.subr.mxu0 0.0
    %2193 = vmatpush1.msra.mxu0 %v75
    %2194 = vmatprep.subr.mxu0 0.0
    %2195 = vmatpush1.msra.mxu0 %v76
    %2196 = vmatprep.subr.mxu0 0.0
    %2197 = vmatpush1.msra.mxu0 %v77
    %2198 = vmatprep.subr.mxu0 0.0
    %2199 = vmatpush1.msra.mxu0 0.0
    %2200 = vmatprep.subr.mxu0 0.0
    %2201 = vmatpush1.msra.mxu0 0.0
    %2202 = vmatprep.subr.mxu0 0.0
    %2203 = vmatpush1.msra.mxu0 0.0
    %2204 = vmatprep.subr.mxu0 0.0
    %2205 = vmatpush1.msra.mxu0 0.0
    %2206 = vmatprep.subr.mxu0 0.0
    %2207 = vmatpush1.msra.mxu0 0.0
    %2208 = vmatprep.subr.mxu0 0.0
    %2209 = vmatpush1.msra.mxu0 0.0
    %2210 = vmatprep.subr.mxu0 0.0
    %2211 = vmatpush1.msra.mxu0 0.0
    %2212 = vmatprep.subr.mxu0 0.0
    %2213 = vmatpush1.msra.mxu0 0.0
    %2214 = vmatprep.subr.mxu0 0.0
    %2215 = vmatpush1.msra.mxu0 0.0
    %2216 = vmatprep.subr.mxu0 0.0
    %2217 = vmatpush1.msra.mxu0 0.0
    %2218 = vmatprep.subr.mxu0 0.0
    %2219 = vmatpush1.msra.mxu0 0.0
    %2220 = vmatprep.subr.mxu0 0.0
    %2221 = vmatpush1.msra.mxu0 0.0
    %2222 = vmatprep.subr.mxu0 0.0
    %2223 = vmatpush1.msra.mxu0 0.0
    %2224 = vmatprep.subr.mxu0 0.0
    %2225 = vmatpush1.msra.mxu0 0.0
    %2226 = vmatprep.subr.mxu0 0.0
    %2227 = vmatpush1.msra.mxu0 0.0
    %2228 = vmatprep.subr.mxu0 0.0
    %2229 = vmatpush1.msra.mxu0 0.0
    %2230 = vmatprep.subr.mxu0 0.0
    %2231 = vmatpush1.msra.mxu0 0.0
    %2232 = vmatprep.subr.mxu0 0.0
    %2233 = vmatpush1.msra.mxu0 0.0
    %2234 = vmatprep.subr.mxu0 0.0
    %2235 = vmatpush1.msra.mxu0 0.0
    %2236 = vmatprep.subr.mxu0 0.0
    %2237 = vmatpush1.msra.mxu0 0.0
    %2238 = vmatprep.subr.mxu0 0.0
    %2239 = vmatpush1.msra.mxu0 0.0
    %2240 = vmatprep.subr.mxu0 0.0
    %2241 = vmatpush1.msra.mxu0 0.0
    %2242 = vmatprep.subr.mxu0 0.0
    %2243 = vmatpush1.msra.mxu0 0.0
    %2244 = vmatprep.subr.mxu0 0.0
    %2245 = vmatpush1.msra.mxu0 0.0
    %2246 = vmatprep.subr.mxu0 0.0
    %2247 = vmatpush1.msra.mxu0 0.0
    %2248 = vmatprep.subr.mxu0 0.0
    %2249 = vmatpush1.msra.mxu0 0.0
    %2250 = vmatprep.subr.mxu0 0.0
    %2251 = vmatpush1.msra.mxu0 0.0
    %2252 = vmatprep.subr.mxu0 0.0
    %2253 = vmatpush1.msra.mxu0 0.0
    %2254 = vmatprep.mubr.f32.mxu0 0.0
    %2255 = vmatmul.mubr.f32.gmra.mrb[0].mxu0 %v2188
    %v2256 = vpop.f32.mrb[0].mxu0
    %v2257 = vadd.f32 0.0, %v2256
    %v2258 = vpop.f32.mrb[0].mxu0
    %2259 = vdwg.mxu0
    %2261 = vrot.lane.b32.xlu0 %v2185, 32
    %v2262 = vpop.permute.xlu0 %2261
    %v2263 = vsel %vm82, %v2262, 0
    %2265 = vmatprep.subr.mxu0 0.0
    %2266 = vmatpush1.msra.mxu0 %v66
    %2267 = vmatprep.subr.mxu0 0.0
    %2268 = vmatpush1.msra.mxu0 %v67
    %2269 = vmatprep.subr.mxu0 0.0
    %2270 = vmatpush1.msra.mxu0 %v68
    %2271 = vmatprep.subr.mxu0 0.0
    %2272 = vmatpush1.msra.mxu0 %v69
    %2273 = vmatprep.subr.mxu0 0.0
    %2274 = vmatpush1.msra.mxu0 0.0
    %2275 = vmatprep.subr.mxu0 0.0
    %2276 = vmatpush1.msra.mxu0 0.0
    %2277 = vmatprep.subr.mxu0 0.0
    %2278 = vmatpush1.msra.mxu0 0.0
    %2279 = vmatprep.subr.mxu0 0.0
    %2280 = vmatpush1.msra.mxu0 0.0
    %2281 = vmatprep.subr.mxu0 0.0
    %2282 = vmatpush1.msra.mxu0 0.0
    %2283 = vmatprep.subr.mxu0 0.0
    %2284 = vmatpush1.msra.mxu0 0.0
    %2285 = vmatprep.subr.mxu0 0.0
    %2286 = vmatpush1.msra.mxu0 0.0
    %2287 = vmatprep.subr.mxu0 0.0
    %2288 = vmatpush1.msra.mxu0 0.0
    %2289 = vmatprep.subr.mxu0 0.0
    %2290 = vmatpush1.msra.mxu0 0.0
    %2291 = vmatprep.subr.mxu0 0.0
    %2292 = vmatpush1.msra.mxu0 0.0
    %2293 = vmatprep.subr.mxu0 0.0
    %2294 = vmatpush1.msra.mxu0 0.0
    %2295 = vmatprep.subr.mxu0 0.0
    %2296 = vmatpush1.msra.mxu0 0.0
    %2297 = vmatprep.subr.mxu0 0.0
    %2298 = vmatpush1.msra.mxu0 0.0
    %2299 = vmatprep.subr.mxu0 0.0
    %2300 = vmatpush1.msra.mxu0 0.0
    %2301 = vmatprep.subr.mxu0 0.0
    %2302 = vmatpush1.msra.mxu0 0.0
    %2303 = vmatprep.subr.mxu0 0.0
    %2304 = vmatpush1.msra.mxu0 0.0
    %2305 = vmatprep.subr.mxu0 0.0
    %2306 = vmatpush1.msra.mxu0 0.0
    %2307 = vmatprep.subr.mxu0 0.0
    %2308 = vmatpush1.msra.mxu0 0.0
    %2309 = vmatprep.subr.mxu0 0.0
    %2310 = vmatpush1.msra.mxu0 0.0
    %2311 = vmatprep.subr.mxu0 0.0
    %2312 = vmatpush1.msra.mxu0 0.0
    %2313 = vmatprep.subr.mxu0 0.0
    %2314 = vmatpush1.msra.mxu0 0.0
    %2315 = vmatprep.subr.mxu0 0.0
    %2316 = vmatpush1.msra.mxu0 0.0
    %2317 = vmatprep.subr.mxu0 0.0
    %2318 = vmatpush1.msra.mxu0 0.0
    %2319 = vmatprep.subr.mxu0 0.0
    %2320 = vmatpush1.msra.mxu0 0.0
    %2321 = vmatprep.subr.mxu0 0.0
    %2322 = vmatpush1.msra.mxu0 0.0
    %2323 = vmatprep.subr.mxu0 0.0
    %2324 = vmatpush1.msra.mxu0 0.0
    %2325 = vmatprep.subr.mxu0 0.0
    %2326 = vmatpush1.msra.mxu0 0.0
    %2327 = vmatprep.subr.mxu0 0.0
    %2328 = vmatpush1.msra.mxu0 0.0
    %2329 = vmatprep.mubr.f32.mxu0 0.0
    %2330 = vmatmul.mubr.f32.gmra.mrb[0].mxu0 %v2263
    %v2331 = vpop.f32.mrb[0].mxu0
    %v2332 = vadd.f32 %v2257, %v2331
    %v2333 = vpop.f32.mrb[0].mxu0
    %2334 = vdwg.mxu0
    %v2335 = vadd.f32 %v2332, %v418
    %v2336 = vxor.u32 %v2335, 2147483648
    %v2337 = vmul.f32 %v2336, 1.442695
    %v2338 = vpow.pop %v2337
    %v2339 = vadd.f32 %v2338, 1.0
    %v2340 = vrcp.pop %v2339
    %v2341 = vmul.f32 1.0, %v2340
    %v2342 = vtanh.pop %v2335
    %v2343 = vmul.f32 %v2341, %v1970
    %2345 = vrot.lane.b32.xlu0 %v2342, 64
    %v2346 = vpop.permute.xlu0 %2345
    %v2348 = vmul.f32 %v2341, %v2346
    %2350 = vrot.lane.b32.xlu0 %v2348, 32
    %v2351 = vpop.permute.xlu0 %2350
    %v2353 = vadd.f32 %v2343, %v2351
    %v2354 = vtanh.pop %v2353
    %2356 = vrot.lane.b32.xlu0 %v2354, 64
    %v2357 = vpop.permute.xlu0 %2356
    %v2359 = vmul.f32 %v2341, %v2357
    %v2362 = vunpack.c.l.s4 1966171168
    %v2363 = vunpack.c.0.s8 %v2362
    %v2364 = vlaneseq
    %v2365 = vshrl.u32 %v2364, 7
    %v2366 = vsub.s32 %v2363, %v2365
    %v2367 = vrot.slane %v2359, %v2366
    %v2368 = vcombine.high %v2367, %v2367
    %v2370 = vunpack.c.l.s4 1966171168
    %v2371 = vunpack.c.0.s8 %v2370
    %v2372 = vlaneseq
    %v2373 = vshrl.u32 %v2372, 7
    %v2374 = vsub.s32 %v2371, %v2373
    %v2375 = vrot.slane %v2367, %v2374
    %v2377 = vunpack.c.l.s4 1966171168
    %v2378 = vunpack.c.0.s8 %v2377
    %v2379 = vlaneseq
    %v2380 = vshrl.u32 %v2379, 7
    %v2381 = vsub.s32 %v2378, %v2380
    %v2382 = vrot.slane %v2368, %v2381
    %v2383 = vlaneseq
    %v2384 = vshrl.u32 %v2383, 7
    %v2385 = vsub.s32 0, %v2384
    %v2386 = vrot.slane %v2375, %v2385
    %v2387 = vlaneseq
    %v2388 = vshrl.u32 %v2387, 7
    %v2389 = vsub.s32 0, %v2388
    %v2390 = vrot.slane %v2382, %v2389
    %2391 = vrot.lane.b32.xlu0 %v2386, 32
    %v2392 = vpop.permute.xlu0 %2391
    %2393 = vrot.lane.b32.xlu0 %v2390, 32
    %v2394 = vpop.permute.xlu0 %2393
    %2397 = vst.msk [vmem:[#allocation2 + $0x5] sm:$0x1] %vm482, %v2392
    %2398 = vst.msk [vmem:[#allocation2 + $0xd] sm:$0x1] %vm482, %v2394
    %2399 = vmatprep.subr.mxu0 0.0
    %2400 = vmatpush1.msra.mxu0 %v70
    %2401 = vmatprep.subr.mxu0 0.0
    %2402 = vmatpush1.msra.mxu0 %v71
    %2403 = vmatprep.subr.mxu0 0.0
    %2404 = vmatpush1.msra.mxu0 %v72
    %2405 = vmatprep.subr.mxu0 0.0
    %2406 = vmatpush1.msra.mxu0 %v73
    %2407 = vmatprep.subr.mxu0 0.0
    %2408 = vmatpush1.msra.mxu0 0.0
    %2409 = vmatprep.subr.mxu0 0.0
    %2410 = vmatpush1.msra.mxu0 0.0
    %2411 = vmatprep.subr.mxu0 0.0
    %2412 = vmatpush1.msra.mxu0 0.0
    %2413 = vmatprep.subr.mxu0 0.0
    %2414 = vmatpush1.msra.mxu0 0.0
    %2415 = vmatprep.subr.mxu0 0.0
    %2416 = vmatpush1.msra.mxu0 0.0
    %2417 = vmatprep.subr.mxu0 0.0
    %2418 = vmatpush1.msra.mxu0 0.0
    %2419 = vmatprep.subr.mxu0 0.0
    %2420 = vmatpush1.msra.mxu0 0.0
    %2421 = vmatprep.subr.mxu0 0.0
    %2422 = vmatpush1.msra.mxu0 0.0
    %2423 = vmatprep.subr.mxu0 0.0
    %2424 = vmatpush1.msra.mxu0 0.0
    %2425 = vmatprep.subr.mxu0 0.0
    %2426 = vmatpush1.msra.mxu0 0.0
    %2427 = vmatprep.subr.mxu0 0.0
    %2428 = vmatpush1.msra.mxu0 0.0
    %2429 = vmatprep.subr.mxu0 0.0
    %2430 = vmatpush1.msra.mxu0 0.0
    %2431 = vmatprep.subr.mxu0 0.0
    %2432 = vmatpush1.msra.mxu0 0.0
    %2433 = vmatprep.subr.mxu0 0.0
    %2434 = vmatpush1.msra.mxu0 0.0
    %2435 = vmatprep.subr.mxu0 0.0
    %2436 = vmatpush1.msra.mxu0 0.0
    %2437 = vmatprep.subr.mxu0 0.0
    %2438 = vmatpush1.msra.mxu0 0.0
    %2439 = vmatprep.subr.mxu0 0.0
    %2440 = vmatpush1.msra.mxu0 0.0
    %2441 = vmatprep.subr.mxu0 0.0
    %2442 = vmatpush1.msra.mxu0 0.0
    %2443 = vmatprep.subr.mxu0 0.0
    %2444 = vmatpush1.msra.mxu0 0.0
    %2445 = vmatprep.subr.mxu0 0.0
    %2446 = vmatpush1.msra.mxu0 0.0
    %2447 = vmatprep.subr.mxu0 0.0
    %2448 = vmatpush1.msra.mxu0 0.0
    %2449 = vmatprep.subr.mxu0 0.0
    %2450 = vmatpush1.msra.mxu0 0.0
    %2451 = vmatprep.subr.mxu0 0.0
    %2452 = vmatpush1.msra.mxu0 0.0
    %2453 = vmatprep.subr.mxu0 0.0
    %2454 = vmatpush1.msra.mxu0 0.0
    %2455 = vmatprep.subr.mxu0 0.0
    %2456 = vmatpush1.msra.mxu0 0.0
    %2457 = vmatprep.subr.mxu0 0.0
    %2458 = vmatpush1.msra.mxu0 0.0
    %2459 = vmatprep.subr.mxu0 0.0
    %2460 = vmatpush1.msra.mxu0 0.0
    %2461 = vmatprep.subr.mxu0 0.0
    %2462 = vmatpush1.msra.mxu0 0.0
    %2463 = vmatprep.mubr.f32.mxu0 0.0
    %2464 = vmatmul.mubr.f32.gmra.mrb[0].mxu0 %v2263
    %v2465 = vpop.f32.mrb[0].mxu0
    %v2466 = vadd.f32 0.0, %v2465
    %v2467 = vpop.f32.mrb[0].mxu0
    %2468 = vdwg.mxu0
    %v2469 = vrot.slane %v80, 6
    %v2470 = vrot.slane %v81, 5
    %v2471 = vsel %vm159, %v2470, %v2469
    %v2472 = vsel %vm161, %v2471, 0
    %2474 = vmatprep.subr.mxu0 0.0
    %2475 = vmatpush1.msra.mxu0 %v166
    %2476 = vmatprep.subr.mxu0 0.0
    %2477 = vmatpush1.msra.mxu0 0.0
    %2478 = vmatprep.subr.mxu0 0.0
    %2479 = vmatpush1.msra.mxu0 0.0
    %2480 = vmatprep.subr.mxu0 0.0
    %2481 = vmatpush1.msra.mxu0 0.0
    %2482 = vmatprep.subr.mxu0 0.0
    %2483 = vmatpush1.msra.mxu0 0.0
    %2484 = vmatprep.subr.mxu0 0.0
    %2485 = vmatpush1.msra.mxu0 0.0
    %2486 = vmatprep.subr.mxu0 0.0
    %2487 = vmatpush1.msra.mxu0 0.0
    %2488 = vmatprep.subr.mxu0 0.0
    %2489 = vmatpush1.msra.mxu0 0.0
    %2490 = vmatprep.subr.mxu0 0.0
    %2491 = vmatpush1.msra.mxu0 0.0
    %2492 = vmatprep.subr.mxu0 0.0
    %2493 = vmatpush1.msra.mxu0 0.0
    %2494 = vmatprep.subr.mxu0 0.0
    %2495 = vmatpush1.msra.mxu0 0.0
    %2496 = vmatprep.subr.mxu0 0.0
    %2497 = vmatpush1.msra.mxu0 0.0
    %2498 = vmatprep.subr.mxu0 0.0
    %2499 = vmatpush1.msra.mxu0 0.0
    %2500 = vmatprep.subr.mxu0 0.0
    %2501 = vmatpush1.msra.mxu0 0.0
    %2502 = vmatprep.subr.mxu0 0.0
    %2503 = vmatpush1.msra.mxu0 0.0
    %2504 = vmatprep.subr.mxu0 0.0
    %2505 = vmatpush1.msra.mxu0 0.0
    %2506 = vmatprep.subr.mxu0 0.0
    %2507 = vmatpush1.msra.mxu0 0.0
    %2508 = vmatprep.subr.mxu0 0.0
    %2509 = vmatpush1.msra.mxu0 0.0
    %2510 = vmatprep.subr.mxu0 0.0
    %2511 = vmatpush1.msra.mxu0 0.0
    %2512 = vmatprep.subr.mxu0 0.0
    %2513 = vmatpush1.msra.mxu0 0.0
    %2514 = vmatprep.subr.mxu0 0.0
    %2515 = vmatpush1.msra.mxu0 0.0
    %2516 = vmatprep.subr.mxu0 0.0
    %2517 = vmatpush1.msra.mxu0 0.0
    %2518 = vmatprep.subr.mxu0 0.0
    %2519 = vmatpush1.msra.mxu0 0.0
    %2520 = vmatprep.subr.mxu0 0.0
    %2521 = vmatpush1.msra.mxu0 0.0
    %2522 = vmatprep.subr.mxu0 0.0
    %2523 = vmatpush1.msra.mxu0 0.0
    %2524 = vmatprep.subr.mxu0 0.0
    %2525 = vmatpush1.msra.mxu0 0.0
    %2526 = vmatprep.subr.mxu0 0.0
    %2527 = vmatpush1.msra.mxu0 0.0
    %2528 = vmatprep.subr.mxu0 0.0
    %2529 = vmatpush1.msra.mxu0 0.0
    %2530 = vmatprep.subr.mxu0 0.0
    %2531 = vmatpush1.msra.mxu0 0.0
    %2532 = vmatprep.subr.mxu0 0.0
    %2533 = vmatpush1.msra.mxu0 0.0
    %2534 = vmatprep.subr.mxu0 0.0
    %2535 = vmatpush1.msra.mxu0 0.0
    %2536 = vmatprep.subr.mxu0 0.0
    %2537 = vmatpush1.msra.mxu0 0.0
    %2538 = vmatprep.mubr.f32.mxu0 0.0
    %2539 = vmatmul.mubr.f32.gmra.mrb[0].mxu0 %v2472
    %v2540 = vpop.f32.mrb[0].mxu0
    %v2541 = vadd.f32 %v2466, %v2540
    %v2542 = vpop.f32.mrb[0].mxu0
    %2543 = vdwg.mxu0
    %v2544 = vadd.f32 %v2541, %v242
    %v2545 = vxor.u32 %v2544, 2147483648
    %v2546 = vmul.f32 %v2545, 1.442695
    %v2547 = vpow.pop %v2546
    %v2548 = vadd.f32 %v2547, 1.0
    %v2549 = vrcp.pop %v2548
    %v2550 = vmul.f32 1.0, %v2549
    %v2551 = vtanh.pop %v2544
    %v2552 = vmul.f32 %v2550, %v2179
    %2554 = vrot.lane.b32.xlu0 %v2551, 64
    %v2555 = vpop.permute.xlu0 %2554
    %v2557 = vmul.f32 %v2550, %v2555
    %2559 = vrot.lane.b32.xlu0 %v2557, 32
    %v2560 = vpop.permute.xlu0 %2559
    %v2562 = vadd.f32 %v2552, %v2560
    %v2563 = vtanh.pop %v2562
    %2565 = vrot.lane.b32.xlu0 %v2563, 64
    %v2566 = vpop.permute.xlu0 %2565
    %v2568 = vmul.f32 %v2550, %v2566
    %2569 = vrot.lane.b32.xlu0 %v2359, 32
    %v2570 = vpop.permute.xlu0 %2569
    %v2571 = vsel %vm82, %v2570, 0
    %2573 = vmatprep.subr.mxu0 0.0
    %2574 = vmatpush1.msra.mxu0 %v74
    %2575 = vmatprep.subr.mxu0 0.0
    %2576 = vmatpush1.msra.mxu0 %v75
    %2577 = vmatprep.subr.mxu0 0.0
    %2578 = vmatpush1.msra.mxu0 %v76
    %2579 = vmatprep.subr.mxu0 0.0
    %2580 = vmatpush1.msra.mxu0 %v77
    %2581 = vmatprep.subr.mxu0 0.0
    %2582 = vmatpush1.msra.mxu0 0.0
    %2583 = vmatprep.subr.mxu0 0.0
    %2584 = vmatpush1.msra.mxu0 0.0
    %2585 = vmatprep.subr.mxu0 0.0
    %2586 = vmatpush1.msra.mxu0 0.0
    %2587 = vmatprep.subr.mxu0 0.0
    %2588 = vmatpush1.msra.mxu0 0.0
    %2589 = vmatprep.subr.mxu0 0.0
    %2590 = vmatpush1.msra.mxu0 0.0
    %2591 = vmatprep.subr.mxu0 0.0
    %2592 = vmatpush1.msra.mxu0 0.0
    %2593 = vmatprep.subr.mxu0 0.0
    %2594 = vmatpush1.msra.mxu0 0.0
    %2595 = vmatprep.subr.mxu0 0.0
    %2596 = vmatpush1.msra.mxu0 0.0
    %2597 = vmatprep.subr.mxu0 0.0
    %2598 = vmatpush1.msra.mxu0 0.0
    %2599 = vmatprep.subr.mxu0 0.0
    %2600 = vmatpush1.msra.mxu0 0.0
    %2601 = vmatprep.subr.mxu0 0.0
    %2602 = vmatpush1.msra.mxu0 0.0
    %2603 = vmatprep.subr.mxu0 0.0
    %2604 = vmatpush1.msra.mxu0 0.0
    %2605 = vmatprep.subr.mxu0 0.0
    %2606 = vmatpush1.msra.mxu0 0.0
    %2607 = vmatprep.subr.mxu0 0.0
    %2608 = vmatpush1.msra.mxu0 0.0
    %2609 = vmatprep.subr.mxu0 0.0
    %2610 = vmatpush1.msra.mxu0 0.0
    %2611 = vmatprep.subr.mxu0 0.0
    %2612 = vmatpush1.msra.mxu0 0.0
    %2613 = vmatprep.subr.mxu0 0.0
    %2614 = vmatpush1.msra.mxu0 0.0
    %2615 = vmatprep.subr.mxu0 0.0
    %2616 = vmatpush1.msra.mxu0 0.0
    %2617 = vmatprep.subr.mxu0 0.0
    %2618 = vmatpush1.msra.mxu0 0.0
    %2619 = vmatprep.subr.mxu0 0.0
    %2620 = vmatpush1.msra.mxu0 0.0
    %2621 = vmatprep.subr.mxu0 0.0
    %2622 = vmatpush1.msra.mxu0 0.0
    %2623 = vmatprep.subr.mxu0 0.0
    %2624 = vmatpush1.msra.mxu0 0.0
    %2625 = vmatprep.subr.mxu0 0.0
    %2626 = vmatpush1.msra.mxu0 0.0
    %2627 = vmatprep.subr.mxu0 0.0
    %2628 = vmatpush1.msra.mxu0 0.0
    %2629 = vmatprep.subr.mxu0 0.0
    %2630 = vmatpush1.msra.mxu0 0.0
    %2631 = vmatprep.subr.mxu0 0.0
    %2632 = vmatpush1.msra.mxu0 0.0
    %2633 = vmatprep.subr.mxu0 0.0
    %2634 = vmatpush1.msra.mxu0 0.0
    %2635 = vmatprep.subr.mxu0 0.0
    %2636 = vmatpush1.msra.mxu0 0.0
    %2637 = vmatprep.mubr.f32.mxu0 0.0
    %2638 = vmatmul.mubr.f32.gmra.mrb[0].mxu0 %v2571
    %v2639 = vpop.f32.mrb[0].mxu0
    %v2640 = vadd.f32 0.0, %v2639
    %v2641 = vpop.f32.mrb[0].mxu0
    %2642 = vdwg.mxu0
    %2644 = vrot.lane.b32.xlu0 %v2568, 32
    %v2645 = vpop.permute.xlu0 %2644
    %v2646 = vsel %vm82, %v2645, 0
    %2648 = vmatprep.subr.mxu0 0.0
    %2649 = vmatpush1.msra.mxu0 %v66
    %2650 = vmatprep.subr.mxu0 0.0
    %2651 = vmatpush1.msra.mxu0 %v67
    %2652 = vmatprep.subr.mxu0 0.0
    %2653 = vmatpush1.msra.mxu0 %v68
    %2654 = vmatprep.subr.mxu0 0.0
    %2655 = vmatpush1.msra.mxu0 %v69
    %2656 = vmatprep.subr.mxu0 0.0
    %2657 = vmatpush1.msra.mxu0 0.0
    %2658 = vmatprep.subr.mxu0 0.0
    %2659 = vmatpush1.msra.mxu0 0.0
    %2660 = vmatprep.subr.mxu0 0.0
    %2661 = vmatpush1.msra.mxu0 0.0
    %2662 = vmatprep.subr.mxu0 0.0
    %2663 = vmatpush1.msra.mxu0 0.0
    %2664 = vmatprep.subr.mxu0 0.0
    %2665 = vmatpush1.msra.mxu0 0.0
    %2666 = vmatprep.subr.mxu0 0.0
    %2667 = vmatpush1.msra.mxu0 0.0
    %2668 = vmatprep.subr.mxu0 0.0
    %2669 = vmatpush1.msra.mxu0 0.0
    %2670 = vmatprep.subr.mxu0 0.0
    %2671 = vmatpush1.msra.mxu0 0.0
    %2672 = vmatprep.subr.mxu0 0.0
    %2673 = vmatpush1.msra.mxu0 0.0
    %2674 = vmatprep.subr.mxu0 0.0
    %2675 = vmatpush1.msra.mxu0 0.0
    %2676 = vmatprep.subr.mxu0 0.0
    %2677 = vmatpush1.msra.mxu0 0.0
    %2678 = vmatprep.subr.mxu0 0.0
    %2679 = vmatpush1.msra.mxu0 0.0
    %2680 = vmatprep.subr.mxu0 0.0
    %2681 = vmatpush1.msra.mxu0 0.0
    %2682 = vmatprep.subr.mxu0 0.0
    %2683 = vmatpush1.msra.mxu0 0.0
    %2684 = vmatprep.subr.mxu0 0.0
    %2685 = vmatpush1.msra.mxu0 0.0
    %2686 = vmatprep.subr.mxu0 0.0
    %2687 = vmatpush1.msra.mxu0 0.0
    %2688 = vmatprep.subr.mxu0 0.0
    %2689 = vmatpush1.msra.mxu0 0.0
    %2690 = vmatprep.subr.mxu0 0.0
    %2691 = vmatpush1.msra.mxu0 0.0
    %2692 = vmatprep.subr.mxu0 0.0
    %2693 = vmatpush1.msra.mxu0 0.0
    %2694 = vmatprep.subr.mxu0 0.0
    %2695 = vmatpush1.msra.mxu0 0.0
    %2696 = vmatprep.subr.mxu0 0.0
    %2697 = vmatpush1.msra.mxu0 0.0
    %2698 = vmatprep.subr.mxu0 0.0
    %2699 = vmatpush1.msra.mxu0 0.0
    %2700 = vmatprep.subr.mxu0 0.0
    %2701 = vmatpush1.msra.mxu0 0.0
    %2702 = vmatprep.subr.mxu0 0.0
    %2703 = vmatpush1.msra.mxu0 0.0
    %2704 = vmatprep.subr.mxu0 0.0
    %2705 = vmatpush1.msra.mxu0 0.0
    %2706 = vmatprep.subr.mxu0 0.0
    %2707 = vmatpush1.msra.mxu0 0.0
    %2708 = vmatprep.subr.mxu0 0.0
    %2709 = vmatpush1.msra.mxu0 0.0
    %2710 = vmatprep.subr.mxu0 0.0
    %2711 = vmatpush1.msra.mxu0 0.0
    %2712 = vmatprep.mubr.f32.mxu0 0.0
    %2713 = vmatmul.mubr.f32.gmra.mrb[0].mxu0 %v2646
    %v2714 = vpop.f32.mrb[0].mxu0
    %v2715 = vadd.f32 %v2640, %v2714
    %v2716 = vpop.f32.mrb[0].mxu0
    %2717 = vdwg.mxu0
    %v2718 = vadd.f32 %v2715, %v418
    %v2719 = vxor.u32 %v2718, 2147483648
    %v2720 = vmul.f32 %v2719, 1.442695
    %v2721 = vpow.pop %v2720
    %v2722 = vadd.f32 %v2721, 1.0
    %v2723 = vrcp.pop %v2722
    %v2724 = vmul.f32 1.0, %v2723
    %v2725 = vtanh.pop %v2718
    %v2726 = vmul.f32 %v2724, %v2353
    %2728 = vrot.lane.b32.xlu0 %v2725, 64
    %v2729 = vpop.permute.xlu0 %2728
    %v2731 = vmul.f32 %v2724, %v2729
    %2733 = vrot.lane.b32.xlu0 %v2731, 32
    %v2734 = vpop.permute.xlu0 %2733
    %v2736 = vadd.f32 %v2726, %v2734
    %v2737 = vtanh.pop %v2736
    %2739 = vrot.lane.b32.xlu0 %v2737, 64
    %v2740 = vpop.permute.xlu0 %2739
    %v2742 = vmul.f32 %v2724, %v2740
    %v2745 = vunpack.c.l.s4 1966171168
    %v2746 = vunpack.c.0.s8 %v2745
    %v2747 = vlaneseq
    %v2748 = vshrl.u32 %v2747, 7
    %v2749 = vsub.s32 %v2746, %v2748
    %v2750 = vrot.slane %v2742, %v2749
    %v2751 = vcombine.high %v2750, %v2750
    %v2753 = vunpack.c.l.s4 1966171168
    %v2754 = vunpack.c.0.s8 %v2753
    %v2755 = vlaneseq
    %v2756 = vshrl.u32 %v2755, 7
    %v2757 = vsub.s32 %v2754, %v2756
    %v2758 = vrot.slane %v2750, %v2757
    %v2760 = vunpack.c.l.s4 1966171168
    %v2761 = vunpack.c.0.s8 %v2760
    %v2762 = vlaneseq
    %v2763 = vshrl.u32 %v2762, 7
    %v2764 = vsub.s32 %v2761, %v2763
    %v2765 = vrot.slane %v2751, %v2764
    %v2766 = vlaneseq
    %v2767 = vshrl.u32 %v2766, 7
    %v2768 = vsub.s32 0, %v2767
    %v2769 = vrot.slane %v2758, %v2768
    %v2770 = vlaneseq
    %v2771 = vshrl.u32 %v2770, 7
    %v2772 = vsub.s32 0, %v2771
    %v2773 = vrot.slane %v2765, %v2772
    %2774 = vrot.lane.b32.xlu0 %v2769, 32
    %v2775 = vpop.permute.xlu0 %2774
    %2776 = vrot.lane.b32.xlu0 %v2773, 32
    %v2777 = vpop.permute.xlu0 %2776
    %2780 = vst.msk [vmem:[#allocation2 + $0x6] sm:$0x1] %vm482, %v2775
    %2781 = vst.msk [vmem:[#allocation2 + $0xe] sm:$0x1] %vm482, %v2777
    %2782 = vmatprep.subr.mxu0 0.0
    %2783 = vmatpush1.msra.mxu0 %v70
    %2784 = vmatprep.subr.mxu0 0.0
    %2785 = vmatpush1.msra.mxu0 %v71
    %2786 = vmatprep.subr.mxu0 0.0
    %2787 = vmatpush1.msra.mxu0 %v72
    %2788 = vmatprep.subr.mxu0 0.0
    %2789 = vmatpush1.msra.mxu0 %v73
    %2790 = vmatprep.subr.mxu0 0.0
    %2791 = vmatpush1.msra.mxu0 0.0
    %2792 = vmatprep.subr.mxu0 0.0
    %2793 = vmatpush1.msra.mxu0 0.0
    %2794 = vmatprep.subr.mxu0 0.0
    %2795 = vmatpush1.msra.mxu0 0.0
    %2796 = vmatprep.subr.mxu0 0.0
    %2797 = vmatpush1.msra.mxu0 0.0
    %2798 = vmatprep.subr.mxu0 0.0
    %2799 = vmatpush1.msra.mxu0 0.0
    %2800 = vmatprep.subr.mxu0 0.0
    %2801 = vmatpush1.msra.mxu0 0.0
    %2802 = vmatprep.subr.mxu0 0.0
    %2803 = vmatpush1.msra.mxu0 0.0
    %2804 = vmatprep.subr.mxu0 0.0
    %2805 = vmatpush1.msra.mxu0 0.0
    %2806 = vmatprep.subr.mxu0 0.0
    %2807 = vmatpush1.msra.mxu0 0.0
    %2808 = vmatprep.subr.mxu0 0.0
    %2809 = vmatpush1.msra.mxu0 0.0
    %2810 = vmatprep.subr.mxu0 0.0
    %2811 = vmatpush1.msra.mxu0 0.0
    %2812 = vmatprep.subr.mxu0 0.0
    %2813 = vmatpush1.msra.mxu0 0.0
    %2814 = vmatprep.subr.mxu0 0.0
    %2815 = vmatpush1.msra.mxu0 0.0
    %2816 = vmatprep.subr.mxu0 0.0
    %2817 = vmatpush1.msra.mxu0 0.0
    %2818 = vmatprep.subr.mxu0 0.0
    %2819 = vmatpush1.msra.mxu0 0.0
    %2820 = vmatprep.subr.mxu0 0.0
    %2821 = vmatpush1.msra.mxu0 0.0
    %2822 = vmatprep.subr.mxu0 0.0
    %2823 = vmatpush1.msra.mxu0 0.0
    %2824 = vmatprep.subr.mxu0 0.0
    %2825 = vmatpush1.msra.mxu0 0.0
    %2826 = vmatprep.subr.mxu0 0.0
    %2827 = vmatpush1.msra.mxu0 0.0
    %2828 = vmatprep.subr.mxu0 0.0
    %2829 = vmatpush1.msra.mxu0 0.0
    %2830 = vmatprep.subr.mxu0 0.0
    %2831 = vmatpush1.msra.mxu0 0.0
    %2832 = vmatprep.subr.mxu0 0.0
    %2833 = vmatpush1.msra.mxu0 0.0
    %2834 = vmatprep.subr.mxu0 0.0
    %2835 = vmatpush1.msra.mxu0 0.0
    %2836 = vmatprep.subr.mxu0 0.0
    %2837 = vmatpush1.msra.mxu0 0.0
    %2838 = vmatprep.subr.mxu0 0.0
    %2839 = vmatpush1.msra.mxu0 0.0
    %2840 = vmatprep.subr.mxu0 0.0
    %2841 = vmatpush1.msra.mxu0 0.0
    %2842 = vmatprep.subr.mxu0 0.0
    %2843 = vmatpush1.msra.mxu0 0.0
    %2844 = vmatprep.subr.mxu0 0.0
    %2845 = vmatpush1.msra.mxu0 0.0
    %2846 = vmatprep.mubr.f32.mxu0 0.0
    %2847 = vmatmul.mubr.f32.gmra.mrb[0].mxu0 %v2646
    %v2848 = vpop.f32.mrb[0].mxu0
    %v2849 = vadd.f32 0.0, %v2848
    %v2850 = vpop.f32.mrb[0].mxu0
    %2851 = vdwg.mxu0
    %v2852 = vrot.slane %v80, 7
    %v2853 = vrot.slane %v81, 6
    %v2854 = vsel %vm159, %v2853, %v2852
    %v2855 = vsel %vm161, %v2854, 0
    %2857 = vmatprep.subr.mxu0 0.0
    %2858 = vmatpush1.msra.mxu0 %v166
    %2859 = vmatprep.subr.mxu0 0.0
    %2860 = vmatpush1.msra.mxu0 0.0
    %2861 = vmatprep.subr.mxu0 0.0
    %2862 = vmatpush1.msra.mxu0 0.0
    %2863 = vmatprep.subr.mxu0 0.0
    %2864 = vmatpush1.msra.mxu0 0.0
    %2865 = vmatprep.subr.mxu0 0.0
    %2866 = vmatpush1.msra.mxu0 0.0
    %2867 = vmatprep.subr.mxu0 0.0
    %2868 = vmatpush1.msra.mxu0 0.0
    %2869 = vmatprep.subr.mxu0 0.0
    %2870 = vmatpush1.msra.mxu0 0.0
    %2871 = vmatprep.subr.mxu0 0.0
    %2872 = vmatpush1.msra.mxu0 0.0
    %2873 = vmatprep.subr.mxu0 0.0
    %2874 = vmatpush1.msra.mxu0 0.0
    %2875 = vmatprep.subr.mxu0 0.0
    %2876 = vmatpush1.msra.mxu0 0.0
    %2877 = vmatprep.subr.mxu0 0.0
    %2878 = vmatpush1.msra.mxu0 0.0
    %2879 = vmatprep.subr.mxu0 0.0
    %2880 = vmatpush1.msra.mxu0 0.0
    %2881 = vmatprep.subr.mxu0 0.0
    %2882 = vmatpush1.msra.mxu0 0.0
    %2883 = vmatprep.subr.mxu0 0.0
    %2884 = vmatpush1.msra.mxu0 0.0
    %2885 = vmatprep.subr.mxu0 0.0
    %2886 = vmatpush1.msra.mxu0 0.0
    %2887 = vmatprep.subr.mxu0 0.0
    %2888 = vmatpush1.msra.mxu0 0.0
    %2889 = vmatprep.subr.mxu0 0.0
    %2890 = vmatpush1.msra.mxu0 0.0
    %2891 = vmatprep.subr.mxu0 0.0
    %2892 = vmatpush1.msra.mxu0 0.0
    %2893 = vmatprep.subr.mxu0 0.0
    %2894 = vmatpush1.msra.mxu0 0.0
    %2895 = vmatprep.subr.mxu0 0.0
    %2896 = vmatpush1.msra.mxu0 0.0
    %2897 = vmatprep.subr.mxu0 0.0
    %2898 = vmatpush1.msra.mxu0 0.0
    %2899 = vmatprep.subr.mxu0 0.0
    %2900 = vmatpush1.msra.mxu0 0.0
    %2901 = vmatprep.subr.mxu0 0.0
    %2902 = vmatpush1.msra.mxu0 0.0
    %2903 = vmatprep.subr.mxu0 0.0
    %2904 = vmatpush1.msra.mxu0 0.0
    %2905 = vmatprep.subr.mxu0 0.0
    %2906 = vmatpush1.msra.mxu0 0.0
    %2907 = vmatprep.subr.mxu0 0.0
    %2908 = vmatpush1.msra.mxu0 0.0
    %2909 = vmatprep.subr.mxu0 0.0
    %2910 = vmatpush1.msra.mxu0 0.0
    %2911 = vmatprep.subr.mxu0 0.0
    %2912 = vmatpush1.msra.mxu0 0.0
    %2913 = vmatprep.subr.mxu0 0.0
    %2914 = vmatpush1.msra.mxu0 0.0
    %2915 = vmatprep.subr.mxu0 0.0
    %2916 = vmatpush1.msra.mxu0 0.0
    %2917 = vmatprep.subr.mxu0 0.0
    %2918 = vmatpush1.msra.mxu0 0.0
    %2919 = vmatprep.subr.mxu0 0.0
    %2920 = vmatpush1.msra.mxu0 0.0
    %2921 = vmatprep.mubr.f32.mxu0 0.0
    %2922 = vmatmul.mubr.f32.gmra.mrb[0].mxu0 %v2855
    %v2923 = vpop.f32.mrb[0].mxu0
    %v2924 = vadd.f32 %v2849, %v2923
    %v2925 = vpop.f32.mrb[0].mxu0
    %2926 = vdwg.mxu0
    %v2927 = vadd.f32 %v2924, %v242
    %v2928 = vxor.u32 %v2927, 2147483648
    %v2929 = vmul.f32 %v2928, 1.442695
    %v2930 = vpow.pop %v2929
    %v2931 = vadd.f32 %v2930, 1.0
    %v2932 = vrcp.pop %v2931
    %v2933 = vmul.f32 1.0, %v2932
    %v2934 = vtanh.pop %v2927
    %v2935 = vmul.f32 %v2933, %v2562
    %2937 = vrot.lane.b32.xlu0 %v2934, 64
    %v2938 = vpop.permute.xlu0 %2937
    %v2940 = vmul.f32 %v2933, %v2938
    %2942 = vrot.lane.b32.xlu0 %v2940, 32
    %v2943 = vpop.permute.xlu0 %2942
    %v2945 = vadd.f32 %v2935, %v2943
    %v2946 = vtanh.pop %v2945
    %2948 = vrot.lane.b32.xlu0 %v2946, 64
    %v2949 = vpop.permute.xlu0 %2948
    %v2951 = vmul.f32 %v2933, %v2949
    %2952 = vrot.lane.b32.xlu0 %v2742, 32
    %v2953 = vpop.permute.xlu0 %2952
    %v2954 = vsel %vm82, %v2953, 0
    %2956 = vmatprep.subr.mxu0 0.0
    %2957 = vmatpush1.msra.mxu0 %v74
    %2958 = vmatprep.subr.mxu0 0.0
    %2959 = vmatpush1.msra.mxu0 %v75
    %2960 = vmatprep.subr.mxu0 0.0
    %2961 = vmatpush1.msra.mxu0 %v76
    %2962 = vmatprep.subr.mxu0 0.0
    %2963 = vmatpush1.msra.mxu0 %v77
    %2964 = vmatprep.subr.mxu0 0.0
    %2965 = vmatpush1.msra.mxu0 0.0
    %2966 = vmatprep.subr.mxu0 0.0
    %2967 = vmatpush1.msra.mxu0 0.0
    %2968 = vmatprep.subr.mxu0 0.0
    %2969 = vmatpush1.msra.mxu0 0.0
    %2970 = vmatprep.subr.mxu0 0.0
    %2971 = vmatpush1.msra.mxu0 0.0
    %2972 = vmatprep.subr.mxu0 0.0
    %2973 = vmatpush1.msra.mxu0 0.0
    %2974 = vmatprep.subr.mxu0 0.0
    %2975 = vmatpush1.msra.mxu0 0.0
    %2976 = vmatprep.subr.mxu0 0.0
    %2977 = vmatpush1.msra.mxu0 0.0
    %2978 = vmatprep.subr.mxu0 0.0
    %2979 = vmatpush1.msra.mxu0 0.0
    %2980 = vmatprep.subr.mxu0 0.0
    %2981 = vmatpush1.msra.mxu0 0.0
    %2982 = vmatprep.subr.mxu0 0.0
    %2983 = vmatpush1.msra.mxu0 0.0
    %2984 = vmatprep.subr.mxu0 0.0
    %2985 = vmatpush1.msra.mxu0 0.0
    %2986 = vmatprep.subr.mxu0 0.0
    %2987 = vmatpush1.msra.mxu0 0.0
    %2988 = vmatprep.subr.mxu0 0.0
    %2989 = vmatpush1.msra.mxu0 0.0
    %2990 = vmatprep.subr.mxu0 0.0
    %2991 = vmatpush1.msra.mxu0 0.0
    %2992 = vmatprep.subr.mxu0 0.0
    %2993 = vmatpush1.msra.mxu0 0.0
    %2994 = vmatprep.subr.mxu0 0.0
    %2995 = vmatpush1.msra.mxu0 0.0
    %2996 = vmatprep.subr.mxu0 0.0
    %2997 = vmatpush1.msra.mxu0 0.0
    %2998 = vmatprep.subr.mxu0 0.0
    %2999 = vmatpush1.msra.mxu0 0.0
    %3000 = vmatprep.subr.mxu0 0.0
    %3001 = vmatpush1.msra.mxu0 0.0
    %3002 = vmatprep.subr.mxu0 0.0
    %3003 = vmatpush1.msra.mxu0 0.0
    %3004 = vmatprep.subr.mxu0 0.0
    %3005 = vmatpush1.msra.mxu0 0.0
    %3006 = vmatprep.subr.mxu0 0.0
    %3007 = vmatpush1.msra.mxu0 0.0
    %3008 = vmatprep.subr.mxu0 0.0
    %3009 = vmatpush1.msra.mxu0 0.0
    %3010 = vmatprep.subr.mxu0 0.0
    %3011 = vmatpush1.msra.mxu0 0.0
    %3012 = vmatprep.subr.mxu0 0.0
    %3013 = vmatpush1.msra.mxu0 0.0
    %3014 = vmatprep.subr.mxu0 0.0
    %3015 = vmatpush1.msra.mxu0 0.0
    %3016 = vmatprep.subr.mxu0 0.0
    %3017 = vmatpush1.msra.mxu0 0.0
    %3018 = vmatprep.subr.mxu0 0.0
    %3019 = vmatpush1.msra.mxu0 0.0
    %3020 = vmatprep.mubr.f32.mxu0 0.0
    %3021 = vmatmul.mubr.f32.gmra.mrb[0].mxu0 %v2954
    %v3022 = vpop.f32.mrb[0].mxu0
    %v3023 = vadd.f32 0.0, %v3022
    %v3024 = vpop.f32.mrb[0].mxu0
    %3025 = vdwg.mxu0
    %3027 = vrot.lane.b32.xlu0 %v2951, 32
    %v3028 = vpop.permute.xlu0 %3027
    %v3029 = vsel %vm82, %v3028, 0
    %3031 = vmatprep.subr.mxu0 0.0
    %3032 = vmatpush1.msra.mxu0 %v66
    %3033 = vmatprep.subr.mxu0 0.0
    %3034 = vmatpush1.msra.mxu0 %v67
    %3035 = vmatprep.subr.mxu0 0.0
    %3036 = vmatpush1.msra.mxu0 %v68
    %3037 = vmatprep.subr.mxu0 0.0
    %3038 = vmatpush1.msra.mxu0 %v69
    %3039 = vmatprep.subr.mxu0 0.0
    %3040 = vmatpush1.msra.mxu0 0.0
    %3041 = vmatprep.subr.mxu0 0.0
    %3042 = vmatpush1.msra.mxu0 0.0
    %3043 = vmatprep.subr.mxu0 0.0
    %3044 = vmatpush1.msra.mxu0 0.0
    %3045 = vmatprep.subr.mxu0 0.0
    %3046 = vmatpush1.msra.mxu0 0.0
    %3047 = vmatprep.subr.mxu0 0.0
    %3048 = vmatpush1.msra.mxu0 0.0
    %3049 = vmatprep.subr.mxu0 0.0
    %3050 = vmatpush1.msra.mxu0 0.0
    %3051 = vmatprep.subr.mxu0 0.0
    %3052 = vmatpush1.msra.mxu0 0.0
    %3053 = vmatprep.subr.mxu0 0.0
    %3054 = vmatpush1.msra.mxu0 0.0
    %3055 = vmatprep.subr.mxu0 0.0
    %3056 = vmatpush1.msra.mxu0 0.0
    %3057 = vmatprep.subr.mxu0 0.0
    %3058 = vmatpush1.msra.mxu0 0.0
    %3059 = vmatprep.subr.mxu0 0.0
    %3060 = vmatpush1.msra.mxu0 0.0
    %3061 = vmatprep.subr.mxu0 0.0
    %3062 = vmatpush1.msra.mxu0 0.0
    %3063 = vmatprep.subr.mxu0 0.0
    %3064 = vmatpush1.msra.mxu0 0.0
    %3065 = vmatprep.subr.mxu0 0.0
    %3066 = vmatpush1.msra.mxu0 0.0
    %3067 = vmatprep.subr.mxu0 0.0
    %3068 = vmatpush1.msra.mxu0 0.0
    %3069 = vmatprep.subr.mxu0 0.0
    %3070 = vmatpush1.msra.mxu0 0.0
    %3071 = vmatprep.subr.mxu0 0.0
    %3072 = vmatpush1.msra.mxu0 0.0
    %3073 = vmatprep.subr.mxu0 0.0
    %3074 = vmatpush1.msra.mxu0 0.0
    %3075 = vmatprep.subr.mxu0 0.0
    %3076 = vmatpush1.msra.mxu0 0.0
    %3077 = vmatprep.subr.mxu0 0.0
    %3078 = vmatpush1.msra.mxu0 0.0
    %3079 = vmatprep.subr.mxu0 0.0
    %3080 = vmatpush1.msra.mxu0 0.0
    %3081 = vmatprep.subr.mxu0 0.0
    %3082 = vmatpush1.msra.mxu0 0.0
    %3083 = vmatprep.subr.mxu0 0.0
    %3084 = vmatpush1.msra.mxu0 0.0
    %3085 = vmatprep.subr.mxu0 0.0
    %3086 = vmatpush1.msra.mxu0 0.0
    %3087 = vmatprep.subr.mxu0 0.0
    %3088 = vmatpush1.msra.mxu0 0.0
    %3089 = vmatprep.subr.mxu0 0.0
    %3090 = vmatpush1.msra.mxu0 0.0
    %3091 = vmatprep.subr.mxu0 0.0
    %3092 = vmatpush1.msra.mxu0 0.0
    %3093 = vmatprep.subr.mxu0 0.0
    %3094 = vmatpush1.msra.mxu0 0.0
    %3095 = vmatprep.mubr.f32.mxu0 0.0
    %3096 = vmatmul.mubr.f32.gmra.mrb[0].mxu0 %v3029
    %v3097 = vpop.f32.mrb[0].mxu0
    %v3098 = vadd.f32 %v3023, %v3097
    %v3099 = vpop.f32.mrb[0].mxu0
    %3100 = vdwg.mxu0
    %v3101 = vadd.f32 %v3098, %v418
    %v3102 = vxor.u32 %v3101, 2147483648
    %v3103 = vmul.f32 %v3102, 1.442695
    %v3104 = vpow.pop %v3103
    %v3105 = vadd.f32 %v3104, 1.0
    %v3106 = vrcp.pop %v3105
    %v3107 = vmul.f32 1.0, %v3106
    %v3108 = vtanh.pop %v3101
    %v3109 = vmul.f32 %v3107, %v2736
    %3111 = vrot.lane.b32.xlu0 %v3108, 64
    %v3112 = vpop.permute.xlu0 %3111
    %v3114 = vmul.f32 %v3107, %v3112
    %3116 = vrot.lane.b32.xlu0 %v3114, 32
    %v3117 = vpop.permute.xlu0 %3116
    %v3119 = vadd.f32 %v3109, %v3117
    %v3120 = vtanh.pop %v3119
    %3122 = vrot.lane.b32.xlu0 %v3120, 64
    %v3123 = vpop.permute.xlu0 %3122
    %v3125 = vmul.f32 %v3107, %v3123
    %v3128 = vunpack.c.l.s4 1966171168
    %v3129 = vunpack.c.0.s8 %v3128
    %v3130 = vlaneseq
    %v3131 = vshrl.u32 %v3130, 7
    %v3132 = vsub.s32 %v3129, %v3131
    %v3133 = vrot.slane %v3125, %v3132
    %v3134 = vcombine.high %v3133, %v3133
    %v3136 = vunpack.c.l.s4 1966171168
    %v3137 = vunpack.c.0.s8 %v3136
    %v3138 = vlaneseq
    %v3139 = vshrl.u32 %v3138, 7
    %v3140 = vsub.s32 %v3137, %v3139
    %v3141 = vrot.slane %v3133, %v3140
    %v3143 = vunpack.c.l.s4 1966171168
    %v3144 = vunpack.c.0.s8 %v3143
    %v3145 = vlaneseq
    %v3146 = vshrl.u32 %v3145, 7
    %v3147 = vsub.s32 %v3144, %v3146
    %v3148 = vrot.slane %v3134, %v3147
    %v3149 = vlaneseq
    %v3150 = vshrl.u32 %v3149, 7
    %v3151 = vsub.s32 0, %v3150
    %v3152 = vrot.slane %v3141, %v3151
    %v3153 = vlaneseq
    %v3154 = vshrl.u32 %v3153, 7
    %v3155 = vsub.s32 0, %v3154
    %v3156 = vrot.slane %v3148, %v3155
    %3157 = vrot.lane.b32.xlu0 %v3152, 32
    %v3158 = vpop.permute.xlu0 %3157
    %3159 = vrot.lane.b32.xlu0 %v3156, 32
    %v3160 = vpop.permute.xlu0 %3159
    %3163 = vst.msk [vmem:[#allocation2 + $0x7] sm:$0x1] %vm482, %v3158
    %3164 = vst.msk [vmem:[#allocation2 + $0xf] sm:$0x1] %vm482, %v3160
    %vm3166 = vcmask 254976
    %3167 = vst.msk [vmem:[#allocation9] sm:$0x3] %vm3166, %v3028
    %3169 = vrot.lane.b32.xlu0 %v2945, 96
    %v3170 = vpop.permute.xlu0 %3169
    %3172 = vst.msk [vmem:[#allocation10] sm:$0x3] %vm3166, %v3170
    %3173 = vrot.lane.b32.xlu0 %v3125, 32
    %v3174 = vpop.permute.xlu0 %3173
    %s3176 = scalar_lea.vmem [#allocation9], 2
    %3177 = vst.msk [vmem:[%s3176] sm:$0x3] %vm3166, %v3174
    %3179 = vrot.lane.b32.xlu0 %v3119, 96
    %v3180 = vpop.permute.xlu0 %3179
    %s3182 = scalar_lea.vmem [#allocation10], 2
    %3183 = vst.msk [vmem:[%s3182] sm:$0x3] %vm3166, %v3180
    %v3184 = vld [vmem:[#allocation2] sm:$0xff]
    %v3185 = vld [vmem:[#allocation2 + $0x8] sm:$0xff]
    %v3186 = vld [vmem:[%s7] sm:$0xff]
    %v3187 = vld [vmem:[%s7 + $0x8] sm:$0xff]
    %v3188 = vld [vmem:[%s7 + $0x10] sm:$0xff]
    %v3189 = vld [vmem:[%s7 + $0x18] sm:$0xff]
    %v3190 = vld [vmem:[#allocation3] sm:$0x1]
    %v3192 = vlaneseq
    %v3193 = vshrl.u32 %v3192, 7
    %v3194 = vsub.s32 0, %v3193
    %v3195 = vrot.slane %v3190, %v3194
    %v3198 = vsel %vm82, %v3184, 0
    %v3201 = vsel %vm82, %v3185, 0
    %3203 = vmatprep.subr.mxu0 0.0
    %3204 = vmatpush1.msra.mxu0 %v3186
    %3205 = vmatprep.subr.mxu0 0.0
    %3206 = vmatpush1.msra.mxu0 %v3187
    %3207 = vmatprep.subr.mxu0 0.0
    %3208 = vmatpush1.msra.mxu0 %v3188
    %3209 = vmatprep.subr.mxu0 0.0
    %3210 = vmatpush1.msra.mxu0 %v3189
    %3211 = vmatprep.subr.mxu0 0.0
    %3212 = vmatpush1.msra.mxu0 0.0
    %3213 = vmatprep.subr.mxu0 0.0
    %3214 = vmatpush1.msra.mxu0 0.0
    %3215 = vmatprep.subr.mxu0 0.0
    %3216 = vmatpush1.msra.mxu0 0.0
    %3217 = vmatprep.subr.mxu0 0.0
    %3218 = vmatpush1.msra.mxu0 0.0
    %3219 = vmatprep.subr.mxu0 0.0
    %3220 = vmatpush1.msra.mxu0 0.0
    %3221 = vmatprep.subr.mxu0 0.0
    %3222 = vmatpush1.msra.mxu0 0.0
    %3223 = vmatprep.subr.mxu0 0.0
    %3224 = vmatpush1.msra.mxu0 0.0
    %3225 = vmatprep.subr.mxu0 0.0
    %3226 = vmatpush1.msra.mxu0 0.0
    %3227 = vmatprep.subr.mxu0 0.0
    %3228 = vmatpush1.msra.mxu0 0.0
    %3229 = vmatprep.subr.mxu0 0.0
    %3230 = vmatpush1.msra.mxu0 0.0
    %3231 = vmatprep.subr.mxu0 0.0
    %3232 = vmatpush1.msra.mxu0 0.0
    %3233 = vmatprep.subr.mxu0 0.0
    %3234 = vmatpush1.msra.mxu0 0.0
    %3235 = vmatprep.subr.mxu0 0.0
    %3236 = vmatpush1.msra.mxu0 0.0
    %3237 = vmatprep.subr.mxu0 0.0
    %3238 = vmatpush1.msra.mxu0 0.0
    %3239 = vmatprep.subr.mxu0 0.0
    %3240 = vmatpush1.msra.mxu0 0.0
    %3241 = vmatprep.subr.mxu0 0.0
    %3242 = vmatpush1.msra.mxu0 0.0
    %3243 = vmatprep.subr.mxu0 0.0
    %3244 = vmatpush1.msra.mxu0 0.0
    %3245 = vmatprep.subr.mxu0 0.0
    %3246 = vmatpush1.msra.mxu0 0.0
    %3247 = vmatprep.subr.mxu0 0.0
    %3248 = vmatpush1.msra.mxu0 0.0
    %3249 = vmatprep.subr.mxu0 0.0
    %3250 = vmatpush1.msra.mxu0 0.0
    %3251 = vmatprep.subr.mxu0 0.0
    %3252 = vmatpush1.msra.mxu0 0.0
    %3253 = vmatprep.subr.mxu0 0.0
    %3254 = vmatpush1.msra.mxu0 0.0
    %3255 = vmatprep.subr.mxu0 0.0
    %3256 = vmatpush1.msra.mxu0 0.0
    %3257 = vmatprep.subr.mxu0 0.0
    %3258 = vmatpush1.msra.mxu0 0.0
    %3259 = vmatprep.subr.mxu0 0.0
    %3260 = vmatpush1.msra.mxu0 0.0
    %3261 = vmatprep.subr.mxu0 0.0
    %3262 = vmatpush1.msra.mxu0 0.0
    %3263 = vmatprep.subr.mxu0 0.0
    %3264 = vmatpush1.msra.mxu0 0.0
    %3265 = vmatprep.subr.mxu0 0.0
    %3266 = vmatpush1.msra.mxu0 0.0
    %3267 = vmatprep.mubr.f32.mxu0 0.0
    %3268 = vmatmul.mubr.f32.gmra.mrb[0].mxu0 %v3198
    %v3269 = vpop.f32.mrb[0].mxu0
    %v3270 = vadd.f32 %v3195, %v3269
    %v3271 = vpop.f32.mrb[0].mxu0
    %3272 = vmatprep.mubr.f32.mxu0 0.0
    %3273 = vmatmul.mubr.f32.gmra.mrb[0].mxu0 %v3201
    %v3274 = vpop.f32.mrb[0].mxu0
    %v3275 = vadd.f32 %v3195, %v3274
    %v3276 = vpop.f32.mrb[0].mxu0
    %3277 = vdwg.mxu0
    %vm3278 = vcmask 7168
    %3279 = vst.msk [vmem:[%s9] sm:$0xff] %vm3278, %v3270
    %s3280 = scalar_lea.vmem %s9, 8
    %3281 = vst.msk [vmem:[%s3280] sm:$0xff] %vm3278, %v3275
    // Predicated region
    $region46: #{tpu_custom_call.1} parent=1 // pred_check
      _
    $region47: #{tpu_custom_call.1} parent=1 // pred_check_branch
      %3283 = sbr.rel (0) target = $region49
    $region48: #{tpu_custom_call.1} parent=1 // pred_region
      _
    $region49: #{tpu_custom_call.1} parent=1 // pred_fallthru
      _
    // Predicated region
    $region50: #{tpu_custom_call.1} parent=1 // pred_check
      _
    $region51: #{tpu_custom_call.1} parent=1 // pred_check_branch
      %3285 = sbr.rel (0) target = $region53
    $region52: #{tpu_custom_call.1} parent=1 // pred_region
      %s3287 = ssub.s32 64, 64
      %3288 = vsyncadd [#allocation6], %s3287
      %s3289 = sshll.u32 [#allocation9], 4
      %s3290 = int_to_ptr.vmem [resolvable:$true] %s3289
      %3295 = dma.vmem_to_hbm [thread:$0]  %s3290, 64, %s10, [#allocation6], 32, 32, 2
    $region53: #{tpu_custom_call.1} parent=1 // pred_fallthru
      _
    // Predicated region
    $region54: #{tpu_custom_call.1} parent=1 // pred_check
      _
    $region55: #{tpu_custom_call.1} parent=1 // pred_check_branch
      %3297 = sbr.rel (0) target = $region57
    $region56: #{tpu_custom_call.1} parent=1 // pred_region
      %s3299 = ssub.s32 64, 64
      %3300 = vsyncadd [#allocation11], %s3299
      %s3301 = sshll.u32 [#allocation10], 4
      %s3302 = int_to_ptr.vmem [resolvable:$true] %s3301
      %3307 = dma.vmem_to_hbm [thread:$0]  %s3302, 64, %s11, [#allocation11], 32, 32, 2
    $region57: #{tpu_custom_call.1} parent=1 // pred_fallthru
      _
    // Predicated region
    $region58: #{tpu_custom_call.1} parent=1 // pred_check
      _
    $region59: #{tpu_custom_call.1} parent=1 // pred_check_branch
      %3309 = sbr.rel (0) target = $region61
    $region60: #{tpu_custom_call.1} parent=1 // pred_region
      _
    $region61: #{tpu_custom_call.1} parent=1 // pred_fallthru
      _
    // Predicated region
    $region62: #{tpu_custom_call.1} parent=1 // pred_check
      _
    $region63: #{tpu_custom_call.1} parent=1 // pred_check_branch
      %3311 = sbr.rel (0) target = $region65
    $region64: #{tpu_custom_call.1} parent=1 // pred_region
      %3312 = dma.done [#allocation6], 64
    $region65: #{tpu_custom_call.1} parent=1 // pred_fallthru
      _
    // Predicated region
    $region66: #{tpu_custom_call.1} parent=1 // pred_check
      _
    $region67: #{tpu_custom_call.1} parent=1 // pred_check_branch
      %3314 = sbr.rel (0) target = $region69
    $region68: #{tpu_custom_call.1} parent=1 // pred_region
      %3315 = dma.done [#allocation11], 64
    $region69: #{tpu_custom_call.1} parent=1 // pred_fallthru
      _
    %3316 = vsyncpa [#allocation5], 1
    %3317 = vsyncpa [#allocation8], 1
    %3318 = vsyncpa [#allocation6], 1
    %3319 = vsyncpa [#allocation11], 1

</llo_original>
